<compile_context>
chip_gen: v6e
topology: v6e:2x2x1
jax: 0.10.0
libtpu: 0.0.40
codegen_flags: <defaults>
</compile_context>

<pallas_src>
import functools

import jax
import jax.numpy as jnp
from jax import lax
from jax.experimental import pallas as pl
from jax.experimental.pallas import tpu as pltpu

# Safe on v5e/v6e (128 MiB physical) and v7x (64 MiB physical); above the
# 16/32 MiB scoped defaults so large sequence tiles can be double-buffered.
VMEM_LIMIT_BYTES = 48 * 1024 * 1024


def _sigmoid(x):
    # exp lands on the EUP, approx reciprocal on the EUP as well -> keeps the
    # divide off the (busy) VALU slot.
    return pl.reciprocal(1.0 + jnp.exp(-x), approx=True)


# ----------------------------------------------------------------------------
# Kernel 1: FFConvM = ScaleNorm -> Linear -> SiLU -> (y + depthwise conv1d(y))
# Tiled over the sequence with a VMEM carry buffer that provides the conv halo.
# ----------------------------------------------------------------------------
def ffconvm_kernel(x_ref, w_ref, b_ref, cw_ref, o_ref, ybuf,
                   *, eps, scale, ksize, tile_n, n_tiles, n_valid):
    # grid = (B, n_tiles + 1); the sequence axis is sequential ("arbitrary").
    # Step i computes y_i = SiLU(Linear(ScaleNorm(x_i))) for tile i and emits
    # the depthwise-conv + residual output for tile i-1 (whose halo is now
    # fully known).  Step n_tiles is a flush step (y := 0 right halo).
    #
    # ybuf row layout (tile_n + 2*pad rows):
    #   [0 : pad)                        tail of y_{i-2}   (left conv halo)
    #   [pad : pad+tile_n)               y_{i-1}
    #   [pad+tile_n : pad+tile_n+pad)    head of y_i       (right conv halo)
    i = pl.program_id(1)
    pad = (ksize - 1) // 2

    # ---- ScaleNorm -> Linear -> SiLU for tile i (bf16 MXU, f32 accumulate) --
    x = x_ref[0]                                           # (tile_n, Din) f32
    norm = jnp.sqrt(jnp.sum(x * x, axis=-1, keepdims=True)) * scale
    xn = x / jnp.maximum(norm, eps)
    y = jnp.dot(xn.astype(jnp.bfloat16), w_ref[...],
                preferred_element_type=jnp.float32) + b_ref[...]
    y = y * _sigmoid(y)                                    # SiLU
    # Zero rows past the true sequence end (ragged last tile) and the whole
    # flush step (i == n_tiles): these rows must act as zero conv padding.
    row = i * tile_n + lax.broadcasted_iota(jnp.int32, (tile_n, 1), 0)
    y = jnp.where((row < n_valid) & (i < n_tiles), y, 0.0)

    @pl.when(i == 0)
    def _():
        ybuf[...] = jnp.zeros_like(ybuf)

    # Right conv halo for output tile i-1.
    ybuf[pad + tile_n:pad + tile_n + pad, :] = y[0:pad, :]

    # ---- depthwise conv (same padding, no bias) + residual for tile i-1 ----
    @pl.when(i > 0)
    def _():
        acc = jnp.zeros((tile_n, o_ref.shape[-1]), jnp.float32)
        for k in range(ksize):                 # static unrolled taps (vld slot)
            acc = acc + ybuf[k:k + tile_n, :] * cw_ref[k:k + 1, :]
        o_ref[0] = ybuf[pad:pad + tile_n, :] + acc

    # Carry for the next step.
    ybuf[0:pad, :] = ybuf[tile_n:tile_n + pad, :]          # tail of y_{i-1}
    ybuf[pad:pad + tile_n, :] = y


def ffconvm(x, w_bf16, b, cw, *, eps=1e-5, seq_tile=512):
    """FFConvM. `w_bf16` is the (Din, Dout) bf16 weight (ScaleNorm g folded)."""
    B, N, Din = x.shape
    Dout = w_bf16.shape[1]
    K = cw.shape[0]
    pad = (K - 1) // 2
    if N <= seq_tile:
        tile_n = N                             # full-sequence block, always legal
    else:
        tile_n = (seq_tile // 8) * 8           # sublane-aligned sequence tile
    assert tile_n >= pad, "sequence tile must be >= depthwise-conv half width"
    n_tiles = pl.cdiv(N, tile_n)

    kernel = functools.partial(
        ffconvm_kernel, eps=eps, scale=Din ** -0.5, ksize=K,
        tile_n=tile_n, n_tiles=n_tiles, n_valid=N)

    cost = pl.CostEstimate(
        flops=2 * B * N * Din * Dout + 2 * B * N * Dout * K,
        transcendentals=2 * B * N * Dout,
        bytes_accessed=4 * B * N * (Din + Dout) + 2 * Din * Dout)

    return pl.pallas_call(
        kernel,
        out_shape=jax.ShapeDtypeStruct((B, N, Dout), jnp.float32),
        grid=(B, n_tiles + 1),
        in_specs=[
            pl.BlockSpec((1, tile_n, Din),
                         lambda bi, i: (bi, jnp.minimum(i, n_tiles - 1), 0)),
            pl.BlockSpec((Din, Dout), lambda bi, i: (0, 0)),
            pl.BlockSpec((1, Dout), lambda bi, i: (0, 0)),
            pl.BlockSpec((K, Dout), lambda bi, i: (0, 0)),
        ],
        out_specs=pl.BlockSpec((1, tile_n, Dout),
                               lambda bi, i: (bi, jnp.maximum(i - 1, 0), 0)),
        scratch_shapes=[pltpu.VMEM((tile_n + 2 * pad, Dout), jnp.float32)],
        compiler_params=pltpu.CompilerParams(
            dimension_semantics=("parallel", "arbitrary"),
            vmem_limit_bytes=VMEM_LIMIT_BYTES),
        cost_estimate=cost,
    )(x, w_bf16, b.reshape(1, Dout), cw)


# ----------------------------------------------------------------------------
# Kernel 2: fused global linear-attention statistics
#   kvu = lin_k^T @ [v | u] / n    (per batch, accumulated over sequence tiles)
# ----------------------------------------------------------------------------
def linkv_kernel(lk_ref, vu_ref, kvu_ref, *, inv_n):
    k = pl.program_id(1)

    @pl.when(k == 0)
    def _():
        kvu_ref[...] = jnp.zeros_like(kvu_ref)

    lk = lk_ref[0]                                          # (T, d) bf16
    vu = vu_ref[0].astype(jnp.bfloat16)                     # (T, 2E)
    kvu_ref[0] += lax.dot_general(
        lk, vu, (((0,), (0,)), ((), ())), preferred_element_type=jnp.float32)

    @pl.when(k == pl.num_programs(1) - 1)
    def _():
        # Division by the TRUE sequence length n (zero-padded rows contribute
        # zero to the sum, matching the reference's masked behaviour).
        kvu_ref[0] *= inv_n


def linkv(lk_bf16, vu, n_orig, group_size, *, seq_tile=1024):
    B, Npad, d = lk_bf16.shape
    E2 = vu.shape[-1]
    G = Npad // group_size
    # Largest whole-group sequence tile that divides Npad and fits the target.
    m = 1
    for c in range(1, G + 1):
        if G % c == 0 and c * group_size <= seq_tile:
            m = c
    tile = m * group_size
    if tile % 8 != 0 and tile != Npad:
        tile = Npad
    nk = Npad // tile

    cost = pl.CostEstimate(
        flops=2 * B * Npad * d * E2,
        transcendentals=0,
        bytes_accessed=2 * B * Npad * d + 4 * B * Npad * E2 + 4 * B * d * E2)

    return pl.pallas_call(
        functools.partial(linkv_kernel, inv_n=1.0 / n_orig),
        out_shape=jax.ShapeDtypeStruct((B, d, E2), jnp.float32),
        grid=(B, nk),
        in_specs=[
            pl.BlockSpec((1, tile, d), lambda bi, k: (bi, k, 0)),
            pl.BlockSpec((1, tile, E2), lambda bi, k: (bi, k, 0)),
        ],
        out_specs=pl.BlockSpec((1, d, E2), lambda bi, k: (bi, 0, 0)),
        compiler_params=pltpu.CompilerParams(
            dimension_semantics=("parallel", "arbitrary"),
            vmem_limit_bytes=VMEM_LIMIT_BYTES),
        cost_estimate=cost,
    )(lk_bf16, vu)


# ----------------------------------------------------------------------------
# Kernel 3: group-batched quadratic attention + linear attention + output gate
#   sim  = quad_q @ quad_k^T / g ; attn = relu(sim)^2
#   att  = attn @ [v|u] + lin_q @ kvu          (single 2E-wide matmuls)
#   out  = att_u * v * sigmoid(att_v * u)
# ----------------------------------------------------------------------------
def attn_gate_kernel(qq_ref, qk_ref, lq_ref, vu_ref, kvu_ref, o_ref, *, inv_g):
    qq = qq_ref[0]                                          # (Gb, g, d) bf16
    qk = qk_ref[0]
    lq = lq_ref[0]
    vu = vu_ref[0]                                          # (Gb, g, 2E) f32
    kvu = kvu_ref[0].astype(jnp.bfloat16)                   # (d, 2E)

    # Quadratic (intra-group) attention, batched over the groups in this block.
    sim = lax.dot_general(qq, qk, (((2,), (2,)), ((0,), (0,))),
                          preferred_element_type=jnp.float32) * inv_g
    attn = jnp.square(jnp.maximum(sim, 0.0))                # relu(sim)^2
    quad = lax.dot_general(attn.astype(jnp.bfloat16), vu.astype(jnp.bfloat16),
                           (((2,), (1,)), ((0,), (0,))),
                           preferred_element_type=jnp.float32)   # (Gb, g, 2E)
    # Global linear attention.
    lin = lax.dot_general(lq, kvu, (((2,), (0,)), ((), ())),
                          preferred_element_type=jnp.float32)    # (Gb, g, 2E)
    att = quad + lin

    e = vu.shape[-1] // 2
    att_v, att_u = att[..., :e], att[..., e:]
    v, u = vu[..., :e], vu[..., e:]
    o_ref[0] = att_u * v * _sigmoid(att_v * u)               # f32 gating


def attn_gate(qq, qk, lq, vu, kvu, group_size, *, groups_per_step=8):
    B, G, g, d = qq.shape
    E2 = vu.shape[-1]
    gb = 1
    for c in range(1, min(G, groups_per_step) + 1):
        if G % c == 0:
            gb = c

    cost = pl.CostEstimate(
        flops=2 * B * G * g * g * (d + E2) + 2 * B * G * g * d * E2,
        transcendentals=B * G * g * (E2 // 2),
        bytes_accessed=(2 * B * G * g * 3 * d + 4 * B * G * g * E2
                        + 4 * B * d * E2 + 4 * B * G * g * (E2 // 2)))

    return pl.pallas_call(
        functools.partial(attn_gate_kernel, inv_g=1.0 / group_size),
        out_shape=jax.ShapeDtypeStruct((B, G, g, E2 // 2), jnp.float32),
        grid=(B, G // gb),
        in_specs=[
            pl.BlockSpec((1, gb, g, d), lambda bi, gi: (bi, gi, 0, 0)),
            pl.BlockSpec((1, gb, g, d), lambda bi, gi: (bi, gi, 0, 0)),
            pl.BlockSpec((1, gb, g, d), lambda bi, gi: (bi, gi, 0, 0)),
            pl.BlockSpec((1, gb, g, E2), lambda bi, gi: (bi, gi, 0, 0)),
            pl.BlockSpec((1, d, E2), lambda bi, gi: (bi, 0, 0)),
        ],
        out_specs=pl.BlockSpec((1, gb, g, E2 // 2),
                               lambda bi, gi: (bi, gi, 0, 0)),
        compiler_params=pltpu.CompilerParams(
            dimension_semantics=("parallel", "parallel"),
            vmem_limit_bytes=VMEM_LIMIT_BYTES),
        cost_estimate=cost,
    )(qq, qk, lq, vu, kvu)


# ----------------------------------------------------------------------------
# JAX glue: rotary tables, OffsetScale, token shift, padding, per-layer wiring
# TODO(synk): OffsetScale + rotary + group padding are kept as (small) XLA glue
#             between pallas_calls; fusing them in-kernel needs an in-kernel
#             interleaved lane rotation and is left for a later pass.
# ----------------------------------------------------------------------------
def rotary_tables(n, rot_dim):
    inv_freq = 1.0 / (10000.0 ** (jnp.arange(0, rot_dim, 2, jnp.float32) / rot_dim))
    t = jnp.arange(n, dtype=jnp.float32)
    ang = t[:, None] * inv_freq[None, :]              # (n, rot_dim // 2)
    ang = jnp.repeat(ang, 2, axis=-1)                 # interleaved -> (n, rot_dim)
    return jnp.cos(ang), jnp.sin(ang)


def apply_rotary(x, cos, sin, rot_dim):
    # Interleaved-pair rotate_half, matching rotary_embedding_torch defaults.
    xr, xp = x[..., :rot_dim], x[..., rot_dim:]
    x1 = xr[..., 0::2]
    x2 = xr[..., 1::2]
    half = jnp.stack([-x2, x1], axis=-1).reshape(xr.shape)
    xr = xr * cos + half * sin
    return jnp.concatenate([xr, xp], axis=-1)


def mossformer_block_forward(x, p, cfg, rot_cos, rot_sin):
    B, N, D = x.shape
    g = cfg["group_size"]
    H = int(D * cfg["expansion_factor"])              # width of concat(v, u)
    seq_tile = cfg.get("seq_tile", 512)

    # Token shift (shift_tokens=True): first half of features shifted by +1.
    half = D // 2
    x_shift = jnp.concatenate(
        [jnp.zeros((B, 1, half), x.dtype), x[:, :-1, :half]], axis=1)
    normed_x = jnp.concatenate([x_shift, x[:, :, half:]], axis=-1)

    # Fused to_hidden + to_qk (single FFConvM pallas_call).
    hq = ffconvm(normed_x, p["in_w"], p["in_b"], p["in_cw"], seq_tile=seq_tile)
    vu = hq[..., :H]                                  # concat(v, u)  (B, N, 2E)
    qk = hq[..., H:]                                  # (B, N, QK)

    # OffsetScale (4 heads) + rotary embedding (cheap elementwise glue).
    heads = qk[:, :, None, :] * p["gamma"][None, None] + p["beta"][None, None]
    quad_q, lin_q, quad_k, lin_k = (heads[:, :, h, :] for h in range(4))
    rot_dim = rot_cos.shape[-1]
    quad_q, lin_q, quad_k, lin_k = (
        apply_rotary(t, rot_cos, rot_sin, rot_dim)
        for t in (quad_q, lin_q, quad_k, lin_k))

    # Pad sequence to a multiple of the group size (padded rows are exact
    # zeros, which reproduces the reference's boolean attention mask).
    pad = (-N) % g
    Npad = N + pad
    G = Npad // g
    padf = lambda t: jnp.pad(t, ((0, 0), (0, pad), (0, 0)))
    qq_p, qk_p, lq_p, lk_p = (padf(t).astype(jnp.bfloat16)
                              for t in (quad_q, quad_k, lin_q, lin_k))
    vu_p = padf(vu)                                   # f32 (needed by the gate)

    # Global linear-attention statistics, v/u fused  -> (B, d, 2E).
    kvu = linkv(lk_p, vu_p, N, g)

    # Grouped quadratic + linear attention fused with the output gating.
    to_groups = lambda t: t.reshape(B, G, g, t.shape[-1])
    gated = attn_gate(to_groups(qq_p), to_groups(qk_p), to_groups(lq_p),
                      to_groups(vu_p), kvu, g)
    gated = gated.reshape(B, Npad, -1)[:, :N, :]      # (B, N, 2*dim)

    # to_out + residual.
    out = ffconvm(gated, p["out_w"], p["out_b"], p["out_cw"], seq_tile=seq_tile)
    return x + out


def mossformer_module_forward(x, layer_params, cfg):
    N = x.shape[1]
    rot_dim = min(32, cfg["query_key_dim"])
    rot_cos, rot_sin = rotary_tables(N, rot_dim)
    for p in layer_params:
        x = mossformer_block_forward(x, p, cfg, rot_cos, rot_sin)
    return x


# ----------------------------------------------------------------------------
# Deterministic synthetic parameters (no checkpoint load).
# ----------------------------------------------------------------------------
def init_params(key, cfg, depth):
    D = cfg["dim"]
    H = int(D * cfg["expansion_factor"])
    QK = cfg["query_key_dim"]
    K = cfg["conv_kernel"]
    layers = []
    for _ in range(depth):
        key, *ks = jax.random.split(key, 11)
        hidden_w = 0.05 * jax.random.normal(ks[0], (D, H), jnp.float32)
        hidden_b = 0.02 * jax.random.normal(ks[1], (H,), jnp.float32)
        hidden_cw = 0.1 * jax.random.normal(ks[2], (K, H), jnp.float32)
        qk_w = 0.05 * jax.random.normal(ks[3], (D, QK), jnp.float32)
        qk_b = 0.02 * jax.random.normal(ks[4], (QK,), jnp.float32)
        qk_cw = 0.1 * jax.random.normal(ks[5], (K, QK), jnp.float32)
        p = {
            # to_hidden and to_qk fused along the output-channel axis.
            # ScaleNorm gain g = 1.0 is folded into the Linear weights.
            "in_w": jnp.concatenate([hidden_w, qk_w], axis=1).astype(jnp.bfloat16),
            "in_b": jnp.concatenate([hidden_b, qk_b], axis=0),
            "in_cw": jnp.concatenate([hidden_cw, qk_cw], axis=1),
            "gamma": 0.02 * jax.random.normal(ks[6], (4, QK), jnp.float32),
            "beta": jnp.zeros((4, QK), jnp.float32),
            "out_w": (0.05 * jax.random.normal(ks[7], (2 * D, D), jnp.float32)
                      ).astype(jnp.bfloat16),
            "out_b": 0.02 * jax.random.normal(ks[8], (D,), jnp.float32),
            "out_cw": 0.1 * jax.random.normal(ks[9], (K, D), jnp.float32),
        }
        layers.append(p)
    return layers


if __name__ == "__main__":
    # Small config consistent with the module: causal=False, scalenorm,
    # shift_tokens=True, expansion_factor=4.0, rotary dim = min(32, QK).
    # seq_tile is intentionally small here so the demo exercises the tiled
    # (multi-tile + ragged-edge + flush-step) FFConvM path; use 512-1024 at
    # production sequence lengths.
    cfg = dict(dim=32, group_size=64, query_key_dim=64,
               expansion_factor=4.0, conv_kernel=17, seq_tile=64)
    depth = 2
    B, N = 2, 96          # N not a multiple of group_size or seq_tile

    key = jax.random.PRNGKey(0)
    kx, kp = jax.random.split(key)
    x = jax.random.normal(kx, (B, N, cfg["dim"]), jnp.float32)
    params = init_params(kp, cfg, depth)

    fwd = jax.jit(functools.partial(mossformer_module_forward, cfg=cfg))
    y = fwd(x, params)
    jax.block_until_ready(y)
    assert y.shape == (B, N, cfg["dim"]) and y.dtype == jnp.float32
    # TODO(synk): dropout layers are identity (eval mode); MossFormerConvModule
    # source was not provided and is implemented as x + depthwise_conv1d(k=17).
    print("KERNEL_OK")
</pallas_src>

<mosaic_0001>
module attributes {stable_mosaic.version = 11 : i64} {
  func.func @ffconvm_kernel(%arg0: i32, %arg1: i32, %arg2: memref<1x64x32xf32, #tpu.memory_space<vmem>>, %arg3: memref<32x192xbf16, #tpu.memory_space<vmem>>, %arg4: memref<1x192xf32, #tpu.memory_space<vmem>>, %arg5: memref<17x192xf32, #tpu.memory_space<vmem>>, %arg6: memref<1x64x192xf32, #tpu.memory_space<vmem>>, %arg7: memref<80x192xf32, #tpu.memory_space<vmem>>) attributes {dimension_semantics = [#tpu.dimension_semantics<parallel>, #tpu.dimension_semantics<arbitrary>], iteration_bounds = array<i64: 2, 3>, scalar_prefetch = 0 : i64, scratch_operands = 1 : i64, tpu.core_type = #tpu.core_type<tc>, window_params = [{transform_indices = @transform_0, window_bounds = array<i64: 1, 64, 32>}, {pipeline_mode = #tpu.pipeline_mode<synchronous>, transform_indices = @transform_1, window_bounds = array<i64: 32, 192>}, {pipeline_mode = #tpu.pipeline_mode<synchronous>, transform_indices = @transform_2, window_bounds = array<i64: 1, 192>}, {pipeline_mode = #tpu.pipeline_mode<synchronous>, transform_indices = @transform_3, window_bounds = array<i64: 17, 192>}, {transform_indices = @transform_4, window_bounds = array<i64: 1, 64, 192>}]} {
    %c0 = arith.constant 0 : index
    %c0_0 = arith.constant 0 : index
    %c0_1 = arith.constant 0 : index
    %0 = vector.load %arg2[%c0, %c0_0, %c0_1] : memref<1x64x32xf32, #tpu.memory_space<vmem>>, vector<1x64x32xf32>
    %1 = vector.shape_cast %0 : vector<1x64x32xf32> to vector<64x32xf32>
    %2 = arith.mulf %1, %1 : vector<64x32xf32>
    %cst = arith.constant dense<0.000000e+00> : vector<64xf32>
    %3 = vector.multi_reduction <add>, %2, %cst [1] : vector<64x32xf32> to vector<64xf32>
    %4 = vector.shape_cast %3 : vector<64xf32> to vector<64x1xf32>
    %5 = math.sqrt %4 : vector<64x1xf32>
    %cst_2 = arith.constant 0.176776692 : f32
    %6 = vector.broadcast %cst_2 : f32 to vector<64x1xf32>
    %7 = arith.mulf %5, %6 : vector<64x1xf32>
    %cst_3 = arith.constant 9.99999974E-6 : f32
    %8 = vector.broadcast %cst_3 : f32 to vector<64x1xf32>
    %9 = arith.maximumf %7, %8 : vector<64x1xf32>
    %10 = vector.broadcast %9 : vector<64x1xf32> to vector<64x32xf32>
    %11 = arith.divf %1, %10 : vector<64x32xf32>
    %12 = arith.truncf %11 : vector<64x32xf32> to vector<64x32xbf16>
    %c0_4 = arith.constant 0 : index
    %c0_5 = arith.constant 0 : index
    %13 = vector.load %arg3[%c0_4, %c0_5] : memref<32x192xbf16, #tpu.memory_space<vmem>>, vector<32x192xbf16>
    %cst_6 = arith.constant dense<0.000000e+00> : vector<64x192xf32>
    %14 = tpu.matmul %12, %13, %cst_6 {dimension_numbers = #tpu.dot_dimension_numbers<[1], [0], [0], [1], [0, 0, 1, 1], [], []>} : vector<64x32xbf16>, vector<32x192xbf16>, vector<64x192xf32> -> vector<64x192xf32>
    %c0_7 = arith.constant 0 : index
    %c0_8 = arith.constant 0 : index
    %15 = vector.load %arg4[%c0_7, %c0_8] : memref<1x192xf32, #tpu.memory_space<vmem>>, vector<1x192xf32>
    %16 = vector.broadcast %15 : vector<1x192xf32> to vector<64x192xf32>
    %17 = arith.addf %14, %16 : vector<64x192xf32>
    %cst_9 = arith.constant 0.000000e+00 : f32
    %18 = vector.broadcast %cst_9 : f32 to vector<64x192xf32>
    %19 = arith.subf %18, %17 : vector<64x192xf32>
    %20 = math.exp %19 : vector<64x192xf32>
    %cst_10 = arith.constant 1.000000e+00 : f32
    %21 = vector.broadcast %cst_10 : f32 to vector<64x192xf32>
    %22 = arith.addf %21, %20 : vector<64x192xf32>
    %23 = tpu.reciprocal %22 {approx = true} : vector<64x192xf32> -> vector<64x192xf32>
    %24 = arith.mulf %17, %23 : vector<64x192xf32>
    %c64_i32 = arith.constant 64 : i32
    %25 = arith.muli %arg1, %c64_i32 : i32
    %26 = tpu.iota {dimensions = array<i32: 0>} : vector<64x1xi32>
    %27 = vector.broadcast %25 : i32 to vector<64x1xi32>
    %28 = arith.addi %27, %26 : vector<64x1xi32>
    %c96_i32 = arith.constant 96 : i32
    %29 = vector.broadcast %c96_i32 : i32 to vector<64x1xi32>
    %30 = arith.cmpi slt, %28, %29 : vector<64x1xi32>
    %c2_i32 = arith.constant 2 : i32
    %31 = arith.cmpi slt, %arg1, %c2_i32 : i32
    %32 = vector.broadcast %31 : i1 to vector<64x1xi1>
    %33 = arith.andi %30, %32 : vector<64x1xi1>
    %cst_11 = arith.constant 0.000000e+00 : f32
    %34 = vector.shape_cast %33 : vector<64x1xi1> to vector<64x1xi1>
    %35 = vector.broadcast %34 : vector<64x1xi1> to vector<64x192xi1>
    %36 = vector.broadcast %cst_11 : f32 to vector<64x192xf32>
    %37 = arith.select %35, %24, %36 : vector<64x192xi1>, vector<64x192xf32>
    %c0_i32 = arith.constant 0 : i32
    %38 = arith.cmpi eq, %arg1, %c0_i32 : i32
    %39 = arith.extui %38 : i1 to i32
    %c0_i32_12 = arith.constant 0 : i32
    %40 = arith.cmpi ne, %39, %c0_i32_12 : i32
    scf.if %40 {
      %cst_20 = arith.constant 0.000000e+00 : f32
      %49 = vector.broadcast %cst_20 : f32 to vector<80x192xf32>
      %c0_21 = arith.constant 0 : index
      %c0_22 = arith.constant 0 : index
      %50 = vector.load %arg7[%c0_21, %c0_22] : memref<80x192xf32, #tpu.memory_space<vmem>>, vector<80x192xf32>
      tpu.vector_store %arg7[%c0_21, %c0_22], %49 {strides = array<i32>} : memref<80x192xf32, #tpu.memory_space<vmem>>, vector<80x192xf32>,
    } else {
    }
    %41 = vector.extract_strided_slice %37 {offsets = [0, 0], sizes = [8, 192], strides = [1, 1]} : vector<64x192xf32> to vector<8x192xf32>
    %c72 = arith.constant 72 : index
    %c0_13 = arith.constant 0 : index
    %42 = vector.load %arg7[%c72, %c0_13] : memref<80x192xf32, #tpu.memory_space<vmem>>, vector<8x192xf32>
    tpu.vector_store %arg7[%c72, %c0_13], %41 {strides = array<i32>} : memref<80x192xf32, #tpu.memory_space<vmem>>, vector<8x192xf32>,
    %c0_i32_14 = arith.constant 0 : i32
    %43 = arith.cmpi sgt, %arg1, %c0_i32_14 : i32
    %44 = arith.extui %43 : i1 to i32
    %c0_i32_15 = arith.constant 0 : i32
    %45 = arith.cmpi ne, %44, %c0_i32_15 : i32
    scf.if %45 {
      %cst_20 = arith.constant 0.000000e+00 : f32
      %49 = vector.broadcast %cst_20 : f32 to vector<64x192xf32>
      %c0_21 = arith.constant 0 : index
      %c0_22 = arith.constant 0 : index
      %50 = vector.load %arg7[%c0_21, %c0_22] : memref<80x192xf32, #tpu.memory_space<vmem>>, vector<64x192xf32>
      %c0_23 = arith.constant 0 : index
      %c0_24 = arith.constant 0 : index
      %51 = vector.load %arg5[%c0_23, %c0_24] : memref<17x192xf32, #tpu.memory_space<vmem>>, vector<1x192xf32>
      %52 = vector.broadcast %51 : vector<1x192xf32> to vector<64x192xf32>
      %53 = arith.mulf %50, %52 : vector<64x192xf32>
      %54 = arith.addf %49, %53 : vector<64x192xf32>
      %c1 = arith.constant 1 : index
      %c0_25 = arith.constant 0 : index
      %55 = vector.load %arg7[%c1, %c0_25] : memref<80x192xf32, #tpu.memory_space<vmem>>, vector<64x192xf32>
      %c1_26 = arith.constant 1 : index
      %c0_27 = arith.constant 0 : index
      %56 = vector.load %arg5[%c1_26, %c0_27] : memref<17x192xf32, #tpu.memory_space<vmem>>, vector<1x192xf32>
      %57 = vector.broadcast %56 : vector<1x192xf32> to vector<64x192xf32>
      %58 = arith.mulf %55, %57 : vector<64x192xf32>
      %59 = arith.addf %54, %58 : vector<64x192xf32>
      %c2 = arith.constant 2 : index
      %c0_28 = arith.constant 0 : index
      %60 = vector.load %arg7[%c2, %c0_28] : memref<80x192xf32, #tpu.memory_space<vmem>>, vector<64x192xf32>
      %c2_29 = arith.constant 2 : index
      %c0_30 = arith.constant 0 : index
      %61 = vector.load %arg5[%c2_29, %c0_30] : memref<17x192xf32, #tpu.memory_space<vmem>>, vector<1x192xf32>
      %62 = vector.broadcast %61 : vector<1x192xf32> to vector<64x192xf32>
      %63 = arith.mulf %60, %62 : vector<64x192xf32>
      %64 = arith.addf %59, %63 : vector<64x192xf32>
      %c3 = arith.constant 3 : index
      %c0_31 = arith.constant 0 : index
      %65 = vector.load %arg7[%c3, %c0_31] : memref<80x192xf32, #tpu.memory_space<vmem>>, vector<64x192xf32>
      %c3_32 = arith.constant 3 : index
      %c0_33 = arith.constant 0 : index
      %66 = vector.load %arg5[%c3_32, %c0_33] : memref<17x192xf32, #tpu.memory_space<vmem>>, vector<1x192xf32>
      %67 = vector.broadcast %66 : vector<1x192xf32> to vector<64x192xf32>
      %68 = arith.mulf %65, %67 : vector<64x192xf32>
      %69 = arith.addf %64, %68 : vector<64x192xf32>
      %c4 = arith.constant 4 : index
      %c0_34 = arith.constant 0 : index
      %70 = vector.load %arg7[%c4, %c0_34] : memref<80x192xf32, #tpu.memory_space<vmem>>, vector<64x192xf32>
      %c4_35 = arith.constant 4 : index
      %c0_36 = arith.constant 0 : index
      %71 = vector.load %arg5[%c4_35, %c0_36] : memref<17x192xf32, #tpu.memory_space<vmem>>, vector<1x192xf32>
      %72 = vector.broadcast %71 : vector<1x192xf32> to vector<64x192xf32>
      %73 = arith.mulf %70, %72 : vector<64x192xf32>
      %74 = arith.addf %69, %73 : vector<64x192xf32>
      %c5 = arith.constant 5 : index
      %c0_37 = arith.constant 0 : index
      %75 = vector.load %arg7[%c5, %c0_37] : memref<80x192xf32, #tpu.memory_space<vmem>>, vector<64x192xf32>
      %c5_38 = arith.constant 5 : index
      %c0_39 = arith.constant 0 : index
      %76 = vector.load %arg5[%c5_38, %c0_39] : memref<17x192xf32, #tpu.memory_space<vmem>>, vector<1x192xf32>
      %77 = vector.broadcast %76 : vector<1x192xf32> to vector<64x192xf32>
      %78 = arith.mulf %75, %77 : vector<64x192xf32>
      %79 = arith.addf %74, %78 : vector<64x192xf32>
      %c6 = arith.constant 6 : index
      %c0_40 = arith.constant 0 : index
      %80 = vector.load %arg7[%c6, %c0_40] : memref<80x192xf32, #tpu.memory_space<vmem>>, vector<64x192xf32>
      %c6_41 = arith.constant 6 : index
      %c0_42 = arith.constant 0 : index
      %81 = vector.load %arg5[%c6_41, %c0_42] : memref<17x192xf32, #tpu.memory_space<vmem>>, vector<1x192xf32>
      %82 = vector.broadcast %81 : vector<1x192xf32> to vector<64x192xf32>
      %83 = arith.mulf %80, %82 : vector<64x192xf32>
      %84 = arith.addf %79, %83 : vector<64x192xf32>
      %c7 = arith.constant 7 : index
      %c0_43 = arith.constant 0 : index
      %85 = vector.load %arg7[%c7, %c0_43] : memref<80x192xf32, #tpu.memory_space<vmem>>, vector<64x192xf32>
      %c7_44 = arith.constant 7 : index
      %c0_45 = arith.constant 0 : index
      %86 = vector.load %arg5[%c7_44, %c0_45] : memref<17x192xf32, #tpu.memory_space<vmem>>, vector<1x192xf32>
      %87 = vector.broadcast %86 : vector<1x192xf32> to vector<64x192xf32>
      %88 = arith.mulf %85, %87 : vector<64x192xf32>
      %89 = arith.addf %84, %88 : vector<64x192xf32>
      %c8_46 = arith.constant 8 : index
      %c0_47 = arith.constant 0 : index
      %90 = vector.load %arg7[%c8_46, %c0_47] : memref<80x192xf32, #tpu.memory_space<vmem>>, vector<64x192xf32>
      %c8_48 = arith.constant 8 : index
      %c0_49 = arith.constant 0 : index
      %91 = vector.load %arg5[%c8_48, %c0_49] : memref<17x192xf32, #tpu.memory_space<vmem>>, vector<1x192xf32>
      %92 = vector.broadcast %91 : vector<1x192xf32> to vector<64x192xf32>
      %93 = arith.mulf %90, %92 : vector<64x192xf32>
      %94 = arith.addf %89, %93 : vector<64x192xf32>
      %c9 = arith.constant 9 : index
      %c0_50 = arith.constant 0 : index
      %95 = vector.load %arg7[%c9, %c0_50] : memref<80x192xf32, #tpu.memory_space<vmem>>, vector<64x192xf32>
      %c9_51 = arith.constant 9 : index
      %c0_52 = arith.constant 0 : index
      %96 = vector.load %arg5[%c9_51, %c0_52] : memref<17x192xf32, #tpu.memory_space<vmem>>, vector<1x192xf32>
      %97 = vector.broadcast %96 : vector<1x192xf32> to vector<64x192xf32>
      %98 = arith.mulf %95, %97 : vector<64x192xf32>
      %99 = arith.addf %94, %98 : vector<64x192xf32>
      %c10 = arith.constant 10 : index
      %c0_53 = arith.constant 0 : index
      %100 = vector.load %arg7[%c10, %c0_53] : memref<80x192xf32, #tpu.memory_space<vmem>>, vector<64x192xf32>
      %c10_54 = arith.constant 10 : index
      %c0_55 = arith.constant 0 : index
      %101 = vector.load %arg5[%c10_54, %c0_55] : memref<17x192xf32, #tpu.memory_space<vmem>>, vector<1x192xf32>
      %102 = vector.broadcast %101 : vector<1x192xf32> to vector<64x192xf32>
      %103 = arith.mulf %100, %102 : vector<64x192xf32>
      %104 = arith.addf %99, %103 : vector<64x192xf32>
      %c11 = arith.constant 11 : index
      %c0_56 = arith.constant 0 : index
      %105 = vector.load %arg7[%c11, %c0_56] : memref<80x192xf32, #tpu.memory_space<vmem>>, vector<64x192xf32>
      %c11_57 = arith.constant 11 : index
      %c0_58 = arith.constant 0 : index
      %106 = vector.load %arg5[%c11_57, %c0_58] : memref<17x192xf32, #tpu.memory_space<vmem>>, vector<1x192xf32>
      %107 = vector.broadcast %106 : vector<1x192xf32> to vector<64x192xf32>
      %108 = arith.mulf %105, %107 : vector<64x192xf32>
      %109 = arith.addf %104, %108 : vector<64x192xf32>
      %c12 = arith.constant 12 : index
      %c0_59 = arith.constant 0 : index
      %110 = vector.load %arg7[%c12, %c0_59] : memref<80x192xf32, #tpu.memory_space<vmem>>, vector<64x192xf32>
      %c12_60 = arith.constant 12 : index
      %c0_61 = arith.constant 0 : index
      %111 = vector.load %arg5[%c12_60, %c0_61] : memref<17x192xf32, #tpu.memory_space<vmem>>, vector<1x192xf32>
      %112 = vector.broadcast %111 : vector<1x192xf32> to vector<64x192xf32>
      %113 = arith.mulf %110, %112 : vector<64x192xf32>
      %114 = arith.addf %109, %113 : vector<64x192xf32>
      %c13 = arith.constant 13 : index
      %c0_62 = arith.constant 0 : index
      %115 = vector.load %arg7[%c13, %c0_62] : memref<80x192xf32, #tpu.memory_space<vmem>>, vector<64x192xf32>
      %c13_63 = arith.constant 13 : index
      %c0_64 = arith.constant 0 : index
      %116 = vector.load %arg5[%c13_63, %c0_64] : memref<17x192xf32, #tpu.memory_space<vmem>>, vector<1x192xf32>
      %117 = vector.broadcast %116 : vector<1x192xf32> to vector<64x192xf32>
      %118 = arith.mulf %115, %117 : vector<64x192xf32>
      %119 = arith.addf %114, %118 : vector<64x192xf32>
      %c14 = arith.constant 14 : index
      %c0_65 = arith.constant 0 : index
      %120 = vector.load %arg7[%c14, %c0_65] : memref<80x192xf32, #tpu.memory_space<vmem>>, vector<64x192xf32>
      %c14_66 = arith.constant 14 : index
      %c0_67 = arith.constant 0 : index
      %121 = vector.load %arg5[%c14_66, %c0_67] : memref<17x192xf32, #tpu.memory_space<vmem>>, vector<1x192xf32>
      %122 = vector.broadcast %121 : vector<1x192xf32> to vector<64x192xf32>
      %123 = arith.mulf %120, %122 : vector<64x192xf32>
      %124 = arith.addf %119, %123 : vector<64x192xf32>
      %c15 = arith.constant 15 : index
      %c0_68 = arith.constant 0 : index
      %125 = vector.load %arg7[%c15, %c0_68] : memref<80x192xf32, #tpu.memory_space<vmem>>, vector<64x192xf32>
      %c15_69 = arith.constant 15 : index
      %c0_70 = arith.constant 0 : index
      %126 = vector.load %arg5[%c15_69, %c0_70] : memref<17x192xf32, #tpu.memory_space<vmem>>, vector<1x192xf32>
      %127 = vector.broadcast %126 : vector<1x192xf32> to vector<64x192xf32>
      %128 = arith.mulf %125, %127 : vector<64x192xf32>
      %129 = arith.addf %124, %128 : vector<64x192xf32>
      %c16 = arith.constant 16 : index
      %c0_71 = arith.constant 0 : index
      %130 = vector.load %arg7[%c16, %c0_71] : memref<80x192xf32, #tpu.memory_space<vmem>>, vector<64x192xf32>
      %c16_72 = arith.constant 16 : index
      %c0_73 = arith.constant 0 : index
      %131 = vector.load %arg5[%c16_72, %c0_73] : memref<17x192xf32, #tpu.memory_space<vmem>>, vector<1x192xf32>
      %132 = vector.broadcast %131 : vector<1x192xf32> to vector<64x192xf32>
      %133 = arith.mulf %130, %132 : vector<64x192xf32>
      %134 = arith.addf %129, %133 : vector<64x192xf32>
      %c8_74 = arith.constant 8 : index
      %c0_75 = arith.constant 0 : index
      %135 = vector.load %arg7[%c8_74, %c0_75] : memref<80x192xf32, #tpu.memory_space<vmem>>, vector<64x192xf32>
      %136 = arith.addf %135, %134 : vector<64x192xf32>
      %c0_76 = arith.constant 0 : index
      %c0_77 = arith.constant 0 : index
      %c0_78 = arith.constant 0 : index
      %137 = vector.load %arg6[%c0_76, %c0_77, %c0_78] : memref<1x64x192xf32, #tpu.memory_space<vmem>>, vector<1x64x192xf32>
      %138 = vector.shape_cast %137 : vector<1x64x192xf32> to vector<64x192xf32>
      %139 = vector.shape_cast %136 : vector<64x192xf32> to vector<1x64x192xf32>
      tpu.vector_store %arg6[%c0_76, %c0_77, %c0_78], %139 {strides = array<i32>} : memref<1x64x192xf32, #tpu.memory_space<vmem>>, vector<1x64x192xf32>,
    } else {
    }
    %c64 = arith.constant 64 : index
    %c0_16 = arith.constant 0 : index
    %46 = vector.load %arg7[%c64, %c0_16] : memref<80x192xf32, #tpu.memory_space<vmem>>, vector<8x192xf32>
    %c0_17 = arith.constant 0 : index
    %c0_18 = arith.constant 0 : index
    %47 = vector.load %arg7[%c0_17, %c0_18] : memref<80x192xf32, #tpu.memory_space<vmem>>, vector<8x192xf32>
    tpu.vector_store %arg7[%c0_17, %c0_18], %46 {strides = array<i32>} : memref<80x192xf32, #tpu.memory_space<vmem>>, vector<8x192xf32>,
    %c8 = arith.constant 8 : index
    %c0_19 = arith.constant 0 : index
    %48 = vector.load %arg7[%c8, %c0_19] : memref<80x192xf32, #tpu.memory_space<vmem>>, vector<64x192xf32>
    tpu.vector_store %arg7[%c8, %c0_19], %37 {strides = array<i32>} : memref<80x192xf32, #tpu.memory_space<vmem>>, vector<64x192xf32>,
    return
  }
  func.func @transform_0(%arg0: i32, %arg1: i32) -> (i32, i32, i32) {
    %c1_i32 = arith.constant 1 : i32
    %0 = arith.minsi %arg1, %c1_i32 : i32
    %c0_i32 = arith.constant 0 : i32
    %c0_i32_0 = arith.constant 0 : i32
    return %arg0, %0, %c0_i32 : i32, i32, i32
  }
  func.func @transform_1(%arg0: i32, %arg1: i32) -> (i32, i32) {
    %c0_i32 = arith.constant 0 : i32
    %c0_i32_0 = arith.constant 0 : i32
    %c0_i32_1 = arith.constant 0 : i32
    return %c0_i32, %c0_i32_0 : i32, i32
  }
  func.func @transform_2(%arg0: i32, %arg1: i32) -> (i32, i32) {
    %c0_i32 = arith.constant 0 : i32
    %c0_i32_0 = arith.constant 0 : i32
    %c0_i32_1 = arith.constant 0 : i32
    return %c0_i32, %c0_i32_0 : i32, i32
  }
  func.func @transform_3(%arg0: i32, %arg1: i32) -> (i32, i32) {
    %c0_i32 = arith.constant 0 : i32
    %c0_i32_0 = arith.constant 0 : i32
    %c0_i32_1 = arith.constant 0 : i32
    return %c0_i32, %c0_i32_0 : i32, i32
  }
  func.func @transform_4(%arg0: i32, %arg1: i32) -> (i32, i32, i32) {
    %c1_i32 = arith.constant 1 : i32
    %0 = arith.subi %arg1, %c1_i32 : i32
    %c0_i32 = arith.constant 0 : i32
    %1 = arith.maxsi %0, %c0_i32 : i32
    %c0_i32_0 = arith.constant 0 : i32
    %c0_i32_1 = arith.constant 0 : i32
    return %arg0, %1, %c0_i32_0 : i32, i32, i32
  }
}

module attributes {stable_mosaic.version = 11 : i64} {
  func.func @attn_gate_kernel(%arg0: i32, %arg1: i32, %arg2: memref<1x2x64x64xbf16, #tpu.memory_space<vmem>>, %arg3: memref<1x2x64x64xbf16, #tpu.memory_space<vmem>>, %arg4: memref<1x2x64x64xbf16, #tpu.memory_space<vmem>>, %arg5: memref<1x2x64x128xf32, #tpu.memory_space<vmem>>, %arg6: memref<1x64x128xf32, #tpu.memory_space<vmem>>, %arg7: memref<1x2x64x64xf32, #tpu.memory_space<vmem>>) attributes {dimension_semantics = [#tpu.dimension_semantics<parallel>, #tpu.dimension_semantics<parallel>], iteration_bounds = array<i64: 2, 1>, scalar_prefetch = 0 : i64, scratch_operands = 0 : i64, tpu.core_type = #tpu.core_type<tc>, window_params = [{transform_indices = @transform_0, window_bounds = array<i64: 1, 2, 64, 64>}, {transform_indices = @transform_1, window_bounds = array<i64: 1, 2, 64, 64>}, {transform_indices = @transform_2, window_bounds = array<i64: 1, 2, 64, 64>}, {transform_indices = @transform_3, window_bounds = array<i64: 1, 2, 64, 128>}, {transform_indices = @transform_4, window_bounds = array<i64: 1, 64, 128>}, {transform_indices = @transform_5, window_bounds = array<i64: 1, 2, 64, 64>}]} {
    %c0 = arith.constant 0 : index
    %c0_0 = arith.constant 0 : index
    %c0_1 = arith.constant 0 : index
    %c0_2 = arith.constant 0 : index
    %0 = vector.load %arg2[%c0, %c0_0, %c0_1, %c0_2] : memref<1x2x64x64xbf16, #tpu.memory_space<vmem>>, vector<1x2x64x64xbf16>
    %1 = vector.shape_cast %0 : vector<1x2x64x64xbf16> to vector<2x64x64xbf16>
    %c0_3 = arith.constant 0 : index
    %c0_4 = arith.constant 0 : index
    %c0_5 = arith.constant 0 : index
    %c0_6 = arith.constant 0 : index
    %2 = vector.load %arg3[%c0_3, %c0_4, %c0_5, %c0_6] : memref<1x2x64x64xbf16, #tpu.memory_space<vmem>>, vector<1x2x64x64xbf16>
    %3 = vector.shape_cast %2 : vector<1x2x64x64xbf16> to vector<2x64x64xbf16>
    %c0_7 = arith.constant 0 : index
    %c0_8 = arith.constant 0 : index
    %c0_9 = arith.constant 0 : index
    %c0_10 = arith.constant 0 : index
    %4 = vector.load %arg4[%c0_7, %c0_8, %c0_9, %c0_10] : memref<1x2x64x64xbf16, #tpu.memory_space<vmem>>, vector<1x2x64x64xbf16>
    %5 = vector.shape_cast %4 : vector<1x2x64x64xbf16> to vector<2x64x64xbf16>
    %c0_11 = arith.constant 0 : index
    %c0_12 = arith.constant 0 : index
    %c0_13 = arith.constant 0 : index
    %c0_14 = arith.constant 0 : index
    %6 = vector.load %arg5[%c0_11, %c0_12, %c0_13, %c0_14] : memref<1x2x64x128xf32, #tpu.memory_space<vmem>>, vector<1x2x64x128xf32>
    %7 = vector.shape_cast %6 : vector<1x2x64x128xf32> to vector<2x64x128xf32>
    %c0_15 = arith.constant 0 : index
    %c0_16 = arith.constant 0 : index
    %c0_17 = arith.constant 0 : index
    %8 = vector.load %arg6[%c0_15, %c0_16, %c0_17] : memref<1x64x128xf32, #tpu.memory_space<vmem>>, vector<1x64x128xf32>
    %9 = vector.shape_cast %8 : vector<1x64x128xf32> to vector<64x128xf32>
    %10 = arith.truncf %9 : vector<64x128xf32> to vector<64x128xbf16>
    %cst = arith.constant dense<0.000000e+00> : vector<2x64x64xf32>
    %11 = tpu.matmul %1, %3, %cst {dimension_numbers = #tpu.dot_dimension_numbers<[2], [2], [1], [1], [0, 0, 0, 1, 1, 1], [0], [0]>} : vector<2x64x64xbf16>, vector<2x64x64xbf16>, vector<2x64x64xf32> -> vector<2x64x64xf32>
    %cst_18 = arith.constant 1.562500e-02 : f32
    %12 = vector.broadcast %cst_18 : f32 to vector<2x64x64xf32>
    %13 = arith.mulf %11, %12 : vector<2x64x64xf32>
    %cst_19 = arith.constant 0.000000e+00 : f32
    %14 = vector.broadcast %cst_19 : f32 to vector<2x64x64xf32>
    %15 = arith.maximumf %13, %14 : vector<2x64x64xf32>
    %16 = arith.mulf %15, %15 : vector<2x64x64xf32>
    %17 = arith.truncf %16 : vector<2x64x64xf32> to vector<2x64x64xbf16>
    %18 = arith.truncf %7 : vector<2x64x128xf32> to vector<2x64x128xbf16>
    %cst_20 = arith.constant dense<0.000000e+00> : vector<2x64x128xf32>
    %19 = tpu.matmul %17, %18, %cst_20 {dimension_numbers = #tpu.dot_dimension_numbers<[2], [1], [1], [2], [0, 0, 0, 1, 1, 2], [0], [0]>} : vector<2x64x64xbf16>, vector<2x64x128xbf16>, vector<2x64x128xf32> -> vector<2x64x128xf32>
    %cst_21 = arith.constant dense<0.000000e+00> : vector<2x64x128xf32>
    %20 = tpu.matmul %5, %10, %cst_21 {dimension_numbers = #tpu.dot_dimension_numbers<[2], [0], [0, 1], [1], [0, 0, 0, 1, 1, 1], [], []>} : vector<2x64x64xbf16>, vector<64x128xbf16>, vector<2x64x128xf32> -> vector<2x64x128xf32>
    %21 = arith.addf %19, %20 : vector<2x64x128xf32>
    %22 = vector.extract_strided_slice %21 {offsets = [0, 0, 0], sizes = [2, 64, 64], strides = [1, 1, 1]} : vector<2x64x128xf32> to vector<2x64x64xf32>
    %23 = vector.extract_strided_slice %21 {offsets = [0, 0, 64], sizes = [2, 64, 64], strides = [1, 1, 1]} : vector<2x64x128xf32> to vector<2x64x64xf32>
    %24 = vector.extract_strided_slice %7 {offsets = [0, 0, 0], sizes = [2, 64, 64], strides = [1, 1, 1]} : vector<2x64x128xf32> to vector<2x64x64xf32>
    %25 = vector.extract_strided_slice %7 {offsets = [0, 0, 64], sizes = [2, 64, 64], strides = [1, 1, 1]} : vector<2x64x128xf32> to vector<2x64x64xf32>
    %26 = arith.mulf %23, %24 : vector<2x64x64xf32>
    %27 = arith.mulf %22, %25 : vector<2x64x64xf32>
    %cst_22 = arith.constant 0.000000e+00 : f32
    %28 = vector.broadcast %cst_22 : f32 to vector<2x64x64xf32>
    %29 = arith.subf %28, %27 : vector<2x64x64xf32>
    %30 = math.exp %29 : vector<2x64x64xf32>
    %cst_23 = arith.constant 1.000000e+00 : f32
    %31 = vector.broadcast %cst_23 : f32 to vector<2x64x64xf32>
    %32 = arith.addf %31, %30 : vector<2x64x64xf32>
    %33 = tpu.reciprocal %32 {approx = true} : vector<2x64x64xf32> -> vector<2x64x64xf32>
    %34 = arith.mulf %26, %33 : vector<2x64x64xf32>
    %c0_24 = arith.constant 0 : index
    %c0_25 = arith.constant 0 : index
    %c0_26 = arith.constant 0 : index
    %c0_27 = arith.constant 0 : index
    %35 = vector.load %arg7[%c0_24, %c0_25, %c0_26, %c0_27] : memref<1x2x64x64xf32, #tpu.memory_space<vmem>>, vector<1x2x64x64xf32>
    %36 = vector.shape_cast %35 : vector<1x2x64x64xf32> to vector<2x64x64xf32>
    %37 = vector.shape_cast %34 : vector<2x64x64xf32> to vector<1x2x64x64xf32>
    tpu.vector_store %arg7[%c0_24, %c0_25, %c0_26, %c0_27], %37 {strides = array<i32>} : memref<1x2x64x64xf32, #tpu.memory_space<vmem>>, vector<1x2x64x64xf32>,
    return
  }
  func.func @transform_0(%arg0: i32, %arg1: i32) -> (i32, i32, i32, i32) {
    %c0_i32 = arith.constant 0 : i32
    %c0_i32_0 = arith.constant 0 : i32
    %c0_i32_1 = arith.constant 0 : i32
    return %arg0, %arg1, %c0_i32, %c0_i32_0 : i32, i32, i32, i32
  }
  func.func @transform_1(%arg0: i32, %arg1: i32) -> (i32, i32, i32, i32) {
    %c0_i32 = arith.constant 0 : i32
    %c0_i32_0 = arith.constant 0 : i32
    %c0_i32_1 = arith.constant 0 : i32
    return %arg0, %arg1, %c0_i32, %c0_i32_0 : i32, i32, i32, i32
  }
  func.func @transform_2(%arg0: i32, %arg1: i32) -> (i32, i32, i32, i32) {
    %c0_i32 = arith.constant 0 : i32
    %c0_i32_0 = arith.constant 0 : i32
    %c0_i32_1 = arith.constant 0 : i32
    return %arg0, %arg1, %c0_i32, %c0_i32_0 : i32, i32, i32, i32
  }
  func.func @transform_3(%arg0: i32, %arg1: i32) -> (i32, i32, i32, i32) {
    %c0_i32 = arith.constant 0 : i32
    %c0_i32_0 = arith.constant 0 : i32
    %c0_i32_1 = arith.constant 0 : i32
    return %arg0, %arg1, %c0_i32, %c0_i32_0 : i32, i32, i32, i32
  }
  func.func @transform_4(%arg0: i32, %arg1: i32) -> (i32, i32, i32) {
    %c0_i32 = arith.constant 0 : i32
    %c0_i32_0 = arith.constant 0 : i32
    %c0_i32_1 = arith.constant 0 : i32
    return %arg0, %c0_i32, %c0_i32_0 : i32, i32, i32
  }
  func.func @transform_5(%arg0: i32, %arg1: i32) -> (i32, i32, i32, i32) {
    %c0_i32 = arith.constant 0 : i32
    %c0_i32_0 = arith.constant 0 : i32
    %c0_i32_1 = arith.constant 0 : i32
    return %arg0, %arg1, %c0_i32, %c0_i32_0 : i32, i32, i32, i32
  }
}

module attributes {stable_mosaic.version = 11 : i64} {
  func.func @linkv_kernel(%arg0: i32, %arg1: i32, %arg2: memref<1x128x64xbf16, #tpu.memory_space<vmem>>, %arg3: memref<1x128x128xf32, #tpu.memory_space<vmem>>, %arg4: memref<1x64x128xf32, #tpu.memory_space<vmem>>) attributes {dimension_semantics = [#tpu.dimension_semantics<parallel>, #tpu.dimension_semantics<arbitrary>], iteration_bounds = array<i64: 2, 1>, scalar_prefetch = 0 : i64, scratch_operands = 0 : i64, tpu.core_type = #tpu.core_type<tc>, window_params = [{transform_indices = @transform_0, window_bounds = array<i64: 1, 128, 64>}, {transform_indices = @transform_1, window_bounds = array<i64: 1, 128, 128>}, {transform_indices = @transform_2, window_bounds = array<i64: 1, 64, 128>}]} {
    %c0_i32 = arith.constant 0 : i32
    %0 = arith.cmpi eq, %arg1, %c0_i32 : i32
    %1 = arith.extui %0 : i1 to i32
    %c0_i32_0 = arith.constant 0 : i32
    %2 = arith.cmpi ne, %1, %c0_i32_0 : i32
    scf.if %2 {
      %cst_14 = arith.constant 0.000000e+00 : f32
      %18 = vector.broadcast %cst_14 : f32 to vector<1x64x128xf32>
      %c0_15 = arith.constant 0 : index
      %c0_16 = arith.constant 0 : index
      %c0_17 = arith.constant 0 : index
      %19 = vector.load %arg4[%c0_15, %c0_16, %c0_17] : memref<1x64x128xf32, #tpu.memory_space<vmem>>, vector<1x64x128xf32>
      tpu.vector_store %arg4[%c0_15, %c0_16, %c0_17], %18 {strides = array<i32>} : memref<1x64x128xf32, #tpu.memory_space<vmem>>, vector<1x64x128xf32>,
    } else {
    }
    %c0 = arith.constant 0 : index
    %c0_1 = arith.constant 0 : index
    %c0_2 = arith.constant 0 : index
    %3 = vector.load %arg2[%c0, %c0_1, %c0_2] : memref<1x128x64xbf16, #tpu.memory_space<vmem>>, vector<1x128x64xbf16>
    %4 = vector.shape_cast %3 : vector<1x128x64xbf16> to vector<128x64xbf16>
    %c0_3 = arith.constant 0 : index
    %c0_4 = arith.constant 0 : index
    %c0_5 = arith.constant 0 : index
    %5 = vector.load %arg3[%c0_3, %c0_4, %c0_5] : memref<1x128x128xf32, #tpu.memory_space<vmem>>, vector<1x128x128xf32>
    %6 = vector.shape_cast %5 : vector<1x128x128xf32> to vector<128x128xf32>
    %7 = arith.truncf %6 : vector<128x128xf32> to vector<128x128xbf16>
    %c0_6 = arith.constant 0 : index
    %c0_7 = arith.constant 0 : index
    %c0_8 = arith.constant 0 : index
    %8 = vector.load %arg4[%c0_6, %c0_7, %c0_8] : memref<1x64x128xf32, #tpu.memory_space<vmem>>, vector<1x64x128xf32>
    %9 = vector.shape_cast %8 : vector<1x64x128xf32> to vector<64x128xf32>
    %cst = arith.constant dense<0.000000e+00> : vector<64x128xf32>
    %10 = tpu.matmul %4, %7, %cst {dimension_numbers = #tpu.dot_dimension_numbers<[0], [0], [1], [1], [0, 1, 1, 1], [], []>} : vector<128x64xbf16>, vector<128x128xbf16>, vector<64x128xf32> -> vector<64x128xf32>
    %11 = arith.addf %9, %10 : vector<64x128xf32>
    %c0_9 = arith.constant 0 : index
    %c0_10 = arith.constant 0 : index
    %c0_11 = arith.constant 0 : index
    %12 = vector.load %arg4[%c0_9, %c0_10, %c0_11] : memref<1x64x128xf32, #tpu.memory_space<vmem>>, vector<1x64x128xf32>
    %13 = vector.shape_cast %12 : vector<1x64x128xf32> to vector<64x128xf32>
    %14 = vector.shape_cast %11 : vector<64x128xf32> to vector<1x64x128xf32>
    tpu.vector_store %arg4[%c0_9, %c0_10, %c0_11], %14 {strides = array<i32>} : memref<1x64x128xf32, #tpu.memory_space<vmem>>, vector<1x64x128xf32>,
    %c0_i32_12 = arith.constant 0 : i32
    %15 = arith.cmpi eq, %arg1, %c0_i32_12 : i32
    %16 = arith.extui %15 : i1 to i32
    %c0_i32_13 = arith.constant 0 : i32
    %17 = arith.cmpi ne, %16, %c0_i32_13 : i32
    scf.if %17 {
      %c0_14 = arith.constant 0 : index
      %c0_15 = arith.constant 0 : index
      %c0_16 = arith.constant 0 : index
      %18 = vector.load %arg4[%c0_14, %c0_15, %c0_16] : memref<1x64x128xf32, #tpu.memory_space<vmem>>, vector<1x64x128xf32>
      %19 = vector.shape_cast %18 : vector<1x64x128xf32> to vector<64x128xf32>
      %cst_17 = arith.constant 0.010416667 : f32
      %20 = vector.broadcast %cst_17 : f32 to vector<64x128xf32>
      %21 = arith.mulf %19, %20 : vector<64x128xf32>
      %c0_18 = arith.constant 0 : index
      %c0_19 = arith.constant 0 : index
      %c0_20 = arith.constant 0 : index
      %22 = vector.load %arg4[%c0_18, %c0_19, %c0_20] : memref<1x64x128xf32, #tpu.memory_space<vmem>>, vector<1x64x128xf32>
      %23 = vector.shape_cast %22 : vector<1x64x128xf32> to vector<64x128xf32>
      %24 = vector.shape_cast %21 : vector<64x128xf32> to vector<1x64x128xf32>
      tpu.vector_store %arg4[%c0_18, %c0_19, %c0_20], %24 {strides = array<i32>} : memref<1x64x128xf32, #tpu.memory_space<vmem>>, vector<1x64x128xf32>,
    } else {
    }
    return
  }
  func.func @transform_0(%arg0: i32, %arg1: i32) -> (i32, i32, i32) {
    %c0_i32 = arith.constant 0 : i32
    %c0_i32_0 = arith.constant 0 : i32
    return %arg0, %arg1, %c0_i32 : i32, i32, i32
  }
  func.func @transform_1(%arg0: i32, %arg1: i32) -> (i32, i32, i32) {
    %c0_i32 = arith.constant 0 : i32
    %c0_i32_0 = arith.constant 0 : i32
    return %arg0, %arg1, %c0_i32 : i32, i32, i32
  }
  func.func @transform_2(%arg0: i32, %arg1: i32) -> (i32, i32, i32) {
    %c0_i32 = arith.constant 0 : i32
    %c0_i32_0 = arith.constant 0 : i32
    %c0_i32_1 = arith.constant 0 : i32
    return %arg0, %c0_i32, %c0_i32_0 : i32, i32, i32
  }
}

module attributes {stable_mosaic.version = 11 : i64} {
  func.func @ffconvm_kernel(%arg0: i32, %arg1: i32, %arg2: memref<1x64x64xf32, #tpu.memory_space<vmem>>, %arg3: memref<64x32xbf16, #tpu.memory_space<vmem>>, %arg4: memref<1x32xf32, #tpu.memory_space<vmem>>, %arg5: memref<17x32xf32, #tpu.memory_space<vmem>>, %arg6: memref<1x64x32xf32, #tpu.memory_space<vmem>>, %arg7: memref<80x32xf32, #tpu.memory_space<vmem>>) attributes {dimension_semantics = [#tpu.dimension_semantics<parallel>, #tpu.dimension_semantics<arbitrary>], iteration_bounds = array<i64: 2, 3>, scalar_prefetch = 0 : i64, scratch_operands = 1 : i64, tpu.core_type = #tpu.core_type<tc>, window_params = [{transform_indices = @transform_0, window_bounds = array<i64: 1, 64, 64>}, {pipeline_mode = #tpu.pipeline_mode<synchronous>, transform_indices = @transform_1, window_bounds = array<i64: 64, 32>}, {pipeline_mode = #tpu.pipeline_mode<synchronous>, transform_indices = @transform_2, window_bounds = array<i64: 1, 32>}, {pipeline_mode = #tpu.pipeline_mode<synchronous>, transform_indices = @transform_3, window_bounds = array<i64: 17, 32>}, {transform_indices = @transform_4, window_bounds = array<i64: 1, 64, 32>}]} {
    %c0 = arith.constant 0 : index
    %c0_0 = arith.constant 0 : index
    %c0_1 = arith.constant 0 : index
    %0 = vector.load %arg2[%c0, %c0_0, %c0_1] : memref<1x64x64xf32, #tpu.memory_space<vmem>>, vector<1x64x64xf32>
    %1 = vector.shape_cast %0 : vector<1x64x64xf32> to vector<64x64xf32>
    %2 = arith.mulf %1, %1 : vector<64x64xf32>
    %cst = arith.constant dense<0.000000e+00> : vector<64xf32>
    %3 = vector.multi_reduction <add>, %2, %cst [1] : vector<64x64xf32> to vector<64xf32>
    %4 = vector.shape_cast %3 : vector<64xf32> to vector<64x1xf32>
    %5 = math.sqrt %4 : vector<64x1xf32>
    %cst_2 = arith.constant 1.250000e-01 : f32
    %6 = vector.broadcast %cst_2 : f32 to vector<64x1xf32>
    %7 = arith.mulf %5, %6 : vector<64x1xf32>
    %cst_3 = arith.constant 9.99999974E-6 : f32
    %8 = vector.broadcast %cst_3 : f32 to vector<64x1xf32>
    %9 = arith.maximumf %7, %8 : vector<64x1xf32>
    %10 = vector.broadcast %9 : vector<64x1xf32> to vector<64x64xf32>
    %11 = arith.divf %1, %10 : vector<64x64xf32>
    %12 = arith.truncf %11 : vector<64x64xf32> to vector<64x64xbf16>
    %c0_4 = arith.constant 0 : index
    %c0_5 = arith.constant 0 : index
    %13 = vector.load %arg3[%c0_4, %c0_5] : memref<64x32xbf16, #tpu.memory_space<vmem>>, vector<64x32xbf16>
    %cst_6 = arith.constant dense<0.000000e+00> : vector<64x32xf32>
    %14 = tpu.matmul %12, %13, %cst_6 {dimension_numbers = #tpu.dot_dimension_numbers<[1], [0], [0], [1], [0, 0, 1, 1], [], []>} : vector<64x64xbf16>, vector<64x32xbf16>, vector<64x32xf32> -> vector<64x32xf32>
    %c0_7 = arith.constant 0 : index
    %c0_8 = arith.constant 0 : index
    %15 = vector.load %arg4[%c0_7, %c0_8] : memref<1x32xf32, #tpu.memory_space<vmem>>, vector<1x32xf32>
    %16 = vector.broadcast %15 : vector<1x32xf32> to vector<64x32xf32>
    %17 = arith.addf %14, %16 : vector<64x32xf32>
    %cst_9 = arith.constant 0.000000e+00 : f32
    %18 = vector.broadcast %cst_9 : f32 to vector<64x32xf32>
    %19 = arith.subf %18, %17 : vector<64x32xf32>
    %20 = math.exp %19 : vector<64x32xf32>
    %cst_10 = arith.constant 1.000000e+00 : f32
    %21 = vector.broadcast %cst_10 : f32 to vector<64x32xf32>
    %22 = arith.addf %21, %20 : vector<64x32xf32>
    %23 = tpu.reciprocal %22 {approx = true} : vector<64x32xf32> -> vector<64x32xf32>
    %24 = arith.mulf %17, %23 : vector<64x32xf32>
    %c64_i32 = arith.constant 64 : i32
    %25 = arith.muli %arg1, %c64_i32 : i32
    %26 = tpu.iota {dimensions = array<i32: 0>} : vector<64x1xi32>
    %27 = vector.broadcast %25 : i32 to vector<64x1xi32>
    %28 = arith.addi %27, %26 : vector<64x1xi32>
    %c96_i32 = arith.constant 96 : i32
    %29 = vector.broadcast %c96_i32 : i32 to vector<64x1xi32>
    %30 = arith.cmpi slt, %28, %29 : vector<64x1xi32>
    %c2_i32 = arith.constant 2 : i32
    %31 = arith.cmpi slt, %arg1, %c2_i32 : i32
    %32 = vector.broadcast %31 : i1 to vector<64x1xi1>
    %33 = arith.andi %30, %32 : vector<64x1xi1>
    %cst_11 = arith.constant 0.000000e+00 : f32
    %34 = vector.shape_cast %33 : vector<64x1xi1> to vector<64x1xi1>
    %35 = vector.broadcast %34 : vector<64x1xi1> to vector<64x32xi1>
    %36 = vector.broadcast %cst_11 : f32 to vector<64x32xf32>
    %37 = arith.select %35, %24, %36 : vector<64x32xi1>, vector<64x32xf32>
    %c0_i32 = arith.constant 0 : i32
    %38 = arith.cmpi eq, %arg1, %c0_i32 : i32
    %39 = arith.extui %38 : i1 to i32
    %c0_i32_12 = arith.constant 0 : i32
    %40 = arith.cmpi ne, %39, %c0_i32_12 : i32
    scf.if %40 {
      %cst_20 = arith.constant 0.000000e+00 : f32
      %49 = vector.broadcast %cst_20 : f32 to vector<80x32xf32>
      %c0_21 = arith.constant 0 : index
      %c0_22 = arith.constant 0 : index
      %50 = vector.load %arg7[%c0_21, %c0_22] : memref<80x32xf32, #tpu.memory_space<vmem>>, vector<80x32xf32>
      tpu.vector_store %arg7[%c0_21, %c0_22], %49 {strides = array<i32>} : memref<80x32xf32, #tpu.memory_space<vmem>>, vector<80x32xf32>,
    } else {
    }
    %41 = vector.extract_strided_slice %37 {offsets = [0, 0], sizes = [8, 32], strides = [1, 1]} : vector<64x32xf32> to vector<8x32xf32>
    %c72 = arith.constant 72 : index
    %c0_13 = arith.constant 0 : index
    %42 = vector.load %arg7[%c72, %c0_13] : memref<80x32xf32, #tpu.memory_space<vmem>>, vector<8x32xf32>
    tpu.vector_store %arg7[%c72, %c0_13], %41 {strides = array<i32>} : memref<80x32xf32, #tpu.memory_space<vmem>>, vector<8x32xf32>,
    %c0_i32_14 = arith.constant 0 : i32
    %43 = arith.cmpi sgt, %arg1, %c0_i32_14 : i32
    %44 = arith.extui %43 : i1 to i32
    %c0_i32_15 = arith.constant 0 : i32
    %45 = arith.cmpi ne, %44, %c0_i32_15 : i32
    scf.if %45 {
      %cst_20 = arith.constant 0.000000e+00 : f32
      %49 = vector.broadcast %cst_20 : f32 to vector<64x32xf32>
      %c0_21 = arith.constant 0 : index
      %c0_22 = arith.constant 0 : index
      %50 = vector.load %arg7[%c0_21, %c0_22] : memref<80x32xf32, #tpu.memory_space<vmem>>, vector<64x32xf32>
      %c0_23 = arith.constant 0 : index
      %c0_24 = arith.constant 0 : index
      %51 = vector.load %arg5[%c0_23, %c0_24] : memref<17x32xf32, #tpu.memory_space<vmem>>, vector<1x32xf32>
      %52 = vector.broadcast %51 : vector<1x32xf32> to vector<64x32xf32>
      %53 = arith.mulf %50, %52 : vector<64x32xf32>
      %54 = arith.addf %49, %53 : vector<64x32xf32>
      %c1 = arith.constant 1 : index
      %c0_25 = arith.constant 0 : index
      %55 = vector.load %arg7[%c1, %c0_25] : memref<80x32xf32, #tpu.memory_space<vmem>>, vector<64x32xf32>
      %c1_26 = arith.constant 1 : index
      %c0_27 = arith.constant 0 : index
      %56 = vector.load %arg5[%c1_26, %c0_27] : memref<17x32xf32, #tpu.memory_space<vmem>>, vector<1x32xf32>
      %57 = vector.broadcast %56 : vector<1x32xf32> to vector<64x32xf32>
      %58 = arith.mulf %55, %57 : vector<64x32xf32>
      %59 = arith.addf %54, %58 : vector<64x32xf32>
      %c2 = arith.constant 2 : index
      %c0_28 = arith.constant 0 : index
      %60 = vector.load %arg7[%c2, %c0_28] : memref<80x32xf32, #tpu.memory_space<vmem>>, vector<64x32xf32>
      %c2_29 = arith.constant 2 : index
      %c0_30 = arith.constant 0 : index
      %61 = vector.load %arg5[%c2_29, %c0_30] : memref<17x32xf32, #tpu.memory_space<vmem>>, vector<1x32xf32>
      %62 = vector.broadcast %61 : vector<1x32xf32> to vector<64x32xf32>
      %63 = arith.mulf %60, %62 : vector<64x32xf32>
      %64 = arith.addf %59, %63 : vector<64x32xf32>
      %c3 = arith.constant 3 : index
      %c0_31 = arith.constant 0 : index
      %65 = vector.load %arg7[%c3, %c0_31] : memref<80x32xf32, #tpu.memory_space<vmem>>, vector<64x32xf32>
      %c3_32 = arith.constant 3 : index
      %c0_33 = arith.constant 0 : index
      %66 = vector.load %arg5[%c3_32, %c0_33] : memref<17x32xf32, #tpu.memory_space<vmem>>, vector<1x32xf32>
      %67 = vector.broadcast %66 : vector<1x32xf32> to vector<64x32xf32>
      %68 = arith.mulf %65, %67 : vector<64x32xf32>
      %69 = arith.addf %64, %68 : vector<64x32xf32>
      %c4 = arith.constant 4 : index
      %c0_34 = arith.constant 0 : index
      %70 = vector.load %arg7[%c4, %c0_34] : memref<80x32xf32, #tpu.memory_space<vmem>>, vector<64x32xf32>
      %c4_35 = arith.constant 4 : index
      %c0_36 = arith.constant 0 : index
      %71 = vector.load %arg5[%c4_35, %c0_36] : memref<17x32xf32, #tpu.memory_space<vmem>>, vector<1x32xf32>
      %72 = vector.broadcast %71 : vector<1x32xf32> to vector<64x32xf32>
      %73 = arith.mulf %70, %72 : vector<64x32xf32>
      %74 = arith.addf %69, %73 : vector<64x32xf32>
      %c5 = arith.constant 5 : index
      %c0_37 = arith.constant 0 : index
      %75 = vector.load %arg7[%c5, %c0_37] : memref<80x32xf32, #tpu.memory_space<vmem>>, vector<64x32xf32>
      %c5_38 = arith.constant 5 : index
      %c0_39 = arith.constant 0 : index
      %76 = vector.load %arg5[%c5_38, %c0_39] : memref<17x32xf32, #tpu.memory_space<vmem>>, vector<1x32xf32>
      %77 = vector.broadcast %76 : vector<1x32xf32> to vector<64x32xf32>
      %78 = arith.mulf %75, %77 : vector<64x32xf32>
      %79 = arith.addf %74, %78 : vector<64x32xf32>
      %c6 = arith.constant 6 : index
      %c0_40 = arith.constant 0 : index
      %80 = vector.load %arg7[%c6, %c0_40] : memref<80x32xf32, #tpu.memory_space<vmem>>, vector<64x32xf32>
      %c6_41 = arith.constant 6 : index
      %c0_42 = arith.constant 0 : index
      %81 = vector.load %arg5[%c6_41, %c0_42] : memref<17x32xf32, #tpu.memory_space<vmem>>, vector<1x32xf32>
      %82 = vector.broadcast %81 : vector<1x32xf32> to vector<64x32xf32>
      %83 = arith.mulf %80, %82 : vector<64x32xf32>
      %84 = arith.addf %79, %83 : vector<64x32xf32>
      %c7 = arith.constant 7 : index
      %c0_43 = arith.constant 0 : index
      %85 = vector.load %arg7[%c7, %c0_43] : memref<80x32xf32, #tpu.memory_space<vmem>>, vector<64x32xf32>
      %c7_44 = arith.constant 7 : index
      %c0_45 = arith.constant 0 : index
      %86 = vector.load %arg5[%c7_44, %c0_45] : memref<17x32xf32, #tpu.memory_space<vmem>>, vector<1x32xf32>
      %87 = vector.broadcast %86 : vector<1x32xf32> to vector<64x32xf32>
      %88 = arith.mulf %85, %87 : vector<64x32xf32>
      %89 = arith.addf %84, %88 : vector<64x32xf32>
      %c8_46 = arith.constant 8 : index
      %c0_47 = arith.constant 0 : index
      %90 = vector.load %arg7[%c8_46, %c0_47] : memref<80x32xf32, #tpu.memory_space<vmem>>, vector<64x32xf32>
      %c8_48 = arith.constant 8 : index
      %c0_49 = arith.constant 0 : index
      %91 = vector.load %arg5[%c8_48, %c0_49] : memref<17x32xf32, #tpu.memory_space<vmem>>, vector<1x32xf32>
      %92 = vector.broadcast %91 : vector<1x32xf32> to vector<64x32xf32>
      %93 = arith.mulf %90, %92 : vector<64x32xf32>
      %94 = arith.addf %89, %93 : vector<64x32xf32>
      %c9 = arith.constant 9 : index
      %c0_50 = arith.constant 0 : index
      %95 = vector.load %arg7[%c9, %c0_50] : memref<80x32xf32, #tpu.memory_space<vmem>>, vector<64x32xf32>
      %c9_51 = arith.constant 9 : index
      %c0_52 = arith.constant 0 : index
      %96 = vector.load %arg5[%c9_51, %c0_52] : memref<17x32xf32, #tpu.memory_space<vmem>>, vector<1x32xf32>
      %97 = vector.broadcast %96 : vector<1x32xf32> to vector<64x32xf32>
      %98 = arith.mulf %95, %97 : vector<64x32xf32>
      %99 = arith.addf %94, %98 : vector<64x32xf32>
      %c10 = arith.constant 10 : index
      %c0_53 = arith.constant 0 : index
      %100 = vector.load %arg7[%c10, %c0_53] : memref<80x32xf32, #tpu.memory_space<vmem>>, vector<64x32xf32>
      %c10_54 = arith.constant 10 : index
      %c0_55 = arith.constant 0 : index
      %101 = vector.load %arg5[%c10_54, %c0_55] : memref<17x32xf32, #tpu.memory_space<vmem>>, vector<1x32xf32>
      %102 = vector.broadcast %101 : vector<1x32xf32> to vector<64x32xf32>
      %103 = arith.mulf %100, %102 : vector<64x32xf32>
      %104 = arith.addf %99, %103 : vector<64x32xf32>
      %c11 = arith.constant 11 : index
      %c0_56 = arith.constant 0 : index
      %105 = vector.load %arg7[%c11, %c0_56] : memref<80x32xf32, #tpu.memory_space<vmem>>, vector<64x32xf32>
      %c11_57 = arith.constant 11 : index
      %c0_58 = arith.constant 0 : index
      %106 = vector.load %arg5[%c11_57, %c0_58] : memref<17x32xf32, #tpu.memory_space<vmem>>, vector<1x32xf32>
      %107 = vector.broadcast %106 : vector<1x32xf32> to vector<64x32xf32>
      %108 = arith.mulf %105, %107 : vector<64x32xf32>
      %109 = arith.addf %104, %108 : vector<64x32xf32>
      %c12 = arith.constant 12 : index
      %c0_59 = arith.constant 0 : index
      %110 = vector.load %arg7[%c12, %c0_59] : memref<80x32xf32, #tpu.memory_space<vmem>>, vector<64x32xf32>
      %c12_60 = arith.constant 12 : index
      %c0_61 = arith.constant 0 : index
      %111 = vector.load %arg5[%c12_60, %c0_61] : memref<17x32xf32, #tpu.memory_space<vmem>>, vector<1x32xf32>
      %112 = vector.broadcast %111 : vector<1x32xf32> to vector<64x32xf32>
      %113 = arith.mulf %110, %112 : vector<64x32xf32>
      %114 = arith.addf %109, %113 : vector<64x32xf32>
      %c13 = arith.constant 13 : index
      %c0_62 = arith.constant 0 : index
      %115 = vector.load %arg7[%c13, %c0_62] : memref<80x32xf32, #tpu.memory_space<vmem>>, vector<64x32xf32>
      %c13_63 = arith.constant 13 : index
      %c0_64 = arith.constant 0 : index
      %116 = vector.load %arg5[%c13_63, %c0_64] : memref<17x32xf32, #tpu.memory_space<vmem>>, vector<1x32xf32>
      %117 = vector.broadcast %116 : vector<1x32xf32> to vector<64x32xf32>
      %118 = arith.mulf %115, %117 : vector<64x32xf32>
      %119 = arith.addf %114, %118 : vector<64x32xf32>
      %c14 = arith.constant 14 : index
      %c0_65 = arith.constant 0 : index
      %120 = vector.load %arg7[%c14, %c0_65] : memref<80x32xf32, #tpu.memory_space<vmem>>, vector<64x32xf32>
      %c14_66 = arith.constant 14 : index
      %c0_67 = arith.constant 0 : index
      %121 = vector.load %arg5[%c14_66, %c0_67] : memref<17x32xf32, #tpu.memory_space<vmem>>, vector<1x32xf32>
      %122 = vector.broadcast %121 : vector<1x32xf32> to vector<64x32xf32>
      %123 = arith.mulf %120, %122 : vector<64x32xf32>
      %124 = arith.addf %119, %123 : vector<64x32xf32>
      %c15 = arith.constant 15 : index
      %c0_68 = arith.constant 0 : index
      %125 = vector.load %arg7[%c15, %c0_68] : memref<80x32xf32, #tpu.memory_space<vmem>>, vector<64x32xf32>
      %c15_69 = arith.constant 15 : index
      %c0_70 = arith.constant 0 : index
      %126 = vector.load %arg5[%c15_69, %c0_70] : memref<17x32xf32, #tpu.memory_space<vmem>>, vector<1x32xf32>
      %127 = vector.broadcast %126 : vector<1x32xf32> to vector<64x32xf32>
      %128 = arith.mulf %125, %127 : vector<64x32xf32>
      %129 = arith.addf %124, %128 : vector<64x32xf32>
      %c16 = arith.constant 16 : index
      %c0_71 = arith.constant 0 : index
      %130 = vector.load %arg7[%c16, %c0_71] : memref<80x32xf32, #tpu.memory_space<vmem>>, vector<64x32xf32>
      %c16_72 = arith.constant 16 : index
      %c0_73 = arith.constant 0 : index
      %131 = vector.load %arg5[%c16_72, %c0_73] : memref<17x32xf32, #tpu.memory_space<vmem>>, vector<1x32xf32>
      %132 = vector.broadcast %131 : vector<1x32xf32> to vector<64x32xf32>
      %133 = arith.mulf %130, %132 : vector<64x32xf32>
      %134 = arith.addf %129, %133 : vector<64x32xf32>
      %c8_74 = arith.constant 8 : index
      %c0_75 = arith.constant 0 : index
      %135 = vector.load %arg7[%c8_74, %c0_75] : memref<80x32xf32, #tpu.memory_space<vmem>>, vector<64x32xf32>
      %136 = arith.addf %135, %134 : vector<64x32xf32>
      %c0_76 = arith.constant 0 : index
      %c0_77 = arith.constant 0 : index
      %c0_78 = arith.constant 0 : index
      %137 = vector.load %arg6[%c0_76, %c0_77, %c0_78] : memref<1x64x32xf32, #tpu.memory_space<vmem>>, vector<1x64x32xf32>
      %138 = vector.shape_cast %137 : vector<1x64x32xf32> to vector<64x32xf32>
      %139 = vector.shape_cast %136 : vector<64x32xf32> to vector<1x64x32xf32>
      tpu.vector_store %arg6[%c0_76, %c0_77, %c0_78], %139 {strides = array<i32>} : memref<1x64x32xf32, #tpu.memory_space<vmem>>, vector<1x64x32xf32>,
    } else {
    }
    %c64 = arith.constant 64 : index
    %c0_16 = arith.constant 0 : index
    %46 = vector.load %arg7[%c64, %c0_16] : memref<80x32xf32, #tpu.memory_space<vmem>>, vector<8x32xf32>
    %c0_17 = arith.constant 0 : index
    %c0_18 = arith.constant 0 : index
    %47 = vector.load %arg7[%c0_17, %c0_18] : memref<80x32xf32, #tpu.memory_space<vmem>>, vector<8x32xf32>
    tpu.vector_store %arg7[%c0_17, %c0_18], %46 {strides = array<i32>} : memref<80x32xf32, #tpu.memory_space<vmem>>, vector<8x32xf32>,
    %c8 = arith.constant 8 : index
    %c0_19 = arith.constant 0 : index
    %48 = vector.load %arg7[%c8, %c0_19] : memref<80x32xf32, #tpu.memory_space<vmem>>, vector<64x32xf32>
    tpu.vector_store %arg7[%c8, %c0_19], %37 {strides = array<i32>} : memref<80x32xf32, #tpu.memory_space<vmem>>, vector<64x32xf32>,
    return
  }
  func.func @transform_0(%arg0: i32, %arg1: i32) -> (i32, i32, i32) {
    %c1_i32 = arith.constant 1 : i32
    %0 = arith.minsi %arg1, %c1_i32 : i32
    %c0_i32 = arith.constant 0 : i32
    %c0_i32_0 = arith.constant 0 : i32
    return %arg0, %0, %c0_i32 : i32, i32, i32
  }
  func.func @transform_1(%arg0: i32, %arg1: i32) -> (i32, i32) {
    %c0_i32 = arith.constant 0 : i32
    %c0_i32_0 = arith.constant 0 : i32
    %c0_i32_1 = arith.constant 0 : i32
    return %c0_i32, %c0_i32_0 : i32, i32
  }
  func.func @transform_2(%arg0: i32, %arg1: i32) -> (i32, i32) {
    %c0_i32 = arith.constant 0 : i32
    %c0_i32_0 = arith.constant 0 : i32
    %c0_i32_1 = arith.constant 0 : i32
    return %c0_i32, %c0_i32_0 : i32, i32
  }
  func.func @transform_3(%arg0: i32, %arg1: i32) -> (i32, i32) {
    %c0_i32 = arith.constant 0 : i32
    %c0_i32_0 = arith.constant 0 : i32
    %c0_i32_1 = arith.constant 0 : i32
    return %c0_i32, %c0_i32_0 : i32, i32
  }
  func.func @transform_4(%arg0: i32, %arg1: i32) -> (i32, i32, i32) {
    %c1_i32 = arith.constant 1 : i32
    %0 = arith.subi %arg1, %c1_i32 : i32
    %c0_i32 = arith.constant 0 : i32
    %1 = arith.maxsi %0, %c0_i32 : i32
    %c0_i32_0 = arith.constant 0 : i32
    %c0_i32_1 = arith.constant 0 : i32
    return %arg0, %1, %c0_i32_0 : i32, i32, i32
  }
}

</mosaic_0001>

<llo_original>
// kernel: mossformer_module_forward.8
$region0: #{mossformer_module_forward.8}
  #allocation0 [shape = 'u32[]', space=smem, size = 0x4, offset = 0x4, fixed_abs, tag = 'smem constant byte address 0x4 - core index']
  #allocation1 [shape = 'u32[144,128]{1,0:T(1,128)}', space=vmem, size = 0x12000, scoped, tag = 'internal scratch']
  #allocation2 [shape = 'f32[80,192]{1,0:T(8,128)}', space=vmem, size = 0x14000, scoped, tag = 'scratch operand']
  %s0 = inlined_call_operand.vmem [shape: f32[2,96,32], index: 0, kind: input, shape index: {}]
  %s1 = inlined_call_operand.vmem [shape: bf16[32,192], index: 1, kind: input, shape index: {}]
  %s2 = inlined_call_operand.vmem [shape: f32[1,192], index: 2, kind: input, shape index: {}]
  %s3 = inlined_call_operand.vmem [shape: f32[17,192], index: 3, kind: input, shape index: {}]
  %s4 = inlined_call_operand.vmem [shape: f32[2,96,192], index: 4, kind: output, shape index: {}]
  %s5 = sld [smem:[#allocation0]]
  $region83: #{mossformer_module_forward.8} parent=0
    _
  %s7 = ssub.s32 1, %s5
  %s8 = scalar_select 0, %s7, %s5
  $region1: #{mossformer_module_forward.8} parent=0
    #allocation3 [shape = 'u8[131072]{0}', space=vmem, size = 0x20000, scoped, tag = 'output window, operand 0']
    loop: start=0, step=1, limit=8
    $region2: #{mossformer_module_forward.8} parent=1 // loop_pre_header
      _
    $region3: #{mossformer_module_forward.8} parent=1 // loop_header
      %s10 = sphi 0, %s14
      %p11 = scmp.ge.s32.totalorder %s10, 8
      %s17 = sphi 0, %s29
      %s18 = sphi 0, %s25
      %s19 = sphi 0, %s17
      %s20 = sphi 0, %s18
      %s21 = sphi 0, %s19
      %s22 = sphi 0, %s20
      %s38 = sphi 0, %s40
      %s41 = sphi 0, %s38
      %s42 = sphi 0, %s41
      %s58 = sphi 0, %s42
      %s62 = sphi 0, %s62
      %s64 = sphi 0, %s62
      %s65 = sphi 0, %s64
      %s79 = sphi 0, %s65
      %s83 = sphi 0, %s83
      %s85 = sphi 0, %s83
      %s86 = sphi 0, %s85
      %s100 = sphi 0, %s86
      %s104 = sphi 0, %s104
      %s106 = sphi 0, %s104
      %s107 = sphi 0, %s106
      %s121 = sphi 0, %s107
      %s135 = sphi 0, %s137
      %s138 = sphi 0, %s135
      %s139 = sphi 0, %s138
      %s155 = sphi 0, %s139
    $region4: #{mossformer_module_forward.8} parent=1 // loop_header_branch
      %13 = sbr.rel (%p11) target = $region8
    $region5: #{mossformer_module_forward.8} parent=1 // loop_body
      %s15 = ssub.s32 %s10, 1
      %s16 = ssub.s32 %s10, 2
      %s23 = sadd.s32 1, %s18
      %p24 = scmp.ge.s32.totalorder %s23, 3
      %s25 = scalar_select %p24, 0, %s23
      %s26 = sadd.s32 1, %s17
      %s27 = scalar_select %p24, %s26, %s17
      %p28 = scmp.ge.s32.totalorder %s27, 2
      %s29 = scalar_select %p28, 0, %s27
      %p30 = scmp.lt.s32.totalorder %s18, 1
      %s31 = scalar_select %p30, %s18, 1
      %p32 = scmp.lt.s32.totalorder %s25, 1
      %s33 = scalar_select %p32, %s25, 1
      %s34 = ssub.s32 %s17, %s29
      %s35 = ssub.s32 %s31, %s33
      %s36 = sor.u32 %s34, %s35
      %p37 = scmp.eq.s32.totalorder %s36, 0
      %s39 = sadd.s32 %s38, 1
      %s40 = scalar_select %p37, %s38, %s39
      %p43 = pneg %p37
      %p44 = scmp.eq.s32.totalorder %s10, 5
      %p45 = por %p43, %p44
      %p46 = scmp.ne.s32.totalorder %s38, %s41
      %p47 = scmp.eq.s32.totalorder %s10, 0
      %p48 = por %p46, %p47
      %p49 = scmp.ne.s32.totalorder %s38, %s41
      %p50 = scmp.eq.s32.totalorder %s15, 5
      %p51 = por %p49, %p50
      %p52 = scmp.ne.s32.totalorder %s41, %s42
      %p53 = scmp.eq.s32.totalorder %s15, 0
      %p54 = por %p52, %p53
      %p55 = scmp.ne.s32.totalorder %s41, %s42
      %p56 = scmp.eq.s32.totalorder %s16, 5
      %p57 = por %p55, %p56
      %p59 = scmp.ne.s32.totalorder %s42, %s58
      %p60 = scmp.eq.s32.totalorder %s16, 0
      %p61 = por %p59, %p60
      %s63 = sadd.s32 %s62, 1
      %p66 = scmp.eq.s32.totalorder %s10, 5
      %p67 = scmp.ne.s32.totalorder %s62, %s64
      %p68 = scmp.eq.s32.totalorder %s10, 0
      %p69 = por %p67, %p68
      %p70 = scmp.ne.s32.totalorder %s62, %s64
      %p71 = scmp.eq.s32.totalorder %s15, 5
      %p72 = por %p70, %p71
      %p73 = scmp.ne.s32.totalorder %s64, %s65
      %p74 = scmp.eq.s32.totalorder %s15, 0
      %p75 = por %p73, %p74
      %p76 = scmp.ne.s32.totalorder %s64, %s65
      %p77 = scmp.eq.s32.totalorder %s16, 5
      %p78 = por %p76, %p77
      %p80 = scmp.ne.s32.totalorder %s65, %s79
      %p81 = scmp.eq.s32.totalorder %s16, 0
      %p82 = por %p80, %p81
      %s84 = sadd.s32 %s83, 1
      %p87 = scmp.eq.s32.totalorder %s10, 5
      %p88 = scmp.ne.s32.totalorder %s83, %s85
      %p89 = scmp.eq.s32.totalorder %s10, 0
      %p90 = por %p88, %p89
      %p91 = scmp.ne.s32.totalorder %s83, %s85
      %p92 = scmp.eq.s32.totalorder %s15, 5
      %p93 = por %p91, %p92
      %p94 = scmp.ne.s32.totalorder %s85, %s86
      %p95 = scmp.eq.s32.totalorder %s15, 0
      %p96 = por %p94, %p95
      %p97 = scmp.ne.s32.totalorder %s85, %s86
      %p98 = scmp.eq.s32.totalorder %s16, 5
      %p99 = por %p97, %p98
      %p101 = scmp.ne.s32.totalorder %s86, %s100
      %p102 = scmp.eq.s32.totalorder %s16, 0
      %p103 = por %p101, %p102
      %s105 = sadd.s32 %s104, 1
      %p108 = scmp.eq.s32.totalorder %s10, 5
      %p109 = scmp.ne.s32.totalorder %s104, %s106
      %p110 = scmp.eq.s32.totalorder %s10, 0
      %p111 = por %p109, %p110
      %p112 = scmp.ne.s32.totalorder %s104, %s106
      %p113 = scmp.eq.s32.totalorder %s15, 5
      %p114 = por %p112, %p113
      %p115 = scmp.ne.s32.totalorder %s106, %s107
      %p116 = scmp.eq.s32.totalorder %s15, 0
      %p117 = por %p115, %p116
      %p118 = scmp.ne.s32.totalorder %s106, %s107
      %p119 = scmp.eq.s32.totalorder %s16, 5
      %p120 = por %p118, %p119
      %p122 = scmp.ne.s32.totalorder %s107, %s121
      %p123 = scmp.eq.s32.totalorder %s16, 0
      %p124 = por %p122, %p123
      %s125 = ssub.s32 %s18, 1
      %p126 = scmp.gt.s32.totalorder %s125, 0
      %s127 = scalar_select %p126, %s125, 0
      %s128 = ssub.s32 %s25, 1
      %p129 = scmp.gt.s32.totalorder %s128, 0
      %s130 = scalar_select %p129, %s128, 0
      %s131 = ssub.s32 %s17, %s29
      %s132 = ssub.s32 %s127, %s130
      %s133 = sor.u32 %s131, %s132
      %p134 = scmp.eq.s32.totalorder %s133, 0
      %s136 = sadd.s32 %s135, 1
      %s137 = scalar_select %p134, %s135, %s136
      %p140 = pneg %p134
      %p141 = scmp.eq.s32.totalorder %s10, 5
      %p142 = por %p140, %p141
      %p143 = scmp.ne.s32.totalorder %s135, %s138
      %p144 = scmp.eq.s32.totalorder %s10, 0
      %p145 = por %p143, %p144
      %p146 = scmp.ne.s32.totalorder %s135, %s138
      %p147 = scmp.eq.s32.totalorder %s15, 5
      %p148 = por %p146, %p147
      %p149 = scmp.ne.s32.totalorder %s138, %s139
      %p150 = scmp.eq.s32.totalorder %s15, 0
      %p151 = por %p149, %p150
      %p152 = scmp.ne.s32.totalorder %s138, %s139
      %p153 = scmp.eq.s32.totalorder %s16, 5
      %p154 = por %p152, %p153
      %p156 = scmp.ne.s32.totalorder %s139, %s155
      %p157 = scmp.eq.s32.totalorder %s16, 0
      %p158 = por %p156, %p157
      %p159 = scmp.le.s32.totalorder 1, %s10
      %p160 = scmp.lt.s32.totalorder %s10, 7
      %p161 = pnand %p159, %p160
      %p162 = pneg %p161
      // Predicated region
      $region9: #{mossformer_module_forward.8} parent=5 // pred_check
        _
      $region10: #{mossformer_module_forward.8} parent=5 // pred_check_branch
        %164 = sbr.rel (%p161) target = $region12
      $region11: #{mossformer_module_forward.8} parent=5 // pred_region
        %s165 = ssub.s32 %s10, 1
        // Predicated region
        $region13: #{mossformer_module_forward.8} parent=11 // pred_check
          %p166 = pneg %p75
        $region14: #{mossformer_module_forward.8} parent=11 // pred_check_branch
          %168 = sbr.rel (%p166) target = $region16
        $region15: #{mossformer_module_forward.8} parent=11 // pred_region
          _
        $region16: #{mossformer_module_forward.8} parent=11 // pred_fallthru
          _
        // Predicated region
        $region17: #{mossformer_module_forward.8} parent=11 // pred_check
          %p169 = pneg %p96
        $region18: #{mossformer_module_forward.8} parent=11 // pred_check_branch
          %171 = sbr.rel (%p169) target = $region20
        $region19: #{mossformer_module_forward.8} parent=11 // pred_region
          _
        $region20: #{mossformer_module_forward.8} parent=11 // pred_fallthru
          _
        // Predicated region
        $region21: #{mossformer_module_forward.8} parent=11 // pred_check
          %p172 = pneg %p117
        $region22: #{mossformer_module_forward.8} parent=11 // pred_check_branch
          %174 = sbr.rel (%p172) target = $region24
        $region23: #{mossformer_module_forward.8} parent=11 // pred_region
          _
        $region24: #{mossformer_module_forward.8} parent=11 // pred_fallthru
          _
      $region12: #{mossformer_module_forward.8} parent=5 // pred_fallthru
        _
      %p175 = scmp.lt.s32.totalorder %s10, 6
      // Predicated region
      $region25: #{mossformer_module_forward.8} parent=5 // pred_check
        %p176 = pneg %p175
      $region26: #{mossformer_module_forward.8} parent=5 // pred_check_branch
        %178 = sbr.rel (%p176) target = $region28
      $region27: #{mossformer_module_forward.8} parent=5 // pred_region
        // Predicated region
        $region29: #{mossformer_module_forward.8} parent=27 // pred_check
          %p179 = pneg %p48
        $region30: #{mossformer_module_forward.8} parent=27 // pred_check_branch
          %181 = sbr.rel (%p179) target = $region32
        $region31: #{mossformer_module_forward.8} parent=27 // pred_region
          %p182 = scmp.lt.s32.totalorder %s18, 1
          %s183 = scalar_select %p182, %s18, 1
          %s184 = smul.u32 8, %s183
          %s185 = ssub.s32 12, %s184
          %p186 = scmp.lt.s32.totalorder %s185, 8
          %s187 = scalar_select %p186, %s185, 8
          %s188 = smul.u32 128, %s187
          %p189 = scmp.lt.s32.totalorder %s17, 1
          %s190 = scalar_select %p189, %s17, 1
          %p191 = scmp.lt.s32.totalorder %s184, 11
          %s192 = scalar_select %p191, %s184, 11
          %s193 = smul.addr %s190, 12
          %s194 = sadd.s32 %s192, %s193
          %s195 = smul.addr %s194, 8
          %s196 = scalar_lea.vmem %s0, %s195
          %p197 = scmp.lt.s32.totalorder %s18, 1
          %s198 = scalar_select %p197, %s18, 1
          %s199 = smul.u32 8, %s198
          %s200 = ssub.s32 12, %s199
          %p201 = scmp.lt.s32.totalorder %s200, 8
          %s202 = scalar_select %p201, %s200, 8
          %s203 = smul.u32 128, %s202
        $region32: #{mossformer_module_forward.8} parent=27 // pred_fallthru
          _
      $region28: #{mossformer_module_forward.8} parent=5 // pred_fallthru
        _
      %p204 = scmp.le.s32.totalorder 1, %s10
      %p205 = scmp.lt.s32.totalorder %s10, 7
      %p206 = pnand %p204, %p205
      %p207 = pneg %p206
      // Predicated region
      $region33: #{mossformer_module_forward.8} parent=5 // pred_check
        _
      $region34: #{mossformer_module_forward.8} parent=5 // pred_check_branch
        %209 = sbr.rel (%p206) target = $region36
      $region35: #{mossformer_module_forward.8} parent=5 // pred_region
        %s210 = ssub.s32 %s10, 1
        %p211 = scmp.lt.s32.totalorder %s20, 1
        %s212 = scalar_select %p211, %s20, 1
        %s213 = smul.u32 8, %s212
        %s214 = ssub.s32 12, %s213
        %p215 = scmp.lt.s32.totalorder %s214, 8
        %s216 = scalar_select %p215, %s214, 8
        %s217 = smul.u32 128, %s216
        %p218 = scmp.lt.s32.totalorder %s19, 1
        %s219 = scalar_select %p218, %s19, 1
        %p220 = scmp.lt.s32.totalorder %s213, 11
        %s221 = scalar_select %p220, %s213, 11
        %s222 = smul.addr %s219, 12
        %s223 = sadd.s32 %s221, %s222
        %s224 = smul.addr %s223, 8
        %s225 = scalar_lea.vmem %s0, %s224
        %p226 = pneg %p54
        %p227 = pneg %p51
        %p228 = pneg %p75
        %p229 = pneg %p72
        %p230 = pneg %p96
        %p231 = pneg %p93
        %p232 = pneg %p117
        %p233 = pneg %p114
        %p234 = pneg %p151
        %p235 = pneg %p148
        %s236 = sand.u32 %s138, 1
        %s237 = sand.u32 %s138, 1
        %s238 = smul.addr %s237, 128
        %s239 = scalar_lea.vmem [#allocation3], %s238
        %p240 = scmp.lt.s32.totalorder %s20, 1
        %s241 = scalar_select %p240, %s20, 1
        %s242 = smul.u32 8, %s241
        %s243 = ssub.s32 12, %s242
        %p244 = scmp.lt.s32.totalorder %s243, 8
        %s245 = scalar_select %p244, %s243, 8
        %s246 = smul.u32 128, %s245
        %p247 = scmp.lt.s32.totalorder %s19, 1
        %s248 = scalar_select %p247, %s19, 1
        %p249 = scmp.lt.s32.totalorder %s242, 11
        %s250 = scalar_select %p249, %s242, 11
        %s251 = smul.addr %s248, 12
        %s252 = sadd.s32 %s250, %s251
        %s253 = smul.addr %s252, 8
        %s254 = scalar_lea.vmem %s0, %s253
        %p255 = scmp.lt.s32.totalorder %s20, 1
        %s256 = scalar_select %p255, %s20, 1
        %s257 = smul.u32 8, %s256
        %s258 = ssub.s32 12, %s257
        %p259 = scmp.lt.s32.totalorder %s258, 8
        %s260 = scalar_select %p259, %s258, 8
        %s261 = smul.u32 128, %s260
        %s262 = ssub.s32 %s20, 1
        %p263 = scmp.gt.s32.totalorder %s262, 0
        %s264 = scalar_select %p263, %s262, 0
        %s265 = smul.u32 8, %s264
        %s266 = ssub.s32 12, %s265
        %p267 = scmp.lt.s32.totalorder %s266, 8
        %s268 = scalar_select %p267, %s266, 8
        %s269 = smul.u32 128, %s268
        %s270 = smul.u32 %s269, 2
        %v272 = vld [vmem:[%s254] sm:$0xff]
        %v273 = vld [vmem:[%s254 + $0x8] sm:$0xff]
        %v274 = vld [vmem:[%s254 + $0x10] sm:$0xff]
        %v275 = vld [vmem:[%s254 + $0x18] sm:$0xff]
        %v276 = vld [vmem:[%s254 + $0x20] sm:$0xff]
        %v277 = vld [vmem:[%s254 + $0x28] sm:$0xff]
        %v278 = vld [vmem:[%s254 + $0x30] sm:$0xff]
        %v279 = vld [vmem:[%s254 + $0x38] sm:$0xff]
        %v280 = vmul.f32 %v272, %v272
        %v281 = vmul.f32 %v273, %v273
        %v282 = vmul.f32 %v274, %v274
        %v283 = vmul.f32 %v275, %v275
        %v284 = vmul.f32 %v276, %v276
        %v285 = vmul.f32 %v277, %v277
        %v286 = vmul.f32 %v278, %v278
        %v287 = vmul.f32 %v279, %v279
        %vm288 = vcmask 261120
        %v289 = vsel %vm288, %v280, 0.0
        %290 = vadd.xlane.f32.xlu0 %v289
        %v291 = vpop.xlane.xlu0 %290
        %v292 = vsel %vm288, %v281, 0.0
        %293 = vadd.xlane.f32.xlu0 %v292
        %v294 = vpop.xlane.xlu0 %293
        %v295 = vsel %vm288, %v282, 0.0
        %296 = vadd.xlane.f32.xlu0 %v295
        %v297 = vpop.xlane.xlu0 %296
        %v298 = vsel %vm288, %v283, 0.0
        %299 = vadd.xlane.f32.xlu0 %v298
        %v300 = vpop.xlane.xlu0 %299
        %v301 = vsel %vm288, %v284, 0.0
        %302 = vadd.xlane.f32.xlu0 %v301
        %v303 = vpop.xlane.xlu0 %302
        %v304 = vsel %vm288, %v285, 0.0
        %305 = vadd.xlane.f32.xlu0 %v304
        %v306 = vpop.xlane.xlu0 %305
        %v307 = vsel %vm288, %v286, 0.0
        %308 = vadd.xlane.f32.xlu0 %v307
        %v309 = vpop.xlane.xlu0 %308
        %v310 = vsel %vm288, %v287, 0.0
        %311 = vadd.xlane.f32.xlu0 %v310
        %v312 = vpop.xlane.xlu0 %311
        %v313 = vrsqrt.pop %v291
        %v314 = vmul.f32 %v291, %v313
        %vm315 = vcmp.eq.f32.partialorder %v291, inf
        %v316 = vsel %vm315, %v291, %v314
        %vm317 = vcmp.eq.f32.partialorder %v291, 0.0
        %v318 = vand.u32 %v291, 2147483648
        %v319 = vsel %vm317, %v318, %v316
        %v320 = vrsqrt.pop %v294
        %v321 = vmul.f32 %v294, %v320
        %vm322 = vcmp.eq.f32.partialorder %v294, inf
        %v323 = vsel %vm322, %v294, %v321
        %vm324 = vcmp.eq.f32.partialorder %v294, 0.0
        %v325 = vand.u32 %v294, 2147483648
        %v326 = vsel %vm324, %v325, %v323
        %v327 = vrsqrt.pop %v297
        %v328 = vmul.f32 %v297, %v327
        %vm329 = vcmp.eq.f32.partialorder %v297, inf
        %v330 = vsel %vm329, %v297, %v328
        %vm331 = vcmp.eq.f32.partialorder %v297, 0.0
        %v332 = vand.u32 %v297, 2147483648
        %v333 = vsel %vm331, %v332, %v330
        %v334 = vrsqrt.pop %v300
        %v335 = vmul.f32 %v300, %v334
        %vm336 = vcmp.eq.f32.partialorder %v300, inf
        %v337 = vsel %vm336, %v300, %v335
        %vm338 = vcmp.eq.f32.partialorder %v300, 0.0
        %v339 = vand.u32 %v300, 2147483648
        %v340 = vsel %vm338, %v339, %v337
        %v341 = vrsqrt.pop %v303
        %v342 = vmul.f32 %v303, %v341
        %vm343 = vcmp.eq.f32.partialorder %v303, inf
        %v344 = vsel %vm343, %v303, %v342
        %vm345 = vcmp.eq.f32.partialorder %v303, 0.0
        %v346 = vand.u32 %v303, 2147483648
        %v347 = vsel %vm345, %v346, %v344
        %v348 = vrsqrt.pop %v306
        %v349 = vmul.f32 %v306, %v348
        %vm350 = vcmp.eq.f32.partialorder %v306, inf
        %v351 = vsel %vm350, %v306, %v349
        %vm352 = vcmp.eq.f32.partialorder %v306, 0.0
        %v353 = vand.u32 %v306, 2147483648
        %v354 = vsel %vm352, %v353, %v351
        %v355 = vrsqrt.pop %v309
        %v356 = vmul.f32 %v309, %v355
        %vm357 = vcmp.eq.f32.partialorder %v309, inf
        %v358 = vsel %vm357, %v309, %v356
        %vm359 = vcmp.eq.f32.partialorder %v309, 0.0
        %v360 = vand.u32 %v309, 2147483648
        %v361 = vsel %vm359, %v360, %v358
        %v362 = vrsqrt.pop %v312
        %v363 = vmul.f32 %v312, %v362
        %vm364 = vcmp.eq.f32.partialorder %v312, inf
        %v365 = vsel %vm364, %v312, %v363
        %vm366 = vcmp.eq.f32.partialorder %v312, 0.0
        %v367 = vand.u32 %v312, 2147483648
        %v368 = vsel %vm366, %v367, %v365
        %v369 = vmul.f32 %v319, 0.17677669
        %v370 = vmul.f32 %v326, 0.17677669
        %v371 = vmul.f32 %v333, 0.17677669
        %v372 = vmul.f32 %v340, 0.17677669
        %v373 = vmul.f32 %v347, 0.17677669
        %v374 = vmul.f32 %v354, 0.17677669
        %v375 = vmul.f32 %v361, 0.17677669
        %v376 = vmul.f32 %v368, 0.17677669
        %v377 = vmax.f32 %v369, 1e-05
        %v378 = vmax.f32 %v370, 1e-05
        %v379 = vmax.f32 %v371, 1e-05
        %v380 = vmax.f32 %v372, 1e-05
        %v381 = vmax.f32 %v373, 1e-05
        %v382 = vmax.f32 %v374, 1e-05
        %v383 = vmax.f32 %v375, 1e-05
        %v384 = vmax.f32 %v376, 1e-05
        %v385 = vrcp.pop %v377
        %v386 = vmul.f32 %v272, %v385
        %v387 = vrcp.pop %v378
        %v388 = vmul.f32 %v273, %v387
        %v389 = vrcp.pop %v379
        %v390 = vmul.f32 %v274, %v389
        %v391 = vrcp.pop %v380
        %v392 = vmul.f32 %v275, %v391
        %v393 = vrcp.pop %v381
        %v394 = vmul.f32 %v276, %v393
        %v395 = vrcp.pop %v382
        %v396 = vmul.f32 %v277, %v395
        %v397 = vrcp.pop %v383
        %v398 = vmul.f32 %v278, %v397
        %v399 = vrcp.pop %v384
        %v400 = vmul.f32 %v279, %v399
        %v401 = vpack.c.bf16 %v388, %v386
        %v402 = vpack.c.bf16 %v392, %v390
        %v403 = vpack.c.bf16 %v396, %v394
        %v404 = vpack.c.bf16 %v400, %v398
        %v405 = vld [vmem:[%s1] sm:$0xff]
        %v406 = vld [vmem:[%s1 + $0x8] sm:$0xff]
        %v407 = vld [vmem:[%s1 + $0x10] sm:$0xff]
        %v408 = vld [vmem:[%s1 + $0x18] sm:$0xff]
        %v409 = vld [vmem:[%s2] sm:$0x3]
        %v411 = vlaneseq
        %v412 = vshrl.u32 %v411, 7
        %v413 = vsub.s32 0, %v412
        %v414 = vrot.slane %v409, %v413
        %v415 = vlaneseq
        %v416 = vshrl.u32 %v415, 7
        %v417 = vsub.s32 1, %v416
        %v418 = vrot.slane %v409, %v417
        %v425 = vunpack.c.l.b16 %v405
        %v426 = vunpack.c.h.b16 %v405
        %v427 = vunpack.c.l.b16 %v406
        %v428 = vunpack.c.h.b16 %v406
        %v429 = vunpack.c.l.b16 %v407
        %v430 = vunpack.c.h.b16 %v407
        %v431 = vunpack.c.l.b16 %v408
        %v432 = vunpack.c.h.b16 %v408
        %v433 = vpack.c.b16 %v427, %v425
        %v434 = vpack.c.b16 %v428, %v426
        %v435 = vpack.c.b16 %v431, %v429
        %v436 = vpack.c.b16 %v432, %v430
        %v442 = vsel %vm288, %v401, 0
        %v445 = vsel %vm288, %v402, 0
        %v448 = vsel %vm288, %v403, 0
        %v451 = vsel %vm288, %v404, 0
        %453 = vmatprep.subr.bf16.mxu0 0
        %454 = vmatpush1.bf16.msra.mxu0 0
        %455 = vmatprep.subr.bf16.mxu0 0
        %456 = vmatpush1.bf16.msra.mxu0 0
        %457 = vmatprep.subr.bf16.mxu0 0
        %458 = vmatpush1.bf16.msra.mxu0 0
        %459 = vmatprep.subr.bf16.mxu0 0
        %460 = vmatpush1.bf16.msra.mxu0 0
        %461 = vmatprep.subr.bf16.mxu0 0
        %462 = vmatpush1.bf16.msra.mxu0 0
        %463 = vmatprep.subr.bf16.mxu0 0
        %464 = vmatpush1.bf16.msra.mxu0 0
        %465 = vmatprep.subr.bf16.mxu0 %v436
        %466 = vmatpush1.bf16.msra.mxu0 %v435
        %467 = vmatprep.subr.bf16.mxu0 %v434
        %468 = vmatpush1.bf16.msra.mxu0 %v433
        %469 = vmatprep.subr.bf16.mxu0 0
        %470 = vmatpush2.bf16.msra.mxu0 0
        %471 = vmatprep.subr.bf16.mxu0 0
        %472 = vmatpush2.bf16.msra.mxu0 0
        %473 = vmatprep.subr.bf16.mxu0 0
        %474 = vmatpush2.bf16.msra.mxu0 0
        %475 = vmatprep.subr.bf16.mxu0 0
        %476 = vmatpush2.bf16.msra.mxu0 0
        %477 = vmatprep.subr.bf16.mxu0 0
        %478 = vmatpush2.bf16.msra.mxu0 0
        %479 = vmatprep.subr.bf16.mxu0 0
        %480 = vmatpush2.bf16.msra.mxu0 0
        %481 = vmatprep.subr.bf16.mxu0 0
        %482 = vmatpush2.bf16.msra.mxu0 0
        %483 = vmatprep.subr.bf16.mxu0 0
        %484 = vmatpush2.bf16.msra.mxu0 0
        %485 = vmatprep.mubr.bf16.mxu0 0
        %486 = vmatmul.mubr.bf16.gmra.mxu0 %v442
        %v487 = vpop.f32.mrf.mxu0
        %v488 = vadd.f32 %v414, %v487
        %v489 = vpop.f32.mrf.mxu0
        %v490 = vadd.f32 %v418, %v489
        %v491 = vpop.f32.mrf.mxu0
        %v492 = vadd.f32 %v414, %v491
        %v493 = vpop.f32.mrf.mxu0
        %v494 = vadd.f32 %v418, %v493
        %495 = vmatprep.mubr.bf16.mxu0 0
        %496 = vmatmul.mubr.bf16.gmra.mxu0 %v445
        %v497 = vpop.f32.mrf.mxu0
        %v498 = vadd.f32 %v414, %v497
        %v499 = vpop.f32.mrf.mxu0
        %v500 = vadd.f32 %v418, %v499
        %v501 = vpop.f32.mrf.mxu0
        %v502 = vadd.f32 %v414, %v501
        %v503 = vpop.f32.mrf.mxu0
        %v504 = vadd.f32 %v418, %v503
        %505 = vmatprep.mubr.bf16.mxu0 0
        %506 = vmatmul.mubr.bf16.gmra.mxu0 %v448
        %v507 = vpop.f32.mrf.mxu0
        %v508 = vadd.f32 %v414, %v507
        %v509 = vpop.f32.mrf.mxu0
        %v510 = vadd.f32 %v418, %v509
        %v511 = vpop.f32.mrf.mxu0
        %v512 = vadd.f32 %v414, %v511
        %v513 = vpop.f32.mrf.mxu0
        %v514 = vadd.f32 %v418, %v513
        %515 = vmatprep.mubr.bf16.mxu0 0
        %516 = vmatmul.mubr.bf16.gmra.mxu0 %v451
        %v517 = vpop.f32.mrf.mxu0
        %v518 = vadd.f32 %v414, %v517
        %v519 = vpop.f32.mrf.mxu0
        %v520 = vadd.f32 %v418, %v519
        %v521 = vpop.f32.mrf.mxu0
        %v522 = vadd.f32 %v414, %v521
        %v523 = vpop.f32.mrf.mxu0
        %v524 = vadd.f32 %v418, %v523
        %525 = vdwg.mxu0
        %v526 = vsub.f32 0.0, %v488
        %v527 = vsub.f32 0.0, %v490
        %v528 = vsub.f32 0.0, %v492
        %v529 = vsub.f32 0.0, %v494
        %v530 = vsub.f32 0.0, %v498
        %v531 = vsub.f32 0.0, %v500
        %v532 = vsub.f32 0.0, %v502
        %v533 = vsub.f32 0.0, %v504
        %v534 = vsub.f32 0.0, %v508
        %v535 = vsub.f32 0.0, %v510
        %v536 = vsub.f32 0.0, %v512
        %v537 = vsub.f32 0.0, %v514
        %v538 = vsub.f32 0.0, %v518
        %v539 = vsub.f32 0.0, %v520
        %v540 = vsub.f32 0.0, %v522
        %v541 = vsub.f32 0.0, %v524
        %v542 = vmul.f32 %v526, 1.442695
        %v543 = vpow.pop %v542
        %v544 = vmul.f32 %v527, 1.442695
        %v545 = vpow.pop %v544
        %v546 = vmul.f32 %v528, 1.442695
        %v547 = vpow.pop %v546
        %v548 = vmul.f32 %v529, 1.442695
        %v549 = vpow.pop %v548
        %v550 = vmul.f32 %v530, 1.442695
        %v551 = vpow.pop %v550
        %v552 = vmul.f32 %v531, 1.442695
        %v553 = vpow.pop %v552
        %v554 = vmul.f32 %v532, 1.442695
        %v555 = vpow.pop %v554
        %v556 = vmul.f32 %v533, 1.442695
        %v557 = vpow.pop %v556
        %v558 = vmul.f32 %v534, 1.442695
        %v559 = vpow.pop %v558
        %v560 = vmul.f32 %v535, 1.442695
        %v561 = vpow.pop %v560
        %v562 = vmul.f32 %v536, 1.442695
        %v563 = vpow.pop %v562
        %v564 = vmul.f32 %v537, 1.442695
        %v565 = vpow.pop %v564
        %v566 = vmul.f32 %v538, 1.442695
        %v567 = vpow.pop %v566
        %v568 = vmul.f32 %v539, 1.442695
        %v569 = vpow.pop %v568
        %v570 = vmul.f32 %v540, 1.442695
        %v571 = vpow.pop %v570
        %v572 = vmul.f32 %v541, 1.442695
        %v573 = vpow.pop %v572
        %v574 = vadd.f32 %v543, 1.0
        %v575 = vadd.f32 %v545, 1.0
        %v576 = vadd.f32 %v547, 1.0
        %v577 = vadd.f32 %v549, 1.0
        %v578 = vadd.f32 %v551, 1.0
        %v579 = vadd.f32 %v553, 1.0
        %v580 = vadd.f32 %v555, 1.0
        %v581 = vadd.f32 %v557, 1.0
        %v582 = vadd.f32 %v559, 1.0
        %v583 = vadd.f32 %v561, 1.0
        %v584 = vadd.f32 %v563, 1.0
        %v585 = vadd.f32 %v565, 1.0
        %v586 = vadd.f32 %v567, 1.0
        %v587 = vadd.f32 %v569, 1.0
        %v588 = vadd.f32 %v571, 1.0
        %v589 = vadd.f32 %v573, 1.0
        %v590 = vrcp.pop %v574
        %v591 = vrcp.pop %v575
        %v592 = vrcp.pop %v576
        %v593 = vrcp.pop %v577
        %v594 = vrcp.pop %v578
        %v595 = vrcp.pop %v579
        %v596 = vrcp.pop %v580
        %v597 = vrcp.pop %v581
        %v598 = vrcp.pop %v582
        %v599 = vrcp.pop %v583
        %v600 = vrcp.pop %v584
        %v601 = vrcp.pop %v585
        %v602 = vrcp.pop %v586
        %v603 = vrcp.pop %v587
        %v604 = vrcp.pop %v588
        %v605 = vrcp.pop %v589
        %v606 = vmul.f32 %v488, %v590
        %v607 = vmul.f32 %v490, %v591
        %v608 = vmul.f32 %v492, %v592
        %v609 = vmul.f32 %v494, %v593
        %v610 = vmul.f32 %v498, %v594
        %v611 = vmul.f32 %v500, %v595
        %v612 = vmul.f32 %v502, %v596
        %v613 = vmul.f32 %v504, %v597
        %v614 = vmul.f32 %v508, %v598
        %v615 = vmul.f32 %v510, %v599
        %v616 = vmul.f32 %v512, %v600
        %v617 = vmul.f32 %v514, %v601
        %v618 = vmul.f32 %v518, %v602
        %v619 = vmul.f32 %v520, %v603
        %v620 = vmul.f32 %v522, %v604
        %v621 = vmul.f32 %v524, %v605
        %s622 = smul.u32 %s20, 64
        %v623 = vlaneseq
        %v624 = vshrl.u32 %v623, 7
        %v625 = vadd.s32 %v624, 8
        %v626 = vadd.s32 %v624, 16
        %v627 = vadd.s32 %v624, 24
        %v628 = vadd.s32 %v624, 32
        %v629 = vadd.s32 %v624, 40
        %v630 = vadd.s32 %v624, 48
        %v631 = vadd.s32 %v624, 56
        %v632 = vstv %s622
        %v633 = vadd.s32 %v632, %v624
        %v634 = vadd.s32 %v632, %v625
        %v635 = vadd.s32 %v632, %v626
        %v636 = vadd.s32 %v632, %v627
        %v637 = vadd.s32 %v632, %v628
        %v638 = vadd.s32 %v632, %v629
        %v639 = vadd.s32 %v632, %v630
        %v640 = vadd.s32 %v632, %v631
        %vm641 = vcmp.lt.s32.totalorder %v633, 96
        %vm642 = vcmp.lt.s32.totalorder %v634, 96
        %vm643 = vcmp.lt.s32.totalorder %v635, 96
        %vm644 = vcmp.lt.s32.totalorder %v636, 96
        %vm645 = vcmp.lt.s32.totalorder %v637, 96
        %vm646 = vcmp.lt.s32.totalorder %v638, 96
        %vm647 = vcmp.lt.s32.totalorder %v639, 96
        %vm648 = vcmp.lt.s32.totalorder %v640, 96
        %p649 = scmp.lt.s32.totalorder %s20, 2
        %s650 = scalar_select %p649, 1, 0
        %v651 = vstv %s650
        %vm652 = vcmp.eq.s32.totalorder %v651, 1
        %vm653 = vmand %vm641, %vm652
        %vm654 = vmand %vm642, %vm652
        %vm655 = vmand %vm643, %vm652
        %vm656 = vmand %vm644, %vm652
        %vm657 = vmand %vm645, %vm652
        %vm658 = vmand %vm646, %vm652
        %vm659 = vmand %vm647, %vm652
        %vm660 = vmand %vm648, %vm652
        %v661 = vsel %vm653, 1, 0
        %v662 = vsel %vm654, 1, 0
        %v663 = vsel %vm655, 1, 0
        %v664 = vsel %vm656, 1, 0
        %v665 = vsel %vm657, 1, 0
        %v666 = vsel %vm658, 1, 0
        %v667 = vsel %vm659, 1, 0
        %v668 = vsel %vm660, 1, 0
        %vm669 = vcmp.eq.s32.totalorder %v661, 1
        %vm670 = vcmp.eq.s32.totalorder %v662, 1
        %vm671 = vcmp.eq.s32.totalorder %v663, 1
        %vm672 = vcmp.eq.s32.totalorder %v664, 1
        %vm673 = vcmp.eq.s32.totalorder %v665, 1
        %vm674 = vcmp.eq.s32.totalorder %v666, 1
        %vm675 = vcmp.eq.s32.totalorder %v667, 1
        %vm676 = vcmp.eq.s32.totalorder %v668, 1
        %v677 = vsel %vm669, %v606, 0.0
        %v678 = vsel %vm669, %v607, 0.0
        %v679 = vsel %vm670, %v608, 0.0
        %v680 = vsel %vm670, %v609, 0.0
        %v681 = vsel %vm671, %v610, 0.0
        %v682 = vsel %vm671, %v611, 0.0
        %v683 = vsel %vm672, %v612, 0.0
        %v684 = vsel %vm672, %v613, 0.0
        %v685 = vsel %vm673, %v614, 0.0
        %v686 = vsel %vm673, %v615, 0.0
        %v687 = vsel %vm674, %v616, 0.0
        %v688 = vsel %vm674, %v617, 0.0
        %v689 = vsel %vm675, %v618, 0.0
        %v690 = vsel %vm675, %v619, 0.0
        %v691 = vsel %vm676, %v620, 0.0
        %v692 = vsel %vm676, %v621, 0.0
        %p693 = scmp.eq.s32.totalorder %s20, 0
        // Predicated region
        $region37: #{mossformer_module_forward.8} parent=35 // pred_check
          %p694 = pneg %p693
        $region38: #{mossformer_module_forward.8} parent=35 // pred_check_branch
          %696 = sbr.rel (%p694) target = $region40
        $region39: #{mossformer_module_forward.8} parent=35 // pred_region
          %697 = vst [vmem:[#allocation2] sm:$0xff] 0.0
          %vm698 = vcmask 523264
          %699 = vst.msk [vmem:[#allocation2 + $0x8] sm:$0xff] %vm698, 0.0
          %700 = vst [vmem:[#allocation2 + $0x10] sm:$0xff] 0.0
          %701 = vst.msk [vmem:[#allocation2 + $0x18] sm:$0xff] %vm698, 0.0
          %702 = vst [vmem:[#allocation2 + $0x20] sm:$0xff] 0.0
          %703 = vst.msk [vmem:[#allocation2 + $0x28] sm:$0xff] %vm698, 0.0
          %704 = vst [vmem:[#allocation2 + $0x30] sm:$0xff] 0.0
          %705 = vst.msk [vmem:[#allocation2 + $0x38] sm:$0xff] %vm698, 0.0
          %706 = vst [vmem:[#allocation2 + $0x40] sm:$0xff] 0.0
          %707 = vst.msk [vmem:[#allocation2 + $0x48] sm:$0xff] %vm698, 0.0
          %708 = vst [vmem:[#allocation2 + $0x50] sm:$0xff] 0.0
          %709 = vst.msk [vmem:[#allocation2 + $0x58] sm:$0xff] %vm698, 0.0
          %710 = vst [vmem:[#allocation2 + $0x60] sm:$0xff] 0.0
          %711 = vst.msk [vmem:[#allocation2 + $0x68] sm:$0xff] %vm698, 0.0
          %712 = vst [vmem:[#allocation2 + $0x70] sm:$0xff] 0.0
          %713 = vst.msk [vmem:[#allocation2 + $0x78] sm:$0xff] %vm698, 0.0
          %714 = vst [vmem:[#allocation2 + $0x80] sm:$0xff] 0.0
          %715 = vst.msk [vmem:[#allocation2 + $0x88] sm:$0xff] %vm698, 0.0
          %716 = vst [vmem:[#allocation2 + $0x90] sm:$0xff] 0.0
          %717 = vst.msk [vmem:[#allocation2 + $0x98] sm:$0xff] %vm698, 0.0
        $region40: #{mossformer_module_forward.8} parent=35 // pred_fallthru
          _
        %718 = vst [vmem:[#allocation2 + $0x90] sm:$0xff] %v677
        %vm719 = vcmask 523264
        %720 = vst.msk [vmem:[#allocation2 + $0x98] sm:$0xff] %vm719, %v678
        %p721 = scmp.gt.s32.totalorder %s20, 0
        // Predicated region
        $region41: #{mossformer_module_forward.8} parent=35 // pred_check
          %p722 = pneg %p721
        $region42: #{mossformer_module_forward.8} parent=35 // pred_check_branch
          %724 = sbr.rel (%p722) target = $region44
        $region43: #{mossformer_module_forward.8} parent=35 // pred_region
          %v725 = vld [vmem:[#allocation2] sm:$0xff]
          %v726 = vld [vmem:[#allocation2 + $0x8] sm:$0xff]
          %v727 = vld [vmem:[#allocation2 + $0x10] sm:$0xff]
          %v728 = vld [vmem:[#allocation2 + $0x18] sm:$0xff]
          %v729 = vld [vmem:[#allocation2 + $0x20] sm:$0xff]
          %v730 = vld [vmem:[#allocation2 + $0x28] sm:$0xff]
          %v731 = vld [vmem:[#allocation2 + $0x30] sm:$0xff]
          %v732 = vld [vmem:[#allocation2 + $0x38] sm:$0xff]
          %v733 = vld [vmem:[#allocation2 + $0x40] sm:$0xff]
          %v734 = vld [vmem:[#allocation2 + $0x48] sm:$0xff]
          %v735 = vld [vmem:[#allocation2 + $0x50] sm:$0xff]
          %v736 = vld [vmem:[#allocation2 + $0x58] sm:$0xff]
          %v737 = vld [vmem:[#allocation2 + $0x60] sm:$0xff]
          %v738 = vld [vmem:[#allocation2 + $0x68] sm:$0xff]
          %v739 = vld [vmem:[#allocation2 + $0x70] sm:$0xff]
          %v740 = vld [vmem:[#allocation2 + $0x78] sm:$0xff]
          %v741 = vld [vmem:[%s3] ss:$8 sm:$0x3]
          %v743 = vlaneseq
          %v744 = vshrl.u32 %v743, 7
          %v745 = vsub.s32 0, %v744
          %v746 = vrot.slane %v741, %v745
          %v747 = vlaneseq
          %v748 = vshrl.u32 %v747, 7
          %v749 = vsub.s32 1, %v748
          %v750 = vrot.slane %v741, %v749
          %v753 = vmul.f32 %v725, %v746
          %v754 = vmul.f32 %v726, %v750
          %v755 = vmul.f32 %v727, %v746
          %v756 = vmul.f32 %v728, %v750
          %v757 = vmul.f32 %v729, %v746
          %v758 = vmul.f32 %v730, %v750
          %v759 = vmul.f32 %v731, %v746
          %v760 = vmul.f32 %v732, %v750
          %v761 = vmul.f32 %v733, %v746
          %v762 = vmul.f32 %v734, %v750
          %v763 = vmul.f32 %v735, %v746
          %v764 = vmul.f32 %v736, %v750
          %v765 = vmul.f32 %v737, %v746
          %v766 = vmul.f32 %v738, %v750
          %v767 = vmul.f32 %v739, %v746
          %v768 = vmul.f32 %v740, %v750
          %v769 = vadd.f32 %v753, 0.0
          %v770 = vadd.f32 %v754, 0.0
          %v771 = vadd.f32 %v755, 0.0
          %v772 = vadd.f32 %v756, 0.0
          %v773 = vadd.f32 %v757, 0.0
          %v774 = vadd.f32 %v758, 0.0
          %v775 = vadd.f32 %v759, 0.0
          %v776 = vadd.f32 %v760, 0.0
          %v777 = vadd.f32 %v761, 0.0
          %v778 = vadd.f32 %v762, 0.0
          %v779 = vadd.f32 %v763, 0.0
          %v780 = vadd.f32 %v764, 0.0
          %v781 = vadd.f32 %v765, 0.0
          %v782 = vadd.f32 %v766, 0.0
          %v783 = vadd.f32 %v767, 0.0
          %v784 = vadd.f32 %v768, 0.0
          %v785 = vld [vmem:[#allocation2] sm:$0xfe]
          %v786 = vld [vmem:[#allocation2 + $0x8] sm:$0xfe]
          %v787 = vld [vmem:[#allocation2 + $0x80] sm:$0x1]
          %v788 = vld [vmem:[#allocation2 + $0x88] sm:$0x1]
          %s789 = scalar_lea.vmem %s3, 1
          %v790 = vld [vmem:[%s789] ss:$8 sm:$0x3]
          %v792 = vlaneseq
          %v793 = vshrl.u32 %v792, 7
          %v794 = vsub.s32 0, %v793
          %v795 = vrot.slane %v790, %v794
          %v796 = vlaneseq
          %v797 = vshrl.u32 %v796, 7
          %v798 = vsub.s32 1, %v797
          %v799 = vrot.slane %v790, %v798
          %v802 = vmul.f32 %v785, %v795
          %v803 = vmul.f32 %v786, %v799
          %v804 = vmul.f32 %v727, %v795
          %v805 = vmul.f32 %v728, %v799
          %v806 = vmul.f32 %v729, %v795
          %v807 = vmul.f32 %v730, %v799
          %v808 = vmul.f32 %v731, %v795
          %v809 = vmul.f32 %v732, %v799
          %v810 = vmul.f32 %v733, %v795
          %v811 = vmul.f32 %v734, %v799
          %v812 = vmul.f32 %v735, %v795
          %v813 = vmul.f32 %v736, %v799
          %v814 = vmul.f32 %v737, %v795
          %v815 = vmul.f32 %v738, %v799
          %v816 = vmul.f32 %v739, %v795
          %v817 = vmul.f32 %v740, %v799
          %v818 = vmul.f32 %v787, %v795
          %v819 = vmul.f32 %v788, %v799
          %vm838 = vcmask 1046528
          %v839 = vrot.slane %v802, 1
          %v840 = vrot.slane %v804, 1
          %v841 = vsel %vm838, %v839, %v840
          %v842 = vrot.slane %v803, 1
          %v843 = vrot.slane %v805, 1
          %v844 = vsel %vm838, %v842, %v843
          %v845 = vrot.slane %v806, 1
          %v846 = vsel %vm838, %v840, %v845
          %v847 = vrot.slane %v807, 1
          %v848 = vsel %vm838, %v843, %v847
          %v849 = vrot.slane %v808, 1
          %v850 = vsel %vm838, %v845, %v849
          %v851 = vrot.slane %v809, 1
          %v852 = vsel %vm838, %v847, %v851
          %v853 = vrot.slane %v810, 1
          %v854 = vsel %vm838, %v849, %v853
          %v855 = vrot.slane %v811, 1
          %v856 = vsel %vm838, %v851, %v855
          %v857 = vrot.slane %v812, 1
          %v858 = vsel %vm838, %v853, %v857
          %v859 = vrot.slane %v813, 1
          %v860 = vsel %vm838, %v855, %v859
          %v861 = vrot.slane %v814, 1
          %v862 = vsel %vm838, %v857, %v861
          %v863 = vrot.slane %v815, 1
          %v864 = vsel %vm838, %v859, %v863
          %v865 = vrot.slane %v816, 1
          %v866 = vsel %vm838, %v861, %v865
          %v867 = vrot.slane %v817, 1
          %v868 = vsel %vm838, %v863, %v867
          %v869 = vrot.slane %v818, 1
          %v870 = vsel %vm838, %v865, %v869
          %v871 = vrot.slane %v819, 1
          %v872 = vsel %vm838, %v867, %v871
          %v889 = vadd.f32 %v769, %v841
          %v890 = vadd.f32 %v770, %v844
          %v891 = vadd.f32 %v771, %v846
          %v892 = vadd.f32 %v772, %v848
          %v893 = vadd.f32 %v773, %v850
          %v894 = vadd.f32 %v774, %v852
          %v895 = vadd.f32 %v775, %v854
          %v896 = vadd.f32 %v776, %v856
          %v897 = vadd.f32 %v777, %v858
          %v898 = vadd.f32 %v778, %v860
          %v899 = vadd.f32 %v779, %v862
          %v900 = vadd.f32 %v780, %v864
          %v901 = vadd.f32 %v781, %v866
          %v902 = vadd.f32 %v782, %v868
          %v903 = vadd.f32 %v783, %v870
          %v904 = vadd.f32 %v784, %v872
          %v905 = vld [vmem:[#allocation2] sm:$0xfc]
          %v906 = vld [vmem:[#allocation2 + $0x8] sm:$0xfc]
          %v907 = vld [vmem:[#allocation2 + $0x80] sm:$0x3]
          %v908 = vld [vmem:[#allocation2 + $0x88] sm:$0x3]
          %s909 = scalar_lea.vmem %s3, 2
          %v910 = vld [vmem:[%s909] ss:$8 sm:$0x3]
          %v912 = vlaneseq
          %v913 = vshrl.u32 %v912, 7
          %v914 = vsub.s32 0, %v913
          %v915 = vrot.slane %v910, %v914
          %v916 = vlaneseq
          %v917 = vshrl.u32 %v916, 7
          %v918 = vsub.s32 1, %v917
          %v919 = vrot.slane %v910, %v918
          %v922 = vmul.f32 %v905, %v915
          %v923 = vmul.f32 %v906, %v919
          %v924 = vmul.f32 %v727, %v915
          %v925 = vmul.f32 %v728, %v919
          %v926 = vmul.f32 %v729, %v915
          %v927 = vmul.f32 %v730, %v919
          %v928 = vmul.f32 %v731, %v915
          %v929 = vmul.f32 %v732, %v919
          %v930 = vmul.f32 %v733, %v915
          %v931 = vmul.f32 %v734, %v919
          %v932 = vmul.f32 %v735, %v915
          %v933 = vmul.f32 %v736, %v919
          %v934 = vmul.f32 %v737, %v915
          %v935 = vmul.f32 %v738, %v919
          %v936 = vmul.f32 %v739, %v915
          %v937 = vmul.f32 %v740, %v919
          %v938 = vmul.f32 %v907, %v915
          %v939 = vmul.f32 %v908, %v919
          %vm958 = vcmask 1045504
          %v959 = vrot.slane %v922, 2
          %v960 = vrot.slane %v924, 2
          %v961 = vsel %vm958, %v959, %v960
          %v962 = vrot.slane %v923, 2
          %v963 = vrot.slane %v925, 2
          %v964 = vsel %vm958, %v962, %v963
          %v965 = vrot.slane %v926, 2
          %v966 = vsel %vm958, %v960, %v965
          %v967 = vrot.slane %v927, 2
          %v968 = vsel %vm958, %v963, %v967
          %v969 = vrot.slane %v928, 2
          %v970 = vsel %vm958, %v965, %v969
          %v971 = vrot.slane %v929, 2
          %v972 = vsel %vm958, %v967, %v971
          %v973 = vrot.slane %v930, 2
          %v974 = vsel %vm958, %v969, %v973
          %v975 = vrot.slane %v931, 2
          %v976 = vsel %vm958, %v971, %v975
          %v977 = vrot.slane %v932, 2
          %v978 = vsel %vm958, %v973, %v977
          %v979 = vrot.slane %v933, 2
          %v980 = vsel %vm958, %v975, %v979
          %v981 = vrot.slane %v934, 2
          %v982 = vsel %vm958, %v977, %v981
          %v983 = vrot.slane %v935, 2
          %v984 = vsel %vm958, %v979, %v983
          %v985 = vrot.slane %v936, 2
          %v986 = vsel %vm958, %v981, %v985
          %v987 = vrot.slane %v937, 2
          %v988 = vsel %vm958, %v983, %v987
          %v989 = vrot.slane %v938, 2
          %v990 = vsel %vm958, %v985, %v989
          %v991 = vrot.slane %v939, 2
          %v992 = vsel %vm958, %v987, %v991
          %v1009 = vadd.f32 %v889, %v961
          %v1010 = vadd.f32 %v890, %v964
          %v1011 = vadd.f32 %v891, %v966
          %v1012 = vadd.f32 %v892, %v968
          %v1013 = vadd.f32 %v893, %v970
          %v1014 = vadd.f32 %v894, %v972
          %v1015 = vadd.f32 %v895, %v974
          %v1016 = vadd.f32 %v896, %v976
          %v1017 = vadd.f32 %v897, %v978
          %v1018 = vadd.f32 %v898, %v980
          %v1019 = vadd.f32 %v899, %v982
          %v1020 = vadd.f32 %v900, %v984
          %v1021 = vadd.f32 %v901, %v986
          %v1022 = vadd.f32 %v902, %v988
          %v1023 = vadd.f32 %v903, %v990
          %v1024 = vadd.f32 %v904, %v992
          %v1025 = vld [vmem:[#allocation2] sm:$0xf8]
          %v1026 = vld [vmem:[#allocation2 + $0x8] sm:$0xf8]
          %v1027 = vld [vmem:[#allocation2 + $0x80] sm:$0x7]
          %v1028 = vld [vmem:[#allocation2 + $0x88] sm:$0x7]
          %s1029 = scalar_lea.vmem %s3, 3
          %v1030 = vld [vmem:[%s1029] ss:$8 sm:$0x3]
          %v1032 = vlaneseq
          %v1033 = vshrl.u32 %v1032, 7
          %v1034 = vsub.s32 0, %v1033
          %v1035 = vrot.slane %v1030, %v1034
          %v1036 = vlaneseq
          %v1037 = vshrl.u32 %v1036, 7
          %v1038 = vsub.s32 1, %v1037
          %v1039 = vrot.slane %v1030, %v1038
          %v1042 = vmul.f32 %v1025, %v1035
          %v1043 = vmul.f32 %v1026, %v1039
          %v1044 = vmul.f32 %v727, %v1035
          %v1045 = vmul.f32 %v728, %v1039
          %v1046 = vmul.f32 %v729, %v1035
          %v1047 = vmul.f32 %v730, %v1039
          %v1048 = vmul.f32 %v731, %v1035
          %v1049 = vmul.f32 %v732, %v1039
          %v1050 = vmul.f32 %v733, %v1035
          %v1051 = vmul.f32 %v734, %v1039
          %v1052 = vmul.f32 %v735, %v1035
          %v1053 = vmul.f32 %v736, %v1039
          %v1054 = vmul.f32 %v737, %v1035
          %v1055 = vmul.f32 %v738, %v1039
          %v1056 = vmul.f32 %v739, %v1035
          %v1057 = vmul.f32 %v740, %v1039
          %v1058 = vmul.f32 %v1027, %v1035
          %v1059 = vmul.f32 %v1028, %v1039
          %vm1078 = vcmask 1044480
          %v1079 = vrot.slane %v1042, 3
          %v1080 = vrot.slane %v1044, 3
          %v1081 = vsel %vm1078, %v1079, %v1080
          %v1082 = vrot.slane %v1043, 3
          %v1083 = vrot.slane %v1045, 3
          %v1084 = vsel %vm1078, %v1082, %v1083
          %v1085 = vrot.slane %v1046, 3
          %v1086 = vsel %vm1078, %v1080, %v1085
          %v1087 = vrot.slane %v1047, 3
          %v1088 = vsel %vm1078, %v1083, %v1087
          %v1089 = vrot.slane %v1048, 3
          %v1090 = vsel %vm1078, %v1085, %v1089
          %v1091 = vrot.slane %v1049, 3
          %v1092 = vsel %vm1078, %v1087, %v1091
          %v1093 = vrot.slane %v1050, 3
          %v1094 = vsel %vm1078, %v1089, %v1093
          %v1095 = vrot.slane %v1051, 3
          %v1096 = vsel %vm1078, %v1091, %v1095
          %v1097 = vrot.slane %v1052, 3
          %v1098 = vsel %vm1078, %v1093, %v1097
          %v1099 = vrot.slane %v1053, 3
          %v1100 = vsel %vm1078, %v1095, %v1099
          %v1101 = vrot.slane %v1054, 3
          %v1102 = vsel %vm1078, %v1097, %v1101
          %v1103 = vrot.slane %v1055, 3
          %v1104 = vsel %vm1078, %v1099, %v1103
          %v1105 = vrot.slane %v1056, 3
          %v1106 = vsel %vm1078, %v1101, %v1105
          %v1107 = vrot.slane %v1057, 3
          %v1108 = vsel %vm1078, %v1103, %v1107
          %v1109 = vrot.slane %v1058, 3
          %v1110 = vsel %vm1078, %v1105, %v1109
          %v1111 = vrot.slane %v1059, 3
          %v1112 = vsel %vm1078, %v1107, %v1111
          %v1129 = vadd.f32 %v1009, %v1081
          %v1130 = vadd.f32 %v1010, %v1084
          %v1131 = vadd.f32 %v1011, %v1086
          %v1132 = vadd.f32 %v1012, %v1088
          %v1133 = vadd.f32 %v1013, %v1090
          %v1134 = vadd.f32 %v1014, %v1092
          %v1135 = vadd.f32 %v1015, %v1094
          %v1136 = vadd.f32 %v1016, %v1096
          %v1137 = vadd.f32 %v1017, %v1098
          %v1138 = vadd.f32 %v1018, %v1100
          %v1139 = vadd.f32 %v1019, %v1102
          %v1140 = vadd.f32 %v1020, %v1104
          %v1141 = vadd.f32 %v1021, %v1106
          %v1142 = vadd.f32 %v1022, %v1108
          %v1143 = vadd.f32 %v1023, %v1110
          %v1144 = vadd.f32 %v1024, %v1112
          %v1145 = vld [vmem:[#allocation2] sm:$0xf0]
          %v1146 = vld [vmem:[#allocation2 + $0x8] sm:$0xf0]
          %v1147 = vld [vmem:[#allocation2 + $0x80] sm:$0xf]
          %v1148 = vld [vmem:[#allocation2 + $0x88] sm:$0xf]
          %s1149 = scalar_lea.vmem %s3, 4
          %v1150 = vld [vmem:[%s1149] ss:$8 sm:$0x3]
          %v1152 = vlaneseq
          %v1153 = vshrl.u32 %v1152, 7
          %v1154 = vsub.s32 0, %v1153
          %v1155 = vrot.slane %v1150, %v1154
          %v1156 = vlaneseq
          %v1157 = vshrl.u32 %v1156, 7
          %v1158 = vsub.s32 1, %v1157
          %v1159 = vrot.slane %v1150, %v1158
          %v1162 = vmul.f32 %v1145, %v1155
          %v1163 = vmul.f32 %v1146, %v1159
          %v1164 = vmul.f32 %v727, %v1155
          %v1165 = vmul.f32 %v728, %v1159
          %v1166 = vmul.f32 %v729, %v1155
          %v1167 = vmul.f32 %v730, %v1159
          %v1168 = vmul.f32 %v731, %v1155
          %v1169 = vmul.f32 %v732, %v1159
          %v1170 = vmul.f32 %v733, %v1155
          %v1171 = vmul.f32 %v734, %v1159
          %v1172 = vmul.f32 %v735, %v1155
          %v1173 = vmul.f32 %v736, %v1159
          %v1174 = vmul.f32 %v737, %v1155
          %v1175 = vmul.f32 %v738, %v1159
          %v1176 = vmul.f32 %v739, %v1155
          %v1177 = vmul.f32 %v740, %v1159
          %v1178 = vmul.f32 %v1147, %v1155
          %v1179 = vmul.f32 %v1148, %v1159
          %vm1198 = vcmask 1043456
          %v1199 = vrot.slane %v1162, 4
          %v1200 = vrot.slane %v1164, 4
          %v1201 = vsel %vm1198, %v1199, %v1200
          %v1202 = vrot.slane %v1163, 4
          %v1203 = vrot.slane %v1165, 4
          %v1204 = vsel %vm1198, %v1202, %v1203
          %v1205 = vrot.slane %v1166, 4
          %v1206 = vsel %vm1198, %v1200, %v1205
          %v1207 = vrot.slane %v1167, 4
          %v1208 = vsel %vm1198, %v1203, %v1207
          %v1209 = vrot.slane %v1168, 4
          %v1210 = vsel %vm1198, %v1205, %v1209
          %v1211 = vrot.slane %v1169, 4
          %v1212 = vsel %vm1198, %v1207, %v1211
          %v1213 = vrot.slane %v1170, 4
          %v1214 = vsel %vm1198, %v1209, %v1213
          %v1215 = vrot.slane %v1171, 4
          %v1216 = vsel %vm1198, %v1211, %v1215
          %v1217 = vrot.slane %v1172, 4
          %v1218 = vsel %vm1198, %v1213, %v1217
          %v1219 = vrot.slane %v1173, 4
          %v1220 = vsel %vm1198, %v1215, %v1219
          %v1221 = vrot.slane %v1174, 4
          %v1222 = vsel %vm1198, %v1217, %v1221
          %v1223 = vrot.slane %v1175, 4
          %v1224 = vsel %vm1198, %v1219, %v1223
          %v1225 = vrot.slane %v1176, 4
          %v1226 = vsel %vm1198, %v1221, %v1225
          %v1227 = vrot.slane %v1177, 4
          %v1228 = vsel %vm1198, %v1223, %v1227
          %v1229 = vrot.slane %v1178, 4
          %v1230 = vsel %vm1198, %v1225, %v1229
          %v1231 = vrot.slane %v1179, 4
          %v1232 = vsel %vm1198, %v1227, %v1231
          %v1249 = vadd.f32 %v1129, %v1201
          %v1250 = vadd.f32 %v1130, %v1204
          %v1251 = vadd.f32 %v1131, %v1206
          %v1252 = vadd.f32 %v1132, %v1208
          %v1253 = vadd.f32 %v1133, %v1210
          %v1254 = vadd.f32 %v1134, %v1212
          %v1255 = vadd.f32 %v1135, %v1214
          %v1256 = vadd.f32 %v1136, %v1216
          %v1257 = vadd.f32 %v1137, %v1218
          %v1258 = vadd.f32 %v1138, %v1220
          %v1259 = vadd.f32 %v1139, %v1222
          %v1260 = vadd.f32 %v1140, %v1224
          %v1261 = vadd.f32 %v1141, %v1226
          %v1262 = vadd.f32 %v1142, %v1228
          %v1263 = vadd.f32 %v1143, %v1230
          %v1264 = vadd.f32 %v1144, %v1232
          %v1265 = vld [vmem:[#allocation2] sm:$0xe0]
          %v1266 = vld [vmem:[#allocation2 + $0x8] sm:$0xe0]
          %v1267 = vld [vmem:[#allocation2 + $0x80] sm:$0x1f]
          %v1268 = vld [vmem:[#allocation2 + $0x88] sm:$0x1f]
          %s1269 = scalar_lea.vmem %s3, 5
          %v1270 = vld [vmem:[%s1269] ss:$8 sm:$0x3]
          %v1272 = vlaneseq
          %v1273 = vshrl.u32 %v1272, 7
          %v1274 = vsub.s32 0, %v1273
          %v1275 = vrot.slane %v1270, %v1274
          %v1276 = vlaneseq
          %v1277 = vshrl.u32 %v1276, 7
          %v1278 = vsub.s32 1, %v1277
          %v1279 = vrot.slane %v1270, %v1278
          %v1282 = vmul.f32 %v1265, %v1275
          %v1283 = vmul.f32 %v1266, %v1279
          %v1284 = vmul.f32 %v727, %v1275
          %v1285 = vmul.f32 %v728, %v1279
          %v1286 = vmul.f32 %v729, %v1275
          %v1287 = vmul.f32 %v730, %v1279
          %v1288 = vmul.f32 %v731, %v1275
          %v1289 = vmul.f32 %v732, %v1279
          %v1290 = vmul.f32 %v733, %v1275
          %v1291 = vmul.f32 %v734, %v1279
          %v1292 = vmul.f32 %v735, %v1275
          %v1293 = vmul.f32 %v736, %v1279
          %v1294 = vmul.f32 %v737, %v1275
          %v1295 = vmul.f32 %v738, %v1279
          %v1296 = vmul.f32 %v739, %v1275
          %v1297 = vmul.f32 %v740, %v1279
          %v1298 = vmul.f32 %v1267, %v1275
          %v1299 = vmul.f32 %v1268, %v1279
          %vm1318 = vcmask 1042432
          %v1319 = vrot.slane %v1282, 5
          %v1320 = vrot.slane %v1284, 5
          %v1321 = vsel %vm1318, %v1319, %v1320
          %v1322 = vrot.slane %v1283, 5
          %v1323 = vrot.slane %v1285, 5
          %v1324 = vsel %vm1318, %v1322, %v1323
          %v1325 = vrot.slane %v1286, 5
          %v1326 = vsel %vm1318, %v1320, %v1325
          %v1327 = vrot.slane %v1287, 5
          %v1328 = vsel %vm1318, %v1323, %v1327
          %v1329 = vrot.slane %v1288, 5
          %v1330 = vsel %vm1318, %v1325, %v1329
          %v1331 = vrot.slane %v1289, 5
          %v1332 = vsel %vm1318, %v1327, %v1331
          %v1333 = vrot.slane %v1290, 5
          %v1334 = vsel %vm1318, %v1329, %v1333
          %v1335 = vrot.slane %v1291, 5
          %v1336 = vsel %vm1318, %v1331, %v1335
          %v1337 = vrot.slane %v1292, 5
          %v1338 = vsel %vm1318, %v1333, %v1337
          %v1339 = vrot.slane %v1293, 5
          %v1340 = vsel %vm1318, %v1335, %v1339
          %v1341 = vrot.slane %v1294, 5
          %v1342 = vsel %vm1318, %v1337, %v1341
          %v1343 = vrot.slane %v1295, 5
          %v1344 = vsel %vm1318, %v1339, %v1343
          %v1345 = vrot.slane %v1296, 5
          %v1346 = vsel %vm1318, %v1341, %v1345
          %v1347 = vrot.slane %v1297, 5
          %v1348 = vsel %vm1318, %v1343, %v1347
          %v1349 = vrot.slane %v1298, 5
          %v1350 = vsel %vm1318, %v1345, %v1349
          %v1351 = vrot.slane %v1299, 5
          %v1352 = vsel %vm1318, %v1347, %v1351
          %v1369 = vadd.f32 %v1249, %v1321
          %v1370 = vadd.f32 %v1250, %v1324
          %v1371 = vadd.f32 %v1251, %v1326
          %v1372 = vadd.f32 %v1252, %v1328
          %v1373 = vadd.f32 %v1253, %v1330
          %v1374 = vadd.f32 %v1254, %v1332
          %v1375 = vadd.f32 %v1255, %v1334
          %v1376 = vadd.f32 %v1256, %v1336
          %v1377 = vadd.f32 %v1257, %v1338
          %v1378 = vadd.f32 %v1258, %v1340
          %v1379 = vadd.f32 %v1259, %v1342
          %v1380 = vadd.f32 %v1260, %v1344
          %v1381 = vadd.f32 %v1261, %v1346
          %v1382 = vadd.f32 %v1262, %v1348
          %v1383 = vadd.f32 %v1263, %v1350
          %v1384 = vadd.f32 %v1264, %v1352
          %v1385 = vld [vmem:[#allocation2] sm:$0xc0]
          %v1386 = vld [vmem:[#allocation2 + $0x8] sm:$0xc0]
          %v1387 = vld [vmem:[#allocation2 + $0x80] sm:$0x3f]
          %v1388 = vld [vmem:[#allocation2 + $0x88] sm:$0x3f]
          %s1389 = scalar_lea.vmem %s3, 6
          %v1390 = vld [vmem:[%s1389] ss:$8 sm:$0x3]
          %v1392 = vlaneseq
          %v1393 = vshrl.u32 %v1392, 7
          %v1394 = vsub.s32 0, %v1393
          %v1395 = vrot.slane %v1390, %v1394
          %v1396 = vlaneseq
          %v1397 = vshrl.u32 %v1396, 7
          %v1398 = vsub.s32 1, %v1397
          %v1399 = vrot.slane %v1390, %v1398
          %v1402 = vmul.f32 %v1385, %v1395
          %v1403 = vmul.f32 %v1386, %v1399
          %v1404 = vmul.f32 %v727, %v1395
          %v1405 = vmul.f32 %v728, %v1399
          %v1406 = vmul.f32 %v729, %v1395
          %v1407 = vmul.f32 %v730, %v1399
          %v1408 = vmul.f32 %v731, %v1395
          %v1409 = vmul.f32 %v732, %v1399
          %v1410 = vmul.f32 %v733, %v1395
          %v1411 = vmul.f32 %v734, %v1399
          %v1412 = vmul.f32 %v735, %v1395
          %v1413 = vmul.f32 %v736, %v1399
          %v1414 = vmul.f32 %v737, %v1395
          %v1415 = vmul.f32 %v738, %v1399
          %v1416 = vmul.f32 %v739, %v1395
          %v1417 = vmul.f32 %v740, %v1399
          %v1418 = vmul.f32 %v1387, %v1395
          %v1419 = vmul.f32 %v1388, %v1399
          %vm1438 = vcmask 1041408
          %v1439 = vrot.slane %v1402, 6
          %v1440 = vrot.slane %v1404, 6
          %v1441 = vsel %vm1438, %v1439, %v1440
          %v1442 = vrot.slane %v1403, 6
          %v1443 = vrot.slane %v1405, 6
          %v1444 = vsel %vm1438, %v1442, %v1443
          %v1445 = vrot.slane %v1406, 6
          %v1446 = vsel %vm1438, %v1440, %v1445
          %v1447 = vrot.slane %v1407, 6
          %v1448 = vsel %vm1438, %v1443, %v1447
          %v1449 = vrot.slane %v1408, 6
          %v1450 = vsel %vm1438, %v1445, %v1449
          %v1451 = vrot.slane %v1409, 6
          %v1452 = vsel %vm1438, %v1447, %v1451
          %v1453 = vrot.slane %v1410, 6
          %v1454 = vsel %vm1438, %v1449, %v1453
          %v1455 = vrot.slane %v1411, 6
          %v1456 = vsel %vm1438, %v1451, %v1455
          %v1457 = vrot.slane %v1412, 6
          %v1458 = vsel %vm1438, %v1453, %v1457
          %v1459 = vrot.slane %v1413, 6
          %v1460 = vsel %vm1438, %v1455, %v1459
          %v1461 = vrot.slane %v1414, 6
          %v1462 = vsel %vm1438, %v1457, %v1461
          %v1463 = vrot.slane %v1415, 6
          %v1464 = vsel %vm1438, %v1459, %v1463
          %v1465 = vrot.slane %v1416, 6
          %v1466 = vsel %vm1438, %v1461, %v1465
          %v1467 = vrot.slane %v1417, 6
          %v1468 = vsel %vm1438, %v1463, %v1467
          %v1469 = vrot.slane %v1418, 6
          %v1470 = vsel %vm1438, %v1465, %v1469
          %v1471 = vrot.slane %v1419, 6
          %v1472 = vsel %vm1438, %v1467, %v1471
          %v1489 = vadd.f32 %v1369, %v1441
          %v1490 = vadd.f32 %v1370, %v1444
          %v1491 = vadd.f32 %v1371, %v1446
          %v1492 = vadd.f32 %v1372, %v1448
          %v1493 = vadd.f32 %v1373, %v1450
          %v1494 = vadd.f32 %v1374, %v1452
          %v1495 = vadd.f32 %v1375, %v1454
          %v1496 = vadd.f32 %v1376, %v1456
          %v1497 = vadd.f32 %v1377, %v1458
          %v1498 = vadd.f32 %v1378, %v1460
          %v1499 = vadd.f32 %v1379, %v1462
          %v1500 = vadd.f32 %v1380, %v1464
          %v1501 = vadd.f32 %v1381, %v1466
          %v1502 = vadd.f32 %v1382, %v1468
          %v1503 = vadd.f32 %v1383, %v1470
          %v1504 = vadd.f32 %v1384, %v1472
          %v1505 = vld [vmem:[#allocation2] sm:$0x80]
          %v1506 = vld [vmem:[#allocation2 + $0x8] sm:$0x80]
          %v1507 = vld [vmem:[#allocation2 + $0x80] sm:$0x7f]
          %v1508 = vld [vmem:[#allocation2 + $0x88] sm:$0x7f]
          %s1509 = scalar_lea.vmem %s3, 7
          %v1510 = vld [vmem:[%s1509] ss:$8 sm:$0x3]
          %v1512 = vlaneseq
          %v1513 = vshrl.u32 %v1512, 7
          %v1514 = vsub.s32 0, %v1513
          %v1515 = vrot.slane %v1510, %v1514
          %v1516 = vlaneseq
          %v1517 = vshrl.u32 %v1516, 7
          %v1518 = vsub.s32 1, %v1517
          %v1519 = vrot.slane %v1510, %v1518
          %v1522 = vmul.f32 %v1505, %v1515
          %v1523 = vmul.f32 %v1506, %v1519
          %v1524 = vmul.f32 %v727, %v1515
          %v1525 = vmul.f32 %v728, %v1519
          %v1526 = vmul.f32 %v729, %v1515
          %v1527 = vmul.f32 %v730, %v1519
          %v1528 = vmul.f32 %v731, %v1515
          %v1529 = vmul.f32 %v732, %v1519
          %v1530 = vmul.f32 %v733, %v1515
          %v1531 = vmul.f32 %v734, %v1519
          %v1532 = vmul.f32 %v735, %v1515
          %v1533 = vmul.f32 %v736, %v1519
          %v1534 = vmul.f32 %v737, %v1515
          %v1535 = vmul.f32 %v738, %v1519
          %v1536 = vmul.f32 %v739, %v1515
          %v1537 = vmul.f32 %v740, %v1519
          %v1538 = vmul.f32 %v1507, %v1515
          %v1539 = vmul.f32 %v1508, %v1519
          %vm1558 = vcmask 1040384
          %v1559 = vrot.slane %v1522, 7
          %v1560 = vrot.slane %v1524, 7
          %v1561 = vsel %vm1558, %v1559, %v1560
          %v1562 = vrot.slane %v1523, 7
          %v1563 = vrot.slane %v1525, 7
          %v1564 = vsel %vm1558, %v1562, %v1563
          %v1565 = vrot.slane %v1526, 7
          %v1566 = vsel %vm1558, %v1560, %v1565
          %v1567 = vrot.slane %v1527, 7
          %v1568 = vsel %vm1558, %v1563, %v1567
          %v1569 = vrot.slane %v1528, 7
          %v1570 = vsel %vm1558, %v1565, %v1569
          %v1571 = vrot.slane %v1529, 7
          %v1572 = vsel %vm1558, %v1567, %v1571
          %v1573 = vrot.slane %v1530, 7
          %v1574 = vsel %vm1558, %v1569, %v1573
          %v1575 = vrot.slane %v1531, 7
          %v1576 = vsel %vm1558, %v1571, %v1575
          %v1577 = vrot.slane %v1532, 7
          %v1578 = vsel %vm1558, %v1573, %v1577
          %v1579 = vrot.slane %v1533, 7
          %v1580 = vsel %vm1558, %v1575, %v1579
          %v1581 = vrot.slane %v1534, 7
          %v1582 = vsel %vm1558, %v1577, %v1581
          %v1583 = vrot.slane %v1535, 7
          %v1584 = vsel %vm1558, %v1579, %v1583
          %v1585 = vrot.slane %v1536, 7
          %v1586 = vsel %vm1558, %v1581, %v1585
          %v1587 = vrot.slane %v1537, 7
          %v1588 = vsel %vm1558, %v1583, %v1587
          %v1589 = vrot.slane %v1538, 7
          %v1590 = vsel %vm1558, %v1585, %v1589
          %v1591 = vrot.slane %v1539, 7
          %v1592 = vsel %vm1558, %v1587, %v1591
          %v1609 = vadd.f32 %v1489, %v1561
          %v1610 = vadd.f32 %v1490, %v1564
          %v1611 = vadd.f32 %v1491, %v1566
          %v1612 = vadd.f32 %v1492, %v1568
          %v1613 = vadd.f32 %v1493, %v1570
          %v1614 = vadd.f32 %v1494, %v1572
          %v1615 = vadd.f32 %v1495, %v1574
          %v1616 = vadd.f32 %v1496, %v1576
          %v1617 = vadd.f32 %v1497, %v1578
          %v1618 = vadd.f32 %v1498, %v1580
          %v1619 = vadd.f32 %v1499, %v1582
          %v1620 = vadd.f32 %v1500, %v1584
          %v1621 = vadd.f32 %v1501, %v1586
          %v1622 = vadd.f32 %v1502, %v1588
          %v1623 = vadd.f32 %v1503, %v1590
          %v1624 = vadd.f32 %v1504, %v1592
          %v1625 = vld [vmem:[#allocation2 + $0x80] sm:$0xff]
          %v1626 = vld [vmem:[#allocation2 + $0x88] sm:$0xff]
          %s1627 = scalar_lea.vmem %s3, 16
          %v1628 = vld [vmem:[%s1627] ss:$8 sm:$0x3]
          %v1630 = vlaneseq
          %v1631 = vshrl.u32 %v1630, 7
          %v1632 = vsub.s32 0, %v1631
          %v1633 = vrot.slane %v1628, %v1632
          %v1634 = vlaneseq
          %v1635 = vshrl.u32 %v1634, 7
          %v1636 = vsub.s32 1, %v1635
          %v1637 = vrot.slane %v1628, %v1636
          %v1640 = vmul.f32 %v727, %v1633
          %v1641 = vmul.f32 %v728, %v1637
          %v1642 = vmul.f32 %v729, %v1633
          %v1643 = vmul.f32 %v730, %v1637
          %v1644 = vmul.f32 %v731, %v1633
          %v1645 = vmul.f32 %v732, %v1637
          %v1646 = vmul.f32 %v733, %v1633
          %v1647 = vmul.f32 %v734, %v1637
          %v1648 = vmul.f32 %v735, %v1633
          %v1649 = vmul.f32 %v736, %v1637
          %v1650 = vmul.f32 %v737, %v1633
          %v1651 = vmul.f32 %v738, %v1637
          %v1652 = vmul.f32 %v739, %v1633
          %v1653 = vmul.f32 %v740, %v1637
          %v1654 = vmul.f32 %v1625, %v1633
          %v1655 = vmul.f32 %v1626, %v1637
          %v1656 = vadd.f32 %v1609, %v1640
          %v1657 = vadd.f32 %v1610, %v1641
          %v1658 = vadd.f32 %v1611, %v1642
          %v1659 = vadd.f32 %v1612, %v1643
          %v1660 = vadd.f32 %v1613, %v1644
          %v1661 = vadd.f32 %v1614, %v1645
          %v1662 = vadd.f32 %v1615, %v1646
          %v1663 = vadd.f32 %v1616, %v1647
          %v1664 = vadd.f32 %v1617, %v1648
          %v1665 = vadd.f32 %v1618, %v1649
          %v1666 = vadd.f32 %v1619, %v1650
          %v1667 = vadd.f32 %v1620, %v1651
          %v1668 = vadd.f32 %v1621, %v1652
          %v1669 = vadd.f32 %v1622, %v1653
          %v1670 = vadd.f32 %v1623, %v1654
          %v1671 = vadd.f32 %v1624, %v1655
          %v1672 = vld [vmem:[#allocation2 + $0x10] sm:$0xfe]
          %v1673 = vld [vmem:[#allocation2 + $0x18] sm:$0xfe]
          %v1674 = vld [vmem:[#allocation2 + $0x90] sm:$0x1]
          %v1675 = vld [vmem:[#allocation2 + $0x98] sm:$0x1]
          %s1676 = scalar_lea.vmem %s3, 17
          %v1677 = vld [vmem:[%s1676] ss:$8 sm:$0x3]
          %v1679 = vlaneseq
          %v1680 = vshrl.u32 %v1679, 7
          %v1681 = vsub.s32 0, %v1680
          %v1682 = vrot.slane %v1677, %v1681
          %v1683 = vlaneseq
          %v1684 = vshrl.u32 %v1683, 7
          %v1685 = vsub.s32 1, %v1684
          %v1686 = vrot.slane %v1677, %v1685
          %v1689 = vmul.f32 %v1672, %v1682
          %v1690 = vmul.f32 %v1673, %v1686
          %v1691 = vmul.f32 %v729, %v1682
          %v1692 = vmul.f32 %v730, %v1686
          %v1693 = vmul.f32 %v731, %v1682
          %v1694 = vmul.f32 %v732, %v1686
          %v1695 = vmul.f32 %v733, %v1682
          %v1696 = vmul.f32 %v734, %v1686
          %v1697 = vmul.f32 %v735, %v1682
          %v1698 = vmul.f32 %v736, %v1686
          %v1699 = vmul.f32 %v737, %v1682
          %v1700 = vmul.f32 %v738, %v1686
          %v1701 = vmul.f32 %v739, %v1682
          %v1702 = vmul.f32 %v740, %v1686
          %v1703 = vmul.f32 %v1625, %v1682
          %v1704 = vmul.f32 %v1626, %v1686
          %v1705 = vmul.f32 %v1674, %v1682
          %v1706 = vmul.f32 %v1675, %v1686
          %v1725 = vrot.slane %v1689, 1
          %v1726 = vrot.slane %v1691, 1
          %v1727 = vsel %vm838, %v1725, %v1726
          %v1728 = vrot.slane %v1690, 1
          %v1729 = vrot.slane %v1692, 1
          %v1730 = vsel %vm838, %v1728, %v1729
          %v1731 = vrot.slane %v1693, 1
          %v1732 = vsel %vm838, %v1726, %v1731
          %v1733 = vrot.slane %v1694, 1
          %v1734 = vsel %vm838, %v1729, %v1733
          %v1735 = vrot.slane %v1695, 1
          %v1736 = vsel %vm838, %v1731, %v1735
          %v1737 = vrot.slane %v1696, 1
          %v1738 = vsel %vm838, %v1733, %v1737
          %v1739 = vrot.slane %v1697, 1
          %v1740 = vsel %vm838, %v1735, %v1739
          %v1741 = vrot.slane %v1698, 1
          %v1742 = vsel %vm838, %v1737, %v1741
          %v1743 = vrot.slane %v1699, 1
          %v1744 = vsel %vm838, %v1739, %v1743
          %v1745 = vrot.slane %v1700, 1
          %v1746 = vsel %vm838, %v1741, %v1745
          %v1747 = vrot.slane %v1701, 1
          %v1748 = vsel %vm838, %v1743, %v1747
          %v1749 = vrot.slane %v1702, 1
          %v1750 = vsel %vm838, %v1745, %v1749
          %v1751 = vrot.slane %v1703, 1
          %v1752 = vsel %vm838, %v1747, %v1751
          %v1753 = vrot.slane %v1704, 1
          %v1754 = vsel %vm838, %v1749, %v1753
          %v1755 = vrot.slane %v1705, 1
          %v1756 = vsel %vm838, %v1751, %v1755
          %v1757 = vrot.slane %v1706, 1
          %v1758 = vsel %vm838, %v1753, %v1757
          %v1775 = vadd.f32 %v1656, %v1727
          %v1776 = vadd.f32 %v1657, %v1730
          %v1777 = vadd.f32 %v1658, %v1732
          %v1778 = vadd.f32 %v1659, %v1734
          %v1779 = vadd.f32 %v1660, %v1736
          %v1780 = vadd.f32 %v1661, %v1738
          %v1781 = vadd.f32 %v1662, %v1740
          %v1782 = vadd.f32 %v1663, %v1742
          %v1783 = vadd.f32 %v1664, %v1744
          %v1784 = vadd.f32 %v1665, %v1746
          %v1785 = vadd.f32 %v1666, %v1748
          %v1786 = vadd.f32 %v1667, %v1750
          %v1787 = vadd.f32 %v1668, %v1752
          %v1788 = vadd.f32 %v1669, %v1754
          %v1789 = vadd.f32 %v1670, %v1756
          %v1790 = vadd.f32 %v1671, %v1758
          %v1791 = vld [vmem:[#allocation2 + $0x10] sm:$0xfc]
          %v1792 = vld [vmem:[#allocation2 + $0x18] sm:$0xfc]
          %v1793 = vld [vmem:[#allocation2 + $0x90] sm:$0x3]
          %v1794 = vld [vmem:[#allocation2 + $0x98] sm:$0x3]
          %s1795 = scalar_lea.vmem %s3, 18
          %v1796 = vld [vmem:[%s1795] ss:$8 sm:$0x3]
          %v1798 = vlaneseq
          %v1799 = vshrl.u32 %v1798, 7
          %v1800 = vsub.s32 0, %v1799
          %v1801 = vrot.slane %v1796, %v1800
          %v1802 = vlaneseq
          %v1803 = vshrl.u32 %v1802, 7
          %v1804 = vsub.s32 1, %v1803
          %v1805 = vrot.slane %v1796, %v1804
          %v1808 = vmul.f32 %v1791, %v1801
          %v1809 = vmul.f32 %v1792, %v1805
          %v1810 = vmul.f32 %v729, %v1801
          %v1811 = vmul.f32 %v730, %v1805
          %v1812 = vmul.f32 %v731, %v1801
          %v1813 = vmul.f32 %v732, %v1805
          %v1814 = vmul.f32 %v733, %v1801
          %v1815 = vmul.f32 %v734, %v1805
          %v1816 = vmul.f32 %v735, %v1801
          %v1817 = vmul.f32 %v736, %v1805
          %v1818 = vmul.f32 %v737, %v1801
          %v1819 = vmul.f32 %v738, %v1805
          %v1820 = vmul.f32 %v739, %v1801
          %v1821 = vmul.f32 %v740, %v1805
          %v1822 = vmul.f32 %v1625, %v1801
          %v1823 = vmul.f32 %v1626, %v1805
          %v1824 = vmul.f32 %v1793, %v1801
          %v1825 = vmul.f32 %v1794, %v1805
          %v1844 = vrot.slane %v1808, 2
          %v1845 = vrot.slane %v1810, 2
          %v1846 = vsel %vm958, %v1844, %v1845
          %v1847 = vrot.slane %v1809, 2
          %v1848 = vrot.slane %v1811, 2
          %v1849 = vsel %vm958, %v1847, %v1848
          %v1850 = vrot.slane %v1812, 2
          %v1851 = vsel %vm958, %v1845, %v1850
          %v1852 = vrot.slane %v1813, 2
          %v1853 = vsel %vm958, %v1848, %v1852
          %v1854 = vrot.slane %v1814, 2
          %v1855 = vsel %vm958, %v1850, %v1854
          %v1856 = vrot.slane %v1815, 2
          %v1857 = vsel %vm958, %v1852, %v1856
          %v1858 = vrot.slane %v1816, 2
          %v1859 = vsel %vm958, %v1854, %v1858
          %v1860 = vrot.slane %v1817, 2
          %v1861 = vsel %vm958, %v1856, %v1860
          %v1862 = vrot.slane %v1818, 2
          %v1863 = vsel %vm958, %v1858, %v1862
          %v1864 = vrot.slane %v1819, 2
          %v1865 = vsel %vm958, %v1860, %v1864
          %v1866 = vrot.slane %v1820, 2
          %v1867 = vsel %vm958, %v1862, %v1866
          %v1868 = vrot.slane %v1821, 2
          %v1869 = vsel %vm958, %v1864, %v1868
          %v1870 = vrot.slane %v1822, 2
          %v1871 = vsel %vm958, %v1866, %v1870
          %v1872 = vrot.slane %v1823, 2
          %v1873 = vsel %vm958, %v1868, %v1872
          %v1874 = vrot.slane %v1824, 2
          %v1875 = vsel %vm958, %v1870, %v1874
          %v1876 = vrot.slane %v1825, 2
          %v1877 = vsel %vm958, %v1872, %v1876
          %v1894 = vadd.f32 %v1775, %v1846
          %v1895 = vadd.f32 %v1776, %v1849
          %v1896 = vadd.f32 %v1777, %v1851
          %v1897 = vadd.f32 %v1778, %v1853
          %v1898 = vadd.f32 %v1779, %v1855
          %v1899 = vadd.f32 %v1780, %v1857
          %v1900 = vadd.f32 %v1781, %v1859
          %v1901 = vadd.f32 %v1782, %v1861
          %v1902 = vadd.f32 %v1783, %v1863
          %v1903 = vadd.f32 %v1784, %v1865
          %v1904 = vadd.f32 %v1785, %v1867
          %v1905 = vadd.f32 %v1786, %v1869
          %v1906 = vadd.f32 %v1787, %v1871
          %v1907 = vadd.f32 %v1788, %v1873
          %v1908 = vadd.f32 %v1789, %v1875
          %v1909 = vadd.f32 %v1790, %v1877
          %v1910 = vld [vmem:[#allocation2 + $0x10] sm:$0xf8]
          %v1911 = vld [vmem:[#allocation2 + $0x18] sm:$0xf8]
          %v1912 = vld [vmem:[#allocation2 + $0x90] sm:$0x7]
          %v1913 = vld [vmem:[#allocation2 + $0x98] sm:$0x7]
          %s1914 = scalar_lea.vmem %s3, 19
          %v1915 = vld [vmem:[%s1914] ss:$8 sm:$0x3]
          %v1917 = vlaneseq
          %v1918 = vshrl.u32 %v1917, 7
          %v1919 = vsub.s32 0, %v1918
          %v1920 = vrot.slane %v1915, %v1919
          %v1921 = vlaneseq
          %v1922 = vshrl.u32 %v1921, 7
          %v1923 = vsub.s32 1, %v1922
          %v1924 = vrot.slane %v1915, %v1923
          %v1927 = vmul.f32 %v1910, %v1920
          %v1928 = vmul.f32 %v1911, %v1924
          %v1929 = vmul.f32 %v729, %v1920
          %v1930 = vmul.f32 %v730, %v1924
          %v1931 = vmul.f32 %v731, %v1920
          %v1932 = vmul.f32 %v732, %v1924
          %v1933 = vmul.f32 %v733, %v1920
          %v1934 = vmul.f32 %v734, %v1924
          %v1935 = vmul.f32 %v735, %v1920
          %v1936 = vmul.f32 %v736, %v1924
          %v1937 = vmul.f32 %v737, %v1920
          %v1938 = vmul.f32 %v738, %v1924
          %v1939 = vmul.f32 %v739, %v1920
          %v1940 = vmul.f32 %v740, %v1924
          %v1941 = vmul.f32 %v1625, %v1920
          %v1942 = vmul.f32 %v1626, %v1924
          %v1943 = vmul.f32 %v1912, %v1920
          %v1944 = vmul.f32 %v1913, %v1924
          %v1963 = vrot.slane %v1927, 3
          %v1964 = vrot.slane %v1929, 3
          %v1965 = vsel %vm1078, %v1963, %v1964
          %v1966 = vrot.slane %v1928, 3
          %v1967 = vrot.slane %v1930, 3
          %v1968 = vsel %vm1078, %v1966, %v1967
          %v1969 = vrot.slane %v1931, 3
          %v1970 = vsel %vm1078, %v1964, %v1969
          %v1971 = vrot.slane %v1932, 3
          %v1972 = vsel %vm1078, %v1967, %v1971
          %v1973 = vrot.slane %v1933, 3
          %v1974 = vsel %vm1078, %v1969, %v1973
          %v1975 = vrot.slane %v1934, 3
          %v1976 = vsel %vm1078, %v1971, %v1975
          %v1977 = vrot.slane %v1935, 3
          %v1978 = vsel %vm1078, %v1973, %v1977
          %v1979 = vrot.slane %v1936, 3
          %v1980 = vsel %vm1078, %v1975, %v1979
          %v1981 = vrot.slane %v1937, 3
          %v1982 = vsel %vm1078, %v1977, %v1981
          %v1983 = vrot.slane %v1938, 3
          %v1984 = vsel %vm1078, %v1979, %v1983
          %v1985 = vrot.slane %v1939, 3
          %v1986 = vsel %vm1078, %v1981, %v1985
          %v1987 = vrot.slane %v1940, 3
          %v1988 = vsel %vm1078, %v1983, %v1987
          %v1989 = vrot.slane %v1941, 3
          %v1990 = vsel %vm1078, %v1985, %v1989
          %v1991 = vrot.slane %v1942, 3
          %v1992 = vsel %vm1078, %v1987, %v1991
          %v1993 = vrot.slane %v1943, 3
          %v1994 = vsel %vm1078, %v1989, %v1993
          %v1995 = vrot.slane %v1944, 3
          %v1996 = vsel %vm1078, %v1991, %v1995
          %v2013 = vadd.f32 %v1894, %v1965
          %v2014 = vadd.f32 %v1895, %v1968
          %v2015 = vadd.f32 %v1896, %v1970
          %v2016 = vadd.f32 %v1897, %v1972
          %v2017 = vadd.f32 %v1898, %v1974
          %v2018 = vadd.f32 %v1899, %v1976
          %v2019 = vadd.f32 %v1900, %v1978
          %v2020 = vadd.f32 %v1901, %v1980
          %v2021 = vadd.f32 %v1902, %v1982
          %v2022 = vadd.f32 %v1903, %v1984
          %v2023 = vadd.f32 %v1904, %v1986
          %v2024 = vadd.f32 %v1905, %v1988
          %v2025 = vadd.f32 %v1906, %v1990
          %v2026 = vadd.f32 %v1907, %v1992
          %v2027 = vadd.f32 %v1908, %v1994
          %v2028 = vadd.f32 %v1909, %v1996
          %v2029 = vld [vmem:[#allocation2 + $0x10] sm:$0xf0]
          %v2030 = vld [vmem:[#allocation2 + $0x18] sm:$0xf0]
          %v2031 = vld [vmem:[#allocation2 + $0x90] sm:$0xf]
          %v2032 = vld [vmem:[#allocation2 + $0x98] sm:$0xf]
          %s2033 = scalar_lea.vmem %s3, 20
          %v2034 = vld [vmem:[%s2033] ss:$8 sm:$0x3]
          %v2036 = vlaneseq
          %v2037 = vshrl.u32 %v2036, 7
          %v2038 = vsub.s32 0, %v2037
          %v2039 = vrot.slane %v2034, %v2038
          %v2040 = vlaneseq
          %v2041 = vshrl.u32 %v2040, 7
          %v2042 = vsub.s32 1, %v2041
          %v2043 = vrot.slane %v2034, %v2042
          %v2046 = vmul.f32 %v2029, %v2039
          %v2047 = vmul.f32 %v2030, %v2043
          %v2048 = vmul.f32 %v729, %v2039
          %v2049 = vmul.f32 %v730, %v2043
          %v2050 = vmul.f32 %v731, %v2039
          %v2051 = vmul.f32 %v732, %v2043
          %v2052 = vmul.f32 %v733, %v2039
          %v2053 = vmul.f32 %v734, %v2043
          %v2054 = vmul.f32 %v735, %v2039
          %v2055 = vmul.f32 %v736, %v2043
          %v2056 = vmul.f32 %v737, %v2039
          %v2057 = vmul.f32 %v738, %v2043
          %v2058 = vmul.f32 %v739, %v2039
          %v2059 = vmul.f32 %v740, %v2043
          %v2060 = vmul.f32 %v1625, %v2039
          %v2061 = vmul.f32 %v1626, %v2043
          %v2062 = vmul.f32 %v2031, %v2039
          %v2063 = vmul.f32 %v2032, %v2043
          %v2082 = vrot.slane %v2046, 4
          %v2083 = vrot.slane %v2048, 4
          %v2084 = vsel %vm1198, %v2082, %v2083
          %v2085 = vrot.slane %v2047, 4
          %v2086 = vrot.slane %v2049, 4
          %v2087 = vsel %vm1198, %v2085, %v2086
          %v2088 = vrot.slane %v2050, 4
          %v2089 = vsel %vm1198, %v2083, %v2088
          %v2090 = vrot.slane %v2051, 4
          %v2091 = vsel %vm1198, %v2086, %v2090
          %v2092 = vrot.slane %v2052, 4
          %v2093 = vsel %vm1198, %v2088, %v2092
          %v2094 = vrot.slane %v2053, 4
          %v2095 = vsel %vm1198, %v2090, %v2094
          %v2096 = vrot.slane %v2054, 4
          %v2097 = vsel %vm1198, %v2092, %v2096
          %v2098 = vrot.slane %v2055, 4
          %v2099 = vsel %vm1198, %v2094, %v2098
          %v2100 = vrot.slane %v2056, 4
          %v2101 = vsel %vm1198, %v2096, %v2100
          %v2102 = vrot.slane %v2057, 4
          %v2103 = vsel %vm1198, %v2098, %v2102
          %v2104 = vrot.slane %v2058, 4
          %v2105 = vsel %vm1198, %v2100, %v2104
          %v2106 = vrot.slane %v2059, 4
          %v2107 = vsel %vm1198, %v2102, %v2106
          %v2108 = vrot.slane %v2060, 4
          %v2109 = vsel %vm1198, %v2104, %v2108
          %v2110 = vrot.slane %v2061, 4
          %v2111 = vsel %vm1198, %v2106, %v2110
          %v2112 = vrot.slane %v2062, 4
          %v2113 = vsel %vm1198, %v2108, %v2112
          %v2114 = vrot.slane %v2063, 4
          %v2115 = vsel %vm1198, %v2110, %v2114
          %v2132 = vadd.f32 %v2013, %v2084
          %v2133 = vadd.f32 %v2014, %v2087
          %v2134 = vadd.f32 %v2015, %v2089
          %v2135 = vadd.f32 %v2016, %v2091
          %v2136 = vadd.f32 %v2017, %v2093
          %v2137 = vadd.f32 %v2018, %v2095
          %v2138 = vadd.f32 %v2019, %v2097
          %v2139 = vadd.f32 %v2020, %v2099
          %v2140 = vadd.f32 %v2021, %v2101
          %v2141 = vadd.f32 %v2022, %v2103
          %v2142 = vadd.f32 %v2023, %v2105
          %v2143 = vadd.f32 %v2024, %v2107
          %v2144 = vadd.f32 %v2025, %v2109
          %v2145 = vadd.f32 %v2026, %v2111
          %v2146 = vadd.f32 %v2027, %v2113
          %v2147 = vadd.f32 %v2028, %v2115
          %v2148 = vld [vmem:[#allocation2 + $0x10] sm:$0xe0]
          %v2149 = vld [vmem:[#allocation2 + $0x18] sm:$0xe0]
          %v2150 = vld [vmem:[#allocation2 + $0x90] sm:$0x1f]
          %v2151 = vld [vmem:[#allocation2 + $0x98] sm:$0x1f]
          %s2152 = scalar_lea.vmem %s3, 21
          %v2153 = vld [vmem:[%s2152] ss:$8 sm:$0x3]
          %v2155 = vlaneseq
          %v2156 = vshrl.u32 %v2155, 7
          %v2157 = vsub.s32 0, %v2156
          %v2158 = vrot.slane %v2153, %v2157
          %v2159 = vlaneseq
          %v2160 = vshrl.u32 %v2159, 7
          %v2161 = vsub.s32 1, %v2160
          %v2162 = vrot.slane %v2153, %v2161
          %v2165 = vmul.f32 %v2148, %v2158
          %v2166 = vmul.f32 %v2149, %v2162
          %v2167 = vmul.f32 %v729, %v2158
          %v2168 = vmul.f32 %v730, %v2162
          %v2169 = vmul.f32 %v731, %v2158
          %v2170 = vmul.f32 %v732, %v2162
          %v2171 = vmul.f32 %v733, %v2158
          %v2172 = vmul.f32 %v734, %v2162
          %v2173 = vmul.f32 %v735, %v2158
          %v2174 = vmul.f32 %v736, %v2162
          %v2175 = vmul.f32 %v737, %v2158
          %v2176 = vmul.f32 %v738, %v2162
          %v2177 = vmul.f32 %v739, %v2158
          %v2178 = vmul.f32 %v740, %v2162
          %v2179 = vmul.f32 %v1625, %v2158
          %v2180 = vmul.f32 %v1626, %v2162
          %v2181 = vmul.f32 %v2150, %v2158
          %v2182 = vmul.f32 %v2151, %v2162
          %v2201 = vrot.slane %v2165, 5
          %v2202 = vrot.slane %v2167, 5
          %v2203 = vsel %vm1318, %v2201, %v2202
          %v2204 = vrot.slane %v2166, 5
          %v2205 = vrot.slane %v2168, 5
          %v2206 = vsel %vm1318, %v2204, %v2205
          %v2207 = vrot.slane %v2169, 5
          %v2208 = vsel %vm1318, %v2202, %v2207
          %v2209 = vrot.slane %v2170, 5
          %v2210 = vsel %vm1318, %v2205, %v2209
          %v2211 = vrot.slane %v2171, 5
          %v2212 = vsel %vm1318, %v2207, %v2211
          %v2213 = vrot.slane %v2172, 5
          %v2214 = vsel %vm1318, %v2209, %v2213
          %v2215 = vrot.slane %v2173, 5
          %v2216 = vsel %vm1318, %v2211, %v2215
          %v2217 = vrot.slane %v2174, 5
          %v2218 = vsel %vm1318, %v2213, %v2217
          %v2219 = vrot.slane %v2175, 5
          %v2220 = vsel %vm1318, %v2215, %v2219
          %v2221 = vrot.slane %v2176, 5
          %v2222 = vsel %vm1318, %v2217, %v2221
          %v2223 = vrot.slane %v2177, 5
          %v2224 = vsel %vm1318, %v2219, %v2223
          %v2225 = vrot.slane %v2178, 5
          %v2226 = vsel %vm1318, %v2221, %v2225
          %v2227 = vrot.slane %v2179, 5
          %v2228 = vsel %vm1318, %v2223, %v2227
          %v2229 = vrot.slane %v2180, 5
          %v2230 = vsel %vm1318, %v2225, %v2229
          %v2231 = vrot.slane %v2181, 5
          %v2232 = vsel %vm1318, %v2227, %v2231
          %v2233 = vrot.slane %v2182, 5
          %v2234 = vsel %vm1318, %v2229, %v2233
          %v2251 = vadd.f32 %v2132, %v2203
          %v2252 = vadd.f32 %v2133, %v2206
          %v2253 = vadd.f32 %v2134, %v2208
          %v2254 = vadd.f32 %v2135, %v2210
          %v2255 = vadd.f32 %v2136, %v2212
          %v2256 = vadd.f32 %v2137, %v2214
          %v2257 = vadd.f32 %v2138, %v2216
          %v2258 = vadd.f32 %v2139, %v2218
          %v2259 = vadd.f32 %v2140, %v2220
          %v2260 = vadd.f32 %v2141, %v2222
          %v2261 = vadd.f32 %v2142, %v2224
          %v2262 = vadd.f32 %v2143, %v2226
          %v2263 = vadd.f32 %v2144, %v2228
          %v2264 = vadd.f32 %v2145, %v2230
          %v2265 = vadd.f32 %v2146, %v2232
          %v2266 = vadd.f32 %v2147, %v2234
          %v2267 = vld [vmem:[#allocation2 + $0x10] sm:$0xc0]
          %v2268 = vld [vmem:[#allocation2 + $0x18] sm:$0xc0]
          %v2269 = vld [vmem:[#allocation2 + $0x90] sm:$0x3f]
          %v2270 = vld [vmem:[#allocation2 + $0x98] sm:$0x3f]
          %s2271 = scalar_lea.vmem %s3, 22
          %v2272 = vld [vmem:[%s2271] ss:$8 sm:$0x3]
          %v2274 = vlaneseq
          %v2275 = vshrl.u32 %v2274, 7
          %v2276 = vsub.s32 0, %v2275
          %v2277 = vrot.slane %v2272, %v2276
          %v2278 = vlaneseq
          %v2279 = vshrl.u32 %v2278, 7
          %v2280 = vsub.s32 1, %v2279
          %v2281 = vrot.slane %v2272, %v2280
          %v2284 = vmul.f32 %v2267, %v2277
          %v2285 = vmul.f32 %v2268, %v2281
          %v2286 = vmul.f32 %v729, %v2277
          %v2287 = vmul.f32 %v730, %v2281
          %v2288 = vmul.f32 %v731, %v2277
          %v2289 = vmul.f32 %v732, %v2281
          %v2290 = vmul.f32 %v733, %v2277
          %v2291 = vmul.f32 %v734, %v2281
          %v2292 = vmul.f32 %v735, %v2277
          %v2293 = vmul.f32 %v736, %v2281
          %v2294 = vmul.f32 %v737, %v2277
          %v2295 = vmul.f32 %v738, %v2281
          %v2296 = vmul.f32 %v739, %v2277
          %v2297 = vmul.f32 %v740, %v2281
          %v2298 = vmul.f32 %v1625, %v2277
          %v2299 = vmul.f32 %v1626, %v2281
          %v2300 = vmul.f32 %v2269, %v2277
          %v2301 = vmul.f32 %v2270, %v2281
          %v2320 = vrot.slane %v2284, 6
          %v2321 = vrot.slane %v2286, 6
          %v2322 = vsel %vm1438, %v2320, %v2321
          %v2323 = vrot.slane %v2285, 6
          %v2324 = vrot.slane %v2287, 6
          %v2325 = vsel %vm1438, %v2323, %v2324
          %v2326 = vrot.slane %v2288, 6
          %v2327 = vsel %vm1438, %v2321, %v2326
          %v2328 = vrot.slane %v2289, 6
          %v2329 = vsel %vm1438, %v2324, %v2328
          %v2330 = vrot.slane %v2290, 6
          %v2331 = vsel %vm1438, %v2326, %v2330
          %v2332 = vrot.slane %v2291, 6
          %v2333 = vsel %vm1438, %v2328, %v2332
          %v2334 = vrot.slane %v2292, 6
          %v2335 = vsel %vm1438, %v2330, %v2334
          %v2336 = vrot.slane %v2293, 6
          %v2337 = vsel %vm1438, %v2332, %v2336
          %v2338 = vrot.slane %v2294, 6
          %v2339 = vsel %vm1438, %v2334, %v2338
          %v2340 = vrot.slane %v2295, 6
          %v2341 = vsel %vm1438, %v2336, %v2340
          %v2342 = vrot.slane %v2296, 6
          %v2343 = vsel %vm1438, %v2338, %v2342
          %v2344 = vrot.slane %v2297, 6
          %v2345 = vsel %vm1438, %v2340, %v2344
          %v2346 = vrot.slane %v2298, 6
          %v2347 = vsel %vm1438, %v2342, %v2346
          %v2348 = vrot.slane %v2299, 6
          %v2349 = vsel %vm1438, %v2344, %v2348
          %v2350 = vrot.slane %v2300, 6
          %v2351 = vsel %vm1438, %v2346, %v2350
          %v2352 = vrot.slane %v2301, 6
          %v2353 = vsel %vm1438, %v2348, %v2352
          %v2370 = vadd.f32 %v2251, %v2322
          %v2371 = vadd.f32 %v2252, %v2325
          %v2372 = vadd.f32 %v2253, %v2327
          %v2373 = vadd.f32 %v2254, %v2329
          %v2374 = vadd.f32 %v2255, %v2331
          %v2375 = vadd.f32 %v2256, %v2333
          %v2376 = vadd.f32 %v2257, %v2335
          %v2377 = vadd.f32 %v2258, %v2337
          %v2378 = vadd.f32 %v2259, %v2339
          %v2379 = vadd.f32 %v2260, %v2341
          %v2380 = vadd.f32 %v2261, %v2343
          %v2381 = vadd.f32 %v2262, %v2345
          %v2382 = vadd.f32 %v2263, %v2347
          %v2383 = vadd.f32 %v2264, %v2349
          %v2384 = vadd.f32 %v2265, %v2351
          %v2385 = vadd.f32 %v2266, %v2353
          %v2386 = vld [vmem:[#allocation2 + $0x10] sm:$0x80]
          %v2387 = vld [vmem:[#allocation2 + $0x18] sm:$0x80]
          %v2388 = vld [vmem:[#allocation2 + $0x90] sm:$0x7f]
          %v2389 = vld [vmem:[#allocation2 + $0x98] sm:$0x7f]
          %s2390 = scalar_lea.vmem %s3, 23
          %v2391 = vld [vmem:[%s2390] ss:$8 sm:$0x3]
          %v2393 = vlaneseq
          %v2394 = vshrl.u32 %v2393, 7
          %v2395 = vsub.s32 0, %v2394
          %v2396 = vrot.slane %v2391, %v2395
          %v2397 = vlaneseq
          %v2398 = vshrl.u32 %v2397, 7
          %v2399 = vsub.s32 1, %v2398
          %v2400 = vrot.slane %v2391, %v2399
          %v2403 = vmul.f32 %v2386, %v2396
          %v2404 = vmul.f32 %v2387, %v2400
          %v2405 = vmul.f32 %v729, %v2396
          %v2406 = vmul.f32 %v730, %v2400
          %v2407 = vmul.f32 %v731, %v2396
          %v2408 = vmul.f32 %v732, %v2400
          %v2409 = vmul.f32 %v733, %v2396
          %v2410 = vmul.f32 %v734, %v2400
          %v2411 = vmul.f32 %v735, %v2396
          %v2412 = vmul.f32 %v736, %v2400
          %v2413 = vmul.f32 %v737, %v2396
          %v2414 = vmul.f32 %v738, %v2400
          %v2415 = vmul.f32 %v739, %v2396
          %v2416 = vmul.f32 %v740, %v2400
          %v2417 = vmul.f32 %v1625, %v2396
          %v2418 = vmul.f32 %v1626, %v2400
          %v2419 = vmul.f32 %v2388, %v2396
          %v2420 = vmul.f32 %v2389, %v2400
          %v2439 = vrot.slane %v2403, 7
          %v2440 = vrot.slane %v2405, 7
          %v2441 = vsel %vm1558, %v2439, %v2440
          %v2442 = vrot.slane %v2404, 7
          %v2443 = vrot.slane %v2406, 7
          %v2444 = vsel %vm1558, %v2442, %v2443
          %v2445 = vrot.slane %v2407, 7
          %v2446 = vsel %vm1558, %v2440, %v2445
          %v2447 = vrot.slane %v2408, 7
          %v2448 = vsel %vm1558, %v2443, %v2447
          %v2449 = vrot.slane %v2409, 7
          %v2450 = vsel %vm1558, %v2445, %v2449
          %v2451 = vrot.slane %v2410, 7
          %v2452 = vsel %vm1558, %v2447, %v2451
          %v2453 = vrot.slane %v2411, 7
          %v2454 = vsel %vm1558, %v2449, %v2453
          %v2455 = vrot.slane %v2412, 7
          %v2456 = vsel %vm1558, %v2451, %v2455
          %v2457 = vrot.slane %v2413, 7
          %v2458 = vsel %vm1558, %v2453, %v2457
          %v2459 = vrot.slane %v2414, 7
          %v2460 = vsel %vm1558, %v2455, %v2459
          %v2461 = vrot.slane %v2415, 7
          %v2462 = vsel %vm1558, %v2457, %v2461
          %v2463 = vrot.slane %v2416, 7
          %v2464 = vsel %vm1558, %v2459, %v2463
          %v2465 = vrot.slane %v2417, 7
          %v2466 = vsel %vm1558, %v2461, %v2465
          %v2467 = vrot.slane %v2418, 7
          %v2468 = vsel %vm1558, %v2463, %v2467
          %v2469 = vrot.slane %v2419, 7
          %v2470 = vsel %vm1558, %v2465, %v2469
          %v2471 = vrot.slane %v2420, 7
          %v2472 = vsel %vm1558, %v2467, %v2471
          %v2489 = vadd.f32 %v2370, %v2441
          %v2490 = vadd.f32 %v2371, %v2444
          %v2491 = vadd.f32 %v2372, %v2446
          %v2492 = vadd.f32 %v2373, %v2448
          %v2493 = vadd.f32 %v2374, %v2450
          %v2494 = vadd.f32 %v2375, %v2452
          %v2495 = vadd.f32 %v2376, %v2454
          %v2496 = vadd.f32 %v2377, %v2456
          %v2497 = vadd.f32 %v2378, %v2458
          %v2498 = vadd.f32 %v2379, %v2460
          %v2499 = vadd.f32 %v2380, %v2462
          %v2500 = vadd.f32 %v2381, %v2464
          %v2501 = vadd.f32 %v2382, %v2466
          %v2502 = vadd.f32 %v2383, %v2468
          %v2503 = vadd.f32 %v2384, %v2470
          %v2504 = vadd.f32 %v2385, %v2472
          %v2505 = vld [vmem:[#allocation2 + $0x90] sm:$0xff]
          %v2506 = vld [vmem:[#allocation2 + $0x98] sm:$0xff]
          %s2507 = scalar_lea.vmem %s3, 32
          %v2508 = vld [vmem:[%s2507] ss:$8 sm:$0x3]
          %v2510 = vlaneseq
          %v2511 = vshrl.u32 %v2510, 7
          %v2512 = vsub.s32 0, %v2511
          %v2513 = vrot.slane %v2508, %v2512
          %v2514 = vlaneseq
          %v2515 = vshrl.u32 %v2514, 7
          %v2516 = vsub.s32 1, %v2515
          %v2517 = vrot.slane %v2508, %v2516
          %v2520 = vmul.f32 %v729, %v2513
          %v2521 = vmul.f32 %v730, %v2517
          %v2522 = vmul.f32 %v731, %v2513
          %v2523 = vmul.f32 %v732, %v2517
          %v2524 = vmul.f32 %v733, %v2513
          %v2525 = vmul.f32 %v734, %v2517
          %v2526 = vmul.f32 %v735, %v2513
          %v2527 = vmul.f32 %v736, %v2517
          %v2528 = vmul.f32 %v737, %v2513
          %v2529 = vmul.f32 %v738, %v2517
          %v2530 = vmul.f32 %v739, %v2513
          %v2531 = vmul.f32 %v740, %v2517
          %v2532 = vmul.f32 %v1625, %v2513
          %v2533 = vmul.f32 %v1626, %v2517
          %v2534 = vmul.f32 %v2505, %v2513
          %v2535 = vmul.f32 %v2506, %v2517
          %v2536 = vadd.f32 %v2489, %v2520
          %v2537 = vadd.f32 %v2490, %v2521
          %v2538 = vadd.f32 %v2491, %v2522
          %v2539 = vadd.f32 %v2492, %v2523
          %v2540 = vadd.f32 %v2493, %v2524
          %v2541 = vadd.f32 %v2494, %v2525
          %v2542 = vadd.f32 %v2495, %v2526
          %v2543 = vadd.f32 %v2496, %v2527
          %v2544 = vadd.f32 %v2497, %v2528
          %v2545 = vadd.f32 %v2498, %v2529
          %v2546 = vadd.f32 %v2499, %v2530
          %v2547 = vadd.f32 %v2500, %v2531
          %v2548 = vadd.f32 %v2501, %v2532
          %v2549 = vadd.f32 %v2502, %v2533
          %v2550 = vadd.f32 %v2503, %v2534
          %v2551 = vadd.f32 %v2504, %v2535
          %v2552 = vadd.f32 %v727, %v2536
          %v2553 = vadd.f32 %v728, %v2537
          %v2554 = vadd.f32 %v729, %v2538
          %v2555 = vadd.f32 %v730, %v2539
          %v2556 = vadd.f32 %v731, %v2540
          %v2557 = vadd.f32 %v732, %v2541
          %v2558 = vadd.f32 %v733, %v2542
          %v2559 = vadd.f32 %v734, %v2543
          %v2560 = vadd.f32 %v735, %v2544
          %v2561 = vadd.f32 %v736, %v2545
          %v2562 = vadd.f32 %v737, %v2546
          %v2563 = vadd.f32 %v738, %v2547
          %v2564 = vadd.f32 %v739, %v2548
          %v2565 = vadd.f32 %v740, %v2549
          %v2566 = vadd.f32 %v1625, %v2550
          %v2567 = vadd.f32 %v1626, %v2551
          %2568 = vst [vmem:[%s239] sm:$0xff] %v2552
          %2569 = vst.msk [vmem:[%s239 + $0x8] sm:$0xff] %vm719, %v2553
          %2570 = vst [vmem:[%s239 + $0x10] sm:$0xff] %v2554
          %2571 = vst.msk [vmem:[%s239 + $0x18] sm:$0xff] %vm719, %v2555
          %2572 = vst [vmem:[%s239 + $0x20] sm:$0xff] %v2556
          %2573 = vst.msk [vmem:[%s239 + $0x28] sm:$0xff] %vm719, %v2557
          %2574 = vst [vmem:[%s239 + $0x30] sm:$0xff] %v2558
          %2575 = vst.msk [vmem:[%s239 + $0x38] sm:$0xff] %vm719, %v2559
          %2576 = vst [vmem:[%s239 + $0x40] sm:$0xff] %v2560
          %2577 = vst.msk [vmem:[%s239 + $0x48] sm:$0xff] %vm719, %v2561
          %2578 = vst [vmem:[%s239 + $0x50] sm:$0xff] %v2562
          %2579 = vst.msk [vmem:[%s239 + $0x58] sm:$0xff] %vm719, %v2563
          %2580 = vst [vmem:[%s239 + $0x60] sm:$0xff] %v2564
          %2581 = vst.msk [vmem:[%s239 + $0x68] sm:$0xff] %vm719, %v2565
          %2582 = vst [vmem:[%s239 + $0x70] sm:$0xff] %v2566
          %2583 = vst.msk [vmem:[%s239 + $0x78] sm:$0xff] %vm719, %v2567
        $region44: #{mossformer_module_forward.8} parent=35 // pred_fallthru
          _
        %v2584 = vld [vmem:[#allocation2 + $0x80] sm:$0xff]
        %v2585 = vld [vmem:[#allocation2 + $0x88] sm:$0xff]
        %2586 = vst [vmem:[#allocation2] sm:$0xff] %v2584
        %2587 = vst.msk [vmem:[#allocation2 + $0x8] sm:$0xff] %vm719, %v2585
        %2588 = vst [vmem:[#allocation2 + $0x10] sm:$0xff] %v677
        %2589 = vst.msk [vmem:[#allocation2 + $0x18] sm:$0xff] %vm719, %v678
        %2590 = vst [vmem:[#allocation2 + $0x20] sm:$0xff] %v679
        %2591 = vst.msk [vmem:[#allocation2 + $0x28] sm:$0xff] %vm719, %v680
        %2592 = vst [vmem:[#allocation2 + $0x30] sm:$0xff] %v681
        %2593 = vst.msk [vmem:[#allocation2 + $0x38] sm:$0xff] %vm719, %v682
        %2594 = vst [vmem:[#allocation2 + $0x40] sm:$0xff] %v683
        %2595 = vst.msk [vmem:[#allocation2 + $0x48] sm:$0xff] %vm719, %v684
        %2596 = vst [vmem:[#allocation2 + $0x50] sm:$0xff] %v685
        %2597 = vst.msk [vmem:[#allocation2 + $0x58] sm:$0xff] %vm719, %v686
        %2598 = vst [vmem:[#allocation2 + $0x60] sm:$0xff] %v687
        %2599 = vst.msk [vmem:[#allocation2 + $0x68] sm:$0xff] %vm719, %v688
        %2600 = vst [vmem:[#allocation2 + $0x70] sm:$0xff] %v689
        %2601 = vst.msk [vmem:[#allocation2 + $0x78] sm:$0xff] %vm719, %v690
        %2602 = vst [vmem:[#allocation2 + $0x80] sm:$0xff] %v691
        %2603 = vst.msk [vmem:[#allocation2 + $0x88] sm:$0xff] %vm719, %v692
        %s2604 = sand.u32 %s138, 1
        %s2605 = sand.u32 %s138, 1
        %s2606 = smul.addr %s2605, 128
        %s2607 = scalar_lea.vmem [#allocation3], %s2606
        // Predicated region
        $region45: #{mossformer_module_forward.8} parent=35 // pred_check
          %p2608 = pneg %p148
        $region46: #{mossformer_module_forward.8} parent=35 // pred_check_branch
          %2610 = sbr.rel (%p2608) target = $region48
        $region47: #{mossformer_module_forward.8} parent=35 // pred_region
          %s2611 = ssub.s32 %s20, 1
          %p2612 = scmp.gt.s32.totalorder %s2611, 0
          %s2613 = scalar_select %p2612, %s2611, 0
          %s2614 = smul.u32 8, %s2613
          %s2615 = ssub.s32 12, %s2614
          %p2616 = scmp.lt.s32.totalorder %s2615, 8
          %s2617 = scalar_select %p2616, %s2615, 8
          %s2618 = smul.u32 128, %s2617
          %s2619 = smul.u32 %s2618, 2
          %p2620 = scmp.ne.s32.totalorder 0, %s2619
          %s2621 = smul.addr %s2614, 2
          %s2622 = smul.addr %s19, 24
          %s2623 = sadd.s32 %s2621, %s2622
          %s2624 = smul.addr %s2623, 8
          %s2625 = scalar_lea.vmem %s4, %s2624
          // Predicated region
          $region49: #{mossformer_module_forward.8} parent=47 // pred_check
            %p2626 = pneg %p2620
          $region50: #{mossformer_module_forward.8} parent=47 // pred_check_branch
            %2628 = sbr.rel (%p2626) target = $region52
          $region51: #{mossformer_module_forward.8} parent=47 // pred_region
            // Predicated region
            $region53: #{mossformer_module_forward.8} parent=51 // pred_check
              _
            $region54: #{mossformer_module_forward.8} parent=51 // pred_check_branch
              %2630 = sbr.rel (0) target = $region56
            $region55: #{mossformer_module_forward.8} parent=51 // pred_region
              %s2631 = sshrl.u32 %s2617, 3
              // While loop
              $region57: #{mossformer_module_forward.8} parent=55 // loop_pre_header
                _
              $region58: #{mossformer_module_forward.8} parent=55 // loop_header
                %s2633 = sphi 0, %s2635
                %p2634 = scmp.ge.s32.totalorder %s2633, %s2631
                %s2638 = sphi 0, %s2675
                %s2639 = sphi %s2607, %s2678
                %s2640 = sphi %s2625, %s2679
              $region59: #{mossformer_module_forward.8} parent=55 // loop_header_branch
                %2637 = sbr.rel (%p2634) target = $region63
              $region60: #{mossformer_module_forward.8} parent=55 // loop_body
                %v2641 = vld [vmem:[%s2639] sm:$0xff]
                %2642 = vst [vmem:[%s2640] sm:$0xff] %v2641
                %v2643 = vld [vmem:[%s2639 + $0x10] sm:$0xff]
                %2644 = vst [vmem:[%s2640 + $0x10] sm:$0xff] %v2643
                %v2645 = vld [vmem:[%s2639 + $0x20] sm:$0xff]
                %2646 = vst [vmem:[%s2640 + $0x20] sm:$0xff] %v2645
                %v2647 = vld [vmem:[%s2639 + $0x30] sm:$0xff]
                %2648 = vst [vmem:[%s2640 + $0x30] sm:$0xff] %v2647
                %v2649 = vld [vmem:[%s2639 + $0x40] sm:$0xff]
                %2650 = vst [vmem:[%s2640 + $0x40] sm:$0xff] %v2649
                %v2651 = vld [vmem:[%s2639 + $0x50] sm:$0xff]
                %2652 = vst [vmem:[%s2640 + $0x50] sm:$0xff] %v2651
                %v2653 = vld [vmem:[%s2639 + $0x60] sm:$0xff]
                %2654 = vst [vmem:[%s2640 + $0x60] sm:$0xff] %v2653
                %v2655 = vld [vmem:[%s2639 + $0x70] sm:$0xff]
                %2656 = vst [vmem:[%s2640 + $0x70] sm:$0xff] %v2655
                %v2657 = vld [vmem:[%s2639 + $0x8] sm:$0xff]
                %2658 = vst [vmem:[%s2640 + $0x8] sm:$0xff] %v2657
                %v2659 = vld [vmem:[%s2639 + $0x18] sm:$0xff]
                %2660 = vst [vmem:[%s2640 + $0x18] sm:$0xff] %v2659
                %v2661 = vld [vmem:[%s2639 + $0x28] sm:$0xff]
                %2662 = vst [vmem:[%s2640 + $0x28] sm:$0xff] %v2661
                %v2663 = vld [vmem:[%s2639 + $0x38] sm:$0xff]
                %2664 = vst [vmem:[%s2640 + $0x38] sm:$0xff] %v2663
                %v2665 = vld [vmem:[%s2639 + $0x48] sm:$0xff]
                %2666 = vst [vmem:[%s2640 + $0x48] sm:$0xff] %v2665
                %v2667 = vld [vmem:[%s2639 + $0x58] sm:$0xff]
                %2668 = vst [vmem:[%s2640 + $0x58] sm:$0xff] %v2667
                %v2669 = vld [vmem:[%s2639 + $0x68] sm:$0xff]
                %2670 = vst [vmem:[%s2640 + $0x68] sm:$0xff] %v2669
                %v2671 = vld [vmem:[%s2639 + $0x78] sm:$0xff]
                %2672 = vst [vmem:[%s2640 + $0x78] sm:$0xff] %v2671
                %s2673 = sadd.s32 1, %s2638
                %p2674 = scmp.ge.s32.totalorder %s2673, %s2631
                %s2675 = scalar_select %p2674, 0, %s2673
                %s2676 = smul.u32 %s2675, 128
                %s2677 = smul.u32 %s2675, 128
                %s2678 = scalar_lea.vmem %s2607, %s2676 [#allocation3]
                %s2679 = scalar_lea.vmem %s2625, %s2677
              $region61: #{mossformer_module_forward.8} parent=55 // loop_footer
                %s2635 = sadd.s32 %s2633, 1
              $region62: #{mossformer_module_forward.8} parent=55 // loop_footer_branch
                %2632 = sbr.rel target = $region58
              $region63: #{mossformer_module_forward.8} parent=55 // loop_exit
                _
              %s2680 = sshrl.u32 %s2617, 3
              %s2681 = sand.u32 %s2617, 7
              %s2682 = smul.u32 %s2680, 8
              %s2683 = smul.u32 16, %s2682
              %s2684 = scalar_lea.vmem %s2607, %s2683 [#allocation3]
              %s2685 = smul.u32 16, %s2682
              %s2686 = scalar_lea.vmem %s2625, %s2685
              // While loop
              $region64: #{mossformer_module_forward.8} parent=55 // loop_pre_header
                _
              $region65: #{mossformer_module_forward.8} parent=55 // loop_header
                %s2688 = sphi 0, %s2690
                %p2689 = scmp.ge.s32.totalorder %s2688, %s2681
                %s2693 = sphi 0, %s2702
                %s2694 = sphi %s2684, %s2705
                %s2695 = sphi %s2686, %s2706
              $region66: #{mossformer_module_forward.8} parent=55 // loop_header_branch
                %2692 = sbr.rel (%p2689) target = $region70
              $region67: #{mossformer_module_forward.8} parent=55 // loop_body
                %v2696 = vld [vmem:[%s2694] sm:$0xff]
                %2697 = vst [vmem:[%s2695] sm:$0xff] %v2696
                %v2698 = vld [vmem:[%s2694 + $0x8] sm:$0xff]
                %2699 = vst [vmem:[%s2695 + $0x8] sm:$0xff] %v2698
                %s2700 = sadd.s32 1, %s2693
                %p2701 = scmp.ge.s32.totalorder %s2700, %s2681
                %s2702 = scalar_select %p2701, 0, %s2700
                %s2703 = smul.u32 %s2702, 16
                %s2704 = smul.u32 %s2702, 16
                %s2705 = scalar_lea.vmem %s2684, %s2703 [#allocation3]
                %s2706 = scalar_lea.vmem %s2686, %s2704
              $region68: #{mossformer_module_forward.8} parent=55 // loop_footer
                %s2690 = sadd.s32 %s2688, 1
              $region69: #{mossformer_module_forward.8} parent=55 // loop_footer_branch
                %2687 = sbr.rel target = $region65
              $region70: #{mossformer_module_forward.8} parent=55 // loop_exit
                _
            $region56: #{mossformer_module_forward.8} parent=51 // pred_fallthru
              _
            // Predicated region
            $region71: #{mossformer_module_forward.8} parent=51 // pred_check
              _
            $region72: #{mossformer_module_forward.8} parent=51 // pred_check_branch
              %2708 = sbr.rel target = $region74
            $region73: #{mossformer_module_forward.8} parent=51 // pred_region
              _
            $region74: #{mossformer_module_forward.8} parent=51 // pred_fallthru
              _
          $region52: #{mossformer_module_forward.8} parent=47 // pred_fallthru
            _
          %2709 = vnop
        $region48: #{mossformer_module_forward.8} parent=35 // pred_fallthru
          _
      $region36: #{mossformer_module_forward.8} parent=5 // pred_fallthru
        _
      %p2710 = scmp.le.s32.totalorder 2, %s10
      // Predicated region
      $region75: #{mossformer_module_forward.8} parent=5 // pred_check
        %p2711 = pneg %p2710
      $region76: #{mossformer_module_forward.8} parent=5 // pred_check_branch
        %2713 = sbr.rel (%p2711) target = $region78
      $region77: #{mossformer_module_forward.8} parent=5 // pred_region
        %s2714 = ssub.s32 %s10, 2
        // Predicated region
        $region79: #{mossformer_module_forward.8} parent=77 // pred_check
          %p2715 = pneg %p154
        $region80: #{mossformer_module_forward.8} parent=77 // pred_check_branch
          %2717 = sbr.rel (%p2715) target = $region82
        $region81: #{mossformer_module_forward.8} parent=77 // pred_region
          %s2718 = sand.u32 %s139, 1
          %s2719 = sand.u32 %s139, 1
          %s2720 = smul.addr %s2719, 128
          %s2721 = scalar_lea.vmem [#allocation3], %s2720
        $region82: #{mossformer_module_forward.8} parent=77 // pred_fallthru
          _
      $region78: #{mossformer_module_forward.8} parent=5 // pred_fallthru
        _
    $region6: #{mossformer_module_forward.8} parent=1 // loop_footer
      %s14 = sadd.s32 1, %s10
    $region7: #{mossformer_module_forward.8} parent=1 // loop_footer_branch
      %9 = sbr.rel target = $region3
    $region8: #{mossformer_module_forward.8} parent=1 // loop_exit
      _

// kernel: mossformer_module_forward.9
$region0: #{mossformer_module_forward.9}
  #allocation0 [shape = 'u32[]', space=smem, size = 0x4, offset = 0x4, fixed_abs, tag = 'smem constant byte address 0x4 - core index']
  #allocation1 [shape = 'u32[144,128]{1,0:T(1,128)}', space=vmem, size = 0x12000, scoped, tag = 'internal scratch']
  %s0 = inlined_call_operand.vmem [shape: bf16[2,128,64], index: 0, kind: input, shape index: {}]
  %s1 = inlined_call_operand.vmem [shape: f32[2,128,128], index: 1, kind: input, shape index: {}]
  %s2 = inlined_call_operand.vmem [shape: f32[2,64,128], index: 2, kind: output, shape index: {}]
  %s3 = sld [smem:[#allocation0]]
  $region49: #{mossformer_module_forward.9} parent=0
    _
  %s5 = ssub.s32 1, %s3
  %s6 = scalar_select 0, %s5, %s3
  loop: start=0, step=1, limit=4
  $region2: #{mossformer_module_forward.9} parent=0 // loop_pre_header
    _
  $region3: #{mossformer_module_forward.9} parent=0 // loop_header
    %s8 = sphi 0, %s12
    %p9 = scmp.ge.s32.totalorder %s8, 4
    %s15 = sphi 0, %s27
    %s16 = sphi 0, %s23
    %s17 = sphi 0, %s15
    %s18 = sphi 0, %s16
    %s19 = sphi 0, %s17
    %s20 = sphi 0, %s18
    %s32 = sphi 0, %s34
    %s35 = sphi 0, %s32
    %s36 = sphi 0, %s35
    %s52 = sphi 0, %s36
    %s60 = sphi 0, %s62
    %s63 = sphi 0, %s60
    %s64 = sphi 0, %s63
    %s80 = sphi 0, %s64
    %s86 = sphi 0, %s88
    %s89 = sphi 0, %s86
    %s90 = sphi 0, %s89
    %s106 = sphi 0, %s90
  $region4: #{mossformer_module_forward.9} parent=0 // loop_header_branch
    %11 = sbr.rel (%p9) target = $region8
  $region5: #{mossformer_module_forward.9} parent=0 // loop_body
    %s13 = ssub.s32 %s8, 1
    %s14 = ssub.s32 %s8, 2
    %s21 = sadd.s32 1, %s16
    %p22 = scmp.ge.s32.totalorder %s21, 1
    %s23 = scalar_select %p22, 0, %s21
    %s24 = sadd.s32 1, %s15
    %s25 = scalar_select %p22, %s24, %s15
    %p26 = scmp.ge.s32.totalorder %s25, 2
    %s27 = scalar_select %p26, 0, %s25
    %s28 = ssub.s32 %s15, %s27
    %s29 = ssub.s32 %s16, %s23
    %s30 = sor.u32 %s28, %s29
    %p31 = scmp.eq.s32.totalorder %s30, 0
    %s33 = sadd.s32 %s32, 1
    %s34 = scalar_select %p31, %s32, %s33
    %p37 = pneg %p31
    %p38 = scmp.eq.s32.totalorder %s8, 1
    %p39 = por %p37, %p38
    %p40 = scmp.ne.s32.totalorder %s32, %s35
    %p41 = scmp.eq.s32.totalorder %s8, 0
    %p42 = por %p40, %p41
    %p43 = scmp.ne.s32.totalorder %s32, %s35
    %p44 = scmp.eq.s32.totalorder %s13, 1
    %p45 = por %p43, %p44
    %p46 = scmp.ne.s32.totalorder %s35, %s36
    %p47 = scmp.eq.s32.totalorder %s13, 0
    %p48 = por %p46, %p47
    %p49 = scmp.ne.s32.totalorder %s35, %s36
    %p50 = scmp.eq.s32.totalorder %s14, 1
    %p51 = por %p49, %p50
    %p53 = scmp.ne.s32.totalorder %s36, %s52
    %p54 = scmp.eq.s32.totalorder %s14, 0
    %p55 = por %p53, %p54
    %s56 = ssub.s32 %s15, %s27
    %s57 = ssub.s32 %s16, %s23
    %s58 = sor.u32 %s56, %s57
    %p59 = scmp.eq.s32.totalorder %s58, 0
    %s61 = sadd.s32 %s60, 1
    %s62 = scalar_select %p59, %s60, %s61
    %p65 = pneg %p59
    %p66 = scmp.eq.s32.totalorder %s8, 1
    %p67 = por %p65, %p66
    %p68 = scmp.ne.s32.totalorder %s60, %s63
    %p69 = scmp.eq.s32.totalorder %s8, 0
    %p70 = por %p68, %p69
    %p71 = scmp.ne.s32.totalorder %s60, %s63
    %p72 = scmp.eq.s32.totalorder %s13, 1
    %p73 = por %p71, %p72
    %p74 = scmp.ne.s32.totalorder %s63, %s64
    %p75 = scmp.eq.s32.totalorder %s13, 0
    %p76 = por %p74, %p75
    %p77 = scmp.ne.s32.totalorder %s63, %s64
    %p78 = scmp.eq.s32.totalorder %s14, 1
    %p79 = por %p77, %p78
    %p81 = scmp.ne.s32.totalorder %s64, %s80
    %p82 = scmp.eq.s32.totalorder %s14, 0
    %p83 = por %p81, %p82
    %s84 = ssub.s32 %s15, %s27
    %p85 = scmp.eq.s32.totalorder %s84, 0
    %s87 = sadd.s32 %s86, 1
    %s88 = scalar_select %p85, %s86, %s87
    %p91 = pneg %p85
    %p92 = scmp.eq.s32.totalorder %s8, 1
    %p93 = por %p91, %p92
    %p94 = scmp.ne.s32.totalorder %s86, %s89
    %p95 = scmp.eq.s32.totalorder %s8, 0
    %p96 = por %p94, %p95
    %p97 = scmp.ne.s32.totalorder %s86, %s89
    %p98 = scmp.eq.s32.totalorder %s13, 1
    %p99 = por %p97, %p98
    %p100 = scmp.ne.s32.totalorder %s89, %s90
    %p101 = scmp.eq.s32.totalorder %s13, 0
    %p102 = por %p100, %p101
    %p103 = scmp.ne.s32.totalorder %s89, %s90
    %p104 = scmp.eq.s32.totalorder %s14, 1
    %p105 = por %p103, %p104
    %p107 = scmp.ne.s32.totalorder %s90, %s106
    %p108 = scmp.eq.s32.totalorder %s14, 0
    %p109 = por %p107, %p108
    %p110 = scmp.le.s32.totalorder 1, %s8
    %p111 = scmp.lt.s32.totalorder %s8, 3
    %p112 = pnand %p110, %p111
    %p113 = pneg %p112
    // Predicated region
    $region9: #{mossformer_module_forward.9} parent=5 // pred_check
      _
    $region10: #{mossformer_module_forward.9} parent=5 // pred_check_branch
      %115 = sbr.rel (%p112) target = $region12
    $region11: #{mossformer_module_forward.9} parent=5 // pred_region
      %s116 = ssub.s32 %s8, 1
    $region12: #{mossformer_module_forward.9} parent=5 // pred_fallthru
      _
    %p117 = scmp.lt.s32.totalorder %s8, 2
    // Predicated region
    $region13: #{mossformer_module_forward.9} parent=5 // pred_check
      %p118 = pneg %p117
    $region14: #{mossformer_module_forward.9} parent=5 // pred_check_branch
      %120 = sbr.rel (%p118) target = $region16
    $region15: #{mossformer_module_forward.9} parent=5 // pred_region
      // Predicated region
      $region17: #{mossformer_module_forward.9} parent=15 // pred_check
        %p121 = pneg %p42
      $region18: #{mossformer_module_forward.9} parent=15 // pred_check_branch
        %123 = sbr.rel (%p121) target = $region20
      $region19: #{mossformer_module_forward.9} parent=15 // pred_region
        %s124 = smul.u32 16, %s16
        %p125 = scmp.lt.s32.totalorder %s15, 1
        %s126 = scalar_select %p125, %s15, 1
        %p127 = scmp.lt.s32.totalorder %s124, 15
        %s128 = scalar_select %p127, %s124, 15
        %s129 = smul.addr %s126, 16
        %s130 = sadd.s32 %s128, %s129
        %s131 = smul.addr %s130, 4
        %s132 = scalar_lea.vmem %s0, %s131
        %s133 = smul.u32 16, %s16
      $region20: #{mossformer_module_forward.9} parent=15 // pred_fallthru
        _
      // Predicated region
      $region21: #{mossformer_module_forward.9} parent=15 // pred_check
        %p134 = pneg %p70
      $region22: #{mossformer_module_forward.9} parent=15 // pred_check_branch
        %136 = sbr.rel (%p134) target = $region24
      $region23: #{mossformer_module_forward.9} parent=15 // pred_region
        %s137 = smul.u32 16, %s16
        %p138 = scmp.lt.s32.totalorder %s15, 1
        %s139 = scalar_select %p138, %s15, 1
        %p140 = scmp.lt.s32.totalorder %s137, 15
        %s141 = scalar_select %p140, %s137, 15
        %s142 = smul.addr %s139, 16
        %s143 = sadd.s32 %s141, %s142
        %s144 = smul.addr %s143, 8
        %s145 = scalar_lea.vmem %s1, %s144
        %s146 = smul.u32 16, %s16
      $region24: #{mossformer_module_forward.9} parent=15 // pred_fallthru
        _
    $region16: #{mossformer_module_forward.9} parent=5 // pred_fallthru
      _
    %p147 = scmp.le.s32.totalorder 1, %s8
    %p148 = scmp.lt.s32.totalorder %s8, 3
    %p149 = pnand %p147, %p148
    %p150 = pneg %p149
    // Predicated region
    $region25: #{mossformer_module_forward.9} parent=5 // pred_check
      _
    $region26: #{mossformer_module_forward.9} parent=5 // pred_check_branch
      %152 = sbr.rel (%p149) target = $region28
    $region27: #{mossformer_module_forward.9} parent=5 // pred_region
      %s153 = ssub.s32 %s8, 1
      %s154 = smul.u32 16, %s18
      %p155 = scmp.lt.s32.totalorder %s17, 1
      %s156 = scalar_select %p155, %s17, 1
      %p157 = scmp.lt.s32.totalorder %s154, 15
      %s158 = scalar_select %p157, %s154, 15
      %s159 = smul.addr %s156, 16
      %s160 = sadd.s32 %s158, %s159
      %s161 = smul.addr %s160, 4
      %s162 = scalar_lea.vmem %s0, %s161
      %p163 = pneg %p48
      %p164 = pneg %p45
      %s165 = smul.u32 16, %s18
      %p166 = scmp.lt.s32.totalorder %s17, 1
      %s167 = scalar_select %p166, %s17, 1
      %p168 = scmp.lt.s32.totalorder %s165, 15
      %s169 = scalar_select %p168, %s165, 15
      %s170 = smul.addr %s167, 16
      %s171 = sadd.s32 %s169, %s170
      %s172 = smul.addr %s171, 8
      %s173 = scalar_lea.vmem %s1, %s172
      %p174 = pneg %p76
      %p175 = pneg %p73
      %p176 = pneg %p102
      %p177 = pneg %p99
      %p178 = scmp.lt.s32.totalorder %s17, 1
      %s179 = scalar_select %p178, %s17, 1
      %s180 = smul.addr %s179, 8
      %s181 = smul.addr %s180, 8
      %s182 = scalar_lea.vmem %s2, %s181
      %s183 = smul.u32 16, %s18
      %p184 = scmp.lt.s32.totalorder %s17, 1
      %s185 = scalar_select %p184, %s17, 1
      %p186 = scmp.lt.s32.totalorder %s183, 15
      %s187 = scalar_select %p186, %s183, 15
      %s188 = smul.addr %s185, 16
      %s189 = sadd.s32 %s187, %s188
      %s190 = smul.addr %s189, 4
      %s191 = scalar_lea.vmem %s0, %s190
      %s192 = smul.u32 16, %s18
      %s193 = smul.u32 16, %s18
      %p194 = scmp.lt.s32.totalorder %s17, 1
      %s195 = scalar_select %p194, %s17, 1
      %p196 = scmp.lt.s32.totalorder %s193, 15
      %s197 = scalar_select %p196, %s193, 15
      %s198 = smul.addr %s195, 16
      %s199 = sadd.s32 %s197, %s198
      %s200 = smul.addr %s199, 8
      %s201 = scalar_lea.vmem %s1, %s200
      %s202 = smul.u32 16, %s18
      %p203 = scmp.lt.s32.totalorder %s17, 1
      %s204 = scalar_select %p203, %s17, 1
      %s205 = smul.addr %s204, 8
      %s206 = smul.addr %s205, 8
      %s207 = scalar_lea.vmem %s2, %s206
      %p209 = scmp.eq.s32.totalorder %s18, 0
      // Predicated region
      $region29: #{mossformer_module_forward.9} parent=27 // pred_check
        %p210 = pneg %p209
      $region30: #{mossformer_module_forward.9} parent=27 // pred_check_branch
        %212 = sbr.rel (%p210) target = $region32
      $region31: #{mossformer_module_forward.9} parent=27 // pred_region
        %213 = vst [vmem:[%s207] sm:$0xff] 0.0
        %214 = vst [vmem:[%s207 + $0x8] sm:$0xff] 0.0
        %215 = vst [vmem:[%s207 + $0x10] sm:$0xff] 0.0
        %216 = vst [vmem:[%s207 + $0x18] sm:$0xff] 0.0
        %217 = vst [vmem:[%s207 + $0x20] sm:$0xff] 0.0
        %218 = vst [vmem:[%s207 + $0x28] sm:$0xff] 0.0
        %219 = vst [vmem:[%s207 + $0x30] sm:$0xff] 0.0
        %220 = vst [vmem:[%s207 + $0x38] sm:$0xff] 0.0
      $region32: #{mossformer_module_forward.9} parent=27 // pred_fallthru
        _
      %v221 = vld [vmem:[%s191] sm:$0xf]
      %v222 = vld [vmem:[%s191 + $0x4] sm:$0xf]
      %v223 = vld [vmem:[%s191 + $0x8] sm:$0xf]
      %v224 = vld [vmem:[%s191 + $0xc] sm:$0xf]
      %v225 = vld [vmem:[%s191 + $0x10] sm:$0xf]
      %v226 = vld [vmem:[%s191 + $0x14] sm:$0xf]
      %v227 = vld [vmem:[%s191 + $0x18] sm:$0xf]
      %v228 = vld [vmem:[%s191 + $0x1c] sm:$0xf]
      %v229 = vld [vmem:[%s191 + $0x20] sm:$0xf]
      %v230 = vld [vmem:[%s191 + $0x24] sm:$0xf]
      %v231 = vld [vmem:[%s191 + $0x28] sm:$0xf]
      %v232 = vld [vmem:[%s191 + $0x2c] sm:$0xf]
      %v233 = vld [vmem:[%s191 + $0x30] sm:$0xf]
      %v234 = vld [vmem:[%s191 + $0x34] sm:$0xf]
      %v235 = vld [vmem:[%s191 + $0x38] sm:$0xf]
      %v236 = vld [vmem:[%s191 + $0x3c] sm:$0xf]
      %v237 = vld [vmem:[%s201] sm:$0xff]
      %v238 = vld [vmem:[%s201 + $0x8] sm:$0xff]
      %v239 = vld [vmem:[%s201 + $0x10] sm:$0xff]
      %v240 = vld [vmem:[%s201 + $0x18] sm:$0xff]
      %v241 = vld [vmem:[%s201 + $0x20] sm:$0xff]
      %v242 = vld [vmem:[%s201 + $0x28] sm:$0xff]
      %v243 = vld [vmem:[%s201 + $0x30] sm:$0xff]
      %v244 = vld [vmem:[%s201 + $0x38] sm:$0xff]
      %v245 = vld [vmem:[%s201 + $0x40] sm:$0xff]
      %v246 = vld [vmem:[%s201 + $0x48] sm:$0xff]
      %v247 = vld [vmem:[%s201 + $0x50] sm:$0xff]
      %v248 = vld [vmem:[%s201 + $0x58] sm:$0xff]
      %v249 = vld [vmem:[%s201 + $0x60] sm:$0xff]
      %v250 = vld [vmem:[%s201 + $0x68] sm:$0xff]
      %v251 = vld [vmem:[%s201 + $0x70] sm:$0xff]
      %v252 = vld [vmem:[%s201 + $0x78] sm:$0xff]
      %v253 = vpack.c.bf16 %v238, %v237
      %v254 = vpack.c.bf16 %v240, %v239
      %v255 = vpack.c.bf16 %v242, %v241
      %v256 = vpack.c.bf16 %v244, %v243
      %v257 = vpack.c.bf16 %v246, %v245
      %v258 = vpack.c.bf16 %v248, %v247
      %v259 = vpack.c.bf16 %v250, %v249
      %v260 = vpack.c.bf16 %v252, %v251
      %v261 = vld [vmem:[%s207] sm:$0xff]
      %v262 = vld [vmem:[%s207 + $0x8] sm:$0xff]
      %v263 = vld [vmem:[%s207 + $0x10] sm:$0xff]
      %v264 = vld [vmem:[%s207 + $0x18] sm:$0xff]
      %v265 = vld [vmem:[%s207 + $0x20] sm:$0xff]
      %v266 = vld [vmem:[%s207 + $0x28] sm:$0xff]
      %v267 = vld [vmem:[%s207 + $0x30] sm:$0xff]
      %v268 = vld [vmem:[%s207 + $0x38] sm:$0xff]
      %v285 = vunpack.c.l.b16 %v221
      %v286 = vunpack.c.l.b16 %v222
      %v287 = vunpack.c.l.b16 %v223
      %v288 = vunpack.c.l.b16 %v224
      %v289 = vunpack.c.l.b16 %v225
      %v290 = vunpack.c.l.b16 %v226
      %v291 = vunpack.c.l.b16 %v227
      %v292 = vunpack.c.l.b16 %v228
      %v293 = vunpack.c.l.b16 %v229
      %v294 = vunpack.c.l.b16 %v230
      %v295 = vunpack.c.l.b16 %v231
      %v296 = vunpack.c.l.b16 %v232
      %v297 = vunpack.c.l.b16 %v233
      %v298 = vunpack.c.l.b16 %v234
      %v299 = vunpack.c.l.b16 %v235
      %v300 = vunpack.c.l.b16 %v236
      %v301 = vpack.c.b16 %v286, %v285
      %v302 = vpack.c.b16 %v288, %v287
      %v303 = vpack.c.b16 %v290, %v289
      %v304 = vpack.c.b16 %v292, %v291
      %v305 = vpack.c.b16 %v294, %v293
      %v306 = vpack.c.b16 %v296, %v295
      %v307 = vpack.c.b16 %v298, %v297
      %v308 = vpack.c.b16 %v300, %v299
      %317 = vxpose.xlu0.c.b16.start [1/8] %v301, 128
      %318 = vxpose.xlu0.c.b16.cont [2/8] %v302, 128
      %319 = vxpose.xlu0.c.b16.cont [3/8] %v303, 128
      %320 = vxpose.xlu0.c.b16.cont [4/8] %v304, 128
      %321 = vxpose.xlu0.c.b16.cont [5/8] %v305, 128
      %322 = vxpose.xlu0.c.b16.cont [6/8] %v306, 128
      %323 = vxpose.xlu0.c.b16.cont [7/8] %v307, 128
      %324 = vxpose.xlu0.c.b16.end [8/8] %v308, 128
      %v325 = vpop.trf.xlu0
      %v326 = vpop.trf.xlu0
      %v327 = vpop.trf.xlu0
      %v328 = vpop.trf.xlu0
      %v329 = vpop.trf.xlu0
      %v330 = vpop.trf.xlu0
      %v331 = vpop.trf.xlu0
      %v332 = vpop.trf.xlu0
      %333 = vmatprep.subr.bf16.mxu0 0
      %334 = vmatpush1.bf16.msra.mxu0 %v260
      %335 = vmatprep.subr.bf16.mxu0 0
      %336 = vmatpush1.bf16.msra.mxu0 %v259
      %337 = vmatprep.subr.bf16.mxu0 0
      %338 = vmatpush1.bf16.msra.mxu0 %v258
      %339 = vmatprep.subr.bf16.mxu0 0
      %340 = vmatpush1.bf16.msra.mxu0 %v257
      %341 = vmatprep.subr.bf16.mxu0 0
      %342 = vmatpush1.bf16.msra.mxu0 %v256
      %343 = vmatprep.subr.bf16.mxu0 0
      %344 = vmatpush1.bf16.msra.mxu0 %v255
      %345 = vmatprep.subr.bf16.mxu0 0
      %346 = vmatpush1.bf16.msra.mxu0 %v254
      %347 = vmatprep.subr.bf16.mxu0 0
      %348 = vmatpush1.bf16.msra.mxu0 %v253
      %349 = vmatprep.subr.bf16.mxu0 0
      %350 = vmatpush2.bf16.msra.mxu0 0
      %351 = vmatprep.subr.bf16.mxu0 0
      %352 = vmatpush2.bf16.msra.mxu0 0
      %353 = vmatprep.subr.bf16.mxu0 0
      %354 = vmatpush2.bf16.msra.mxu0 0
      %355 = vmatprep.subr.bf16.mxu0 0
      %356 = vmatpush2.bf16.msra.mxu0 0
      %357 = vmatprep.subr.bf16.mxu0 0
      %358 = vmatpush2.bf16.msra.mxu0 0
      %359 = vmatprep.subr.bf16.mxu0 0
      %360 = vmatpush2.bf16.msra.mxu0 0
      %361 = vmatprep.subr.bf16.mxu0 0
      %362 = vmatpush2.bf16.msra.mxu0 0
      %363 = vmatprep.subr.bf16.mxu0 0
      %364 = vmatpush2.bf16.msra.mxu0 0
      %365 = vmatprep.mubr.bf16.mxu0 0
      %366 = vmatmul.mubr.bf16.gmra.mxu0 %v325
      %v367 = vpop.f32.mrf.mxu0
      %v368 = vadd.f32 0.0, %v367
      %v369 = vpop.f32.mrf.mxu0
      %v370 = vpop.f32.mrf.mxu0
      %v371 = vadd.f32 0.0, %v370
      %v372 = vpop.f32.mrf.mxu0
      %373 = vmatprep.mubr.bf16.mxu0 0
      %374 = vmatmul.mubr.bf16.gmra.mxu0 %v326
      %v375 = vpop.f32.mrf.mxu0
      %v376 = vadd.f32 0.0, %v375
      %v377 = vpop.f32.mrf.mxu0
      %v378 = vpop.f32.mrf.mxu0
      %v379 = vadd.f32 0.0, %v378
      %v380 = vpop.f32.mrf.mxu0
      %381 = vmatprep.mubr.bf16.mxu0 0
      %382 = vmatmul.mubr.bf16.gmra.mxu0 %v327
      %v383 = vpop.f32.mrf.mxu0
      %v384 = vadd.f32 0.0, %v383
      %v385 = vpop.f32.mrf.mxu0
      %v386 = vpop.f32.mrf.mxu0
      %v387 = vadd.f32 0.0, %v386
      %v388 = vpop.f32.mrf.mxu0
      %389 = vmatprep.mubr.bf16.mxu0 0
      %390 = vmatmul.mubr.bf16.gmra.mxu0 %v328
      %v391 = vpop.f32.mrf.mxu0
      %v392 = vadd.f32 0.0, %v391
      %v393 = vpop.f32.mrf.mxu0
      %v394 = vpop.f32.mrf.mxu0
      %v395 = vadd.f32 0.0, %v394
      %v396 = vpop.f32.mrf.mxu0
      %397 = vdwg.mxu0
      %v398 = vadd.f32 %v261, %v368
      %v399 = vadd.f32 %v262, %v371
      %v400 = vadd.f32 %v263, %v376
      %v401 = vadd.f32 %v264, %v379
      %v402 = vadd.f32 %v265, %v384
      %v403 = vadd.f32 %v266, %v387
      %v404 = vadd.f32 %v267, %v392
      %v405 = vadd.f32 %v268, %v395
      %406 = vst [vmem:[%s207] sm:$0xff] %v398
      %407 = vst [vmem:[%s207 + $0x8] sm:$0xff] %v399
      %408 = vst [vmem:[%s207 + $0x10] sm:$0xff] %v400
      %409 = vst [vmem:[%s207 + $0x18] sm:$0xff] %v401
      %410 = vst [vmem:[%s207 + $0x20] sm:$0xff] %v402
      %411 = vst [vmem:[%s207 + $0x28] sm:$0xff] %v403
      %412 = vst [vmem:[%s207 + $0x30] sm:$0xff] %v404
      %413 = vst [vmem:[%s207 + $0x38] sm:$0xff] %v405
      // Predicated region
      $region33: #{mossformer_module_forward.9} parent=27 // pred_check
        %p414 = pneg %p209
      $region34: #{mossformer_module_forward.9} parent=27 // pred_check_branch
        %416 = sbr.rel (%p414) target = $region36
      $region35: #{mossformer_module_forward.9} parent=27 // pred_region
        %v417 = vld [vmem:[%s207] sm:$0xff]
        %v418 = vld [vmem:[%s207 + $0x8] sm:$0xff]
        %v419 = vld [vmem:[%s207 + $0x10] sm:$0xff]
        %v420 = vld [vmem:[%s207 + $0x18] sm:$0xff]
        %v421 = vld [vmem:[%s207 + $0x20] sm:$0xff]
        %v422 = vld [vmem:[%s207 + $0x28] sm:$0xff]
        %v423 = vld [vmem:[%s207 + $0x30] sm:$0xff]
        %v424 = vld [vmem:[%s207 + $0x38] sm:$0xff]
        %v425 = vmul.f32 %v417, 0.010416667
        %v426 = vmul.f32 %v418, 0.010416667
        %v427 = vmul.f32 %v419, 0.010416667
        %v428 = vmul.f32 %v420, 0.010416667
        %v429 = vmul.f32 %v421, 0.010416667
        %v430 = vmul.f32 %v422, 0.010416667
        %v431 = vmul.f32 %v423, 0.010416667
        %v432 = vmul.f32 %v424, 0.010416667
        %433 = vst [vmem:[%s207] sm:$0xff] %v425
        %434 = vst [vmem:[%s207 + $0x8] sm:$0xff] %v426
        %435 = vst [vmem:[%s207 + $0x10] sm:$0xff] %v427
        %436 = vst [vmem:[%s207 + $0x18] sm:$0xff] %v428
        %437 = vst [vmem:[%s207 + $0x20] sm:$0xff] %v429
        %438 = vst [vmem:[%s207 + $0x28] sm:$0xff] %v430
        %439 = vst [vmem:[%s207 + $0x30] sm:$0xff] %v431
        %440 = vst [vmem:[%s207 + $0x38] sm:$0xff] %v432
      $region36: #{mossformer_module_forward.9} parent=27 // pred_fallthru
        _
      %p441 = scmp.lt.s32.totalorder %s17, 1
      %s442 = scalar_select %p441, %s17, 1
      %s443 = smul.addr %s442, 8
      %s444 = smul.addr %s443, 8
      %s445 = scalar_lea.vmem %s2, %s444
      // Predicated region
      $region37: #{mossformer_module_forward.9} parent=27 // pred_check
        %p446 = pneg %p99
      $region38: #{mossformer_module_forward.9} parent=27 // pred_check_branch
        %448 = sbr.rel (%p446) target = $region40
      $region39: #{mossformer_module_forward.9} parent=27 // pred_region
        _
      $region40: #{mossformer_module_forward.9} parent=27 // pred_fallthru
        _
    $region28: #{mossformer_module_forward.9} parent=5 // pred_fallthru
      _
    %p449 = scmp.le.s32.totalorder 2, %s8
    // Predicated region
    $region41: #{mossformer_module_forward.9} parent=5 // pred_check
      %p450 = pneg %p449
    $region42: #{mossformer_module_forward.9} parent=5 // pred_check_branch
      %452 = sbr.rel (%p450) target = $region44
    $region43: #{mossformer_module_forward.9} parent=5 // pred_region
      %s453 = ssub.s32 %s8, 2
      // Predicated region
      $region45: #{mossformer_module_forward.9} parent=43 // pred_check
        %p454 = pneg %p105
      $region46: #{mossformer_module_forward.9} parent=43 // pred_check_branch
        %456 = sbr.rel (%p454) target = $region48
      $region47: #{mossformer_module_forward.9} parent=43 // pred_region
        %p457 = scmp.lt.s32.totalorder %s19, 1
        %s458 = scalar_select %p457, %s19, 1
        %s459 = smul.addr %s458, 8
        %s460 = smul.addr %s459, 8
        %s461 = scalar_lea.vmem %s2, %s460
      $region48: #{mossformer_module_forward.9} parent=43 // pred_fallthru
        _
    $region44: #{mossformer_module_forward.9} parent=5 // pred_fallthru
      _
  $region6: #{mossformer_module_forward.9} parent=0 // loop_footer
    %s12 = sadd.s32 1, %s8
  $region7: #{mossformer_module_forward.9} parent=0 // loop_footer_branch
    %7 = sbr.rel target = $region3
  $region8: #{mossformer_module_forward.9} parent=0 // loop_exit
    _

// kernel: mossformer_module_forward.10
$region0: #{mossformer_module_forward.10}
  #allocation0 [shape = 'u32[]', space=smem, size = 0x4, offset = 0x4, fixed_abs, tag = 'smem constant byte address 0x4 - core index']
  #allocation1 [shape = 'u32[144,128]{1,0:T(1,128)}', space=vmem, size = 0x12000, scoped, tag = 'internal scratch']
  %s0 = inlined_call_operand.vmem [shape: bf16[2,2,64,64], index: 0, kind: input, shape index: {}]
  %s1 = inlined_call_operand.vmem [shape: bf16[2,2,64,64], index: 1, kind: input, shape index: {}]
  %s2 = inlined_call_operand.vmem [shape: bf16[2,2,64,64], index: 2, kind: input, shape index: {}]
  %s3 = inlined_call_operand.vmem [shape: f32[2,2,64,128], index: 3, kind: input, shape index: {}]
  %s4 = inlined_call_operand.vmem [shape: f32[2,64,128], index: 4, kind: input, shape index: {}]
  %s5 = inlined_call_operand.vmem [shape: f32[2,2,64,64], index: 5, kind: output, shape index: {}]
  %s6 = sld [smem:[#allocation0]]
  $region53: #{mossformer_module_forward.10} parent=0
    _
  %s8 = ssub.s32 1, %s6
  %s9 = scalar_select 0, %s8, %s6
  loop: start=0, step=1, limit=4
  $region2: #{mossformer_module_forward.10} parent=0 // loop_pre_header
    _
  $region3: #{mossformer_module_forward.10} parent=0 // loop_header
    %s11 = sphi 0, %s15
    %p12 = scmp.ge.s32.totalorder %s11, 4
    %s18 = sphi 0, %s30
    %s19 = sphi 0, %s26
    %s20 = sphi 0, %s18
    %s21 = sphi 0, %s19
    %s22 = sphi 0, %s20
    %s23 = sphi 0, %s21
    %s35 = sphi 0, %s37
    %s38 = sphi 0, %s35
    %s39 = sphi 0, %s38
    %s55 = sphi 0, %s39
    %s63 = sphi 0, %s65
    %s66 = sphi 0, %s63
    %s67 = sphi 0, %s66
    %s83 = sphi 0, %s67
    %s91 = sphi 0, %s93
    %s94 = sphi 0, %s91
    %s95 = sphi 0, %s94
    %s111 = sphi 0, %s95
    %s119 = sphi 0, %s121
    %s122 = sphi 0, %s119
    %s123 = sphi 0, %s122
    %s139 = sphi 0, %s123
    %s145 = sphi 0, %s147
    %s148 = sphi 0, %s145
    %s149 = sphi 0, %s148
    %s165 = sphi 0, %s149
    %s173 = sphi 0, %s175
    %s176 = sphi 0, %s173
    %s177 = sphi 0, %s176
    %s193 = sphi 0, %s177
  $region4: #{mossformer_module_forward.10} parent=0 // loop_header_branch
    %14 = sbr.rel (%p12) target = $region8
  $region5: #{mossformer_module_forward.10} parent=0 // loop_body
    %s16 = ssub.s32 %s11, 1
    %s17 = ssub.s32 %s11, 2
    %s24 = sadd.s32 1, %s19
    %p25 = scmp.ge.s32.totalorder %s24, 1
    %s26 = scalar_select %p25, 0, %s24
    %s27 = sadd.s32 1, %s18
    %s28 = scalar_select %p25, %s27, %s18
    %p29 = scmp.ge.s32.totalorder %s28, 2
    %s30 = scalar_select %p29, 0, %s28
    %s31 = ssub.s32 %s18, %s30
    %s32 = ssub.s32 %s19, %s26
    %s33 = sor.u32 %s31, %s32
    %p34 = scmp.eq.s32.totalorder %s33, 0
    %s36 = sadd.s32 %s35, 1
    %s37 = scalar_select %p34, %s35, %s36
    %p40 = pneg %p34
    %p41 = scmp.eq.s32.totalorder %s11, 1
    %p42 = por %p40, %p41
    %p43 = scmp.ne.s32.totalorder %s35, %s38
    %p44 = scmp.eq.s32.totalorder %s11, 0
    %p45 = por %p43, %p44
    %p46 = scmp.ne.s32.totalorder %s35, %s38
    %p47 = scmp.eq.s32.totalorder %s16, 1
    %p48 = por %p46, %p47
    %p49 = scmp.ne.s32.totalorder %s38, %s39
    %p50 = scmp.eq.s32.totalorder %s16, 0
    %p51 = por %p49, %p50
    %p52 = scmp.ne.s32.totalorder %s38, %s39
    %p53 = scmp.eq.s32.totalorder %s17, 1
    %p54 = por %p52, %p53
    %p56 = scmp.ne.s32.totalorder %s39, %s55
    %p57 = scmp.eq.s32.totalorder %s17, 0
    %p58 = por %p56, %p57
    %s59 = ssub.s32 %s18, %s30
    %s60 = ssub.s32 %s19, %s26
    %s61 = sor.u32 %s59, %s60
    %p62 = scmp.eq.s32.totalorder %s61, 0
    %s64 = sadd.s32 %s63, 1
    %s65 = scalar_select %p62, %s63, %s64
    %p68 = pneg %p62
    %p69 = scmp.eq.s32.totalorder %s11, 1
    %p70 = por %p68, %p69
    %p71 = scmp.ne.s32.totalorder %s63, %s66
    %p72 = scmp.eq.s32.totalorder %s11, 0
    %p73 = por %p71, %p72
    %p74 = scmp.ne.s32.totalorder %s63, %s66
    %p75 = scmp.eq.s32.totalorder %s16, 1
    %p76 = por %p74, %p75
    %p77 = scmp.ne.s32.totalorder %s66, %s67
    %p78 = scmp.eq.s32.totalorder %s16, 0
    %p79 = por %p77, %p78
    %p80 = scmp.ne.s32.totalorder %s66, %s67
    %p81 = scmp.eq.s32.totalorder %s17, 1
    %p82 = por %p80, %p81
    %p84 = scmp.ne.s32.totalorder %s67, %s83
    %p85 = scmp.eq.s32.totalorder %s17, 0
    %p86 = por %p84, %p85
    %s87 = ssub.s32 %s18, %s30
    %s88 = ssub.s32 %s19, %s26
    %s89 = sor.u32 %s87, %s88
    %p90 = scmp.eq.s32.totalorder %s89, 0
    %s92 = sadd.s32 %s91, 1
    %s93 = scalar_select %p90, %s91, %s92
    %p96 = pneg %p90
    %p97 = scmp.eq.s32.totalorder %s11, 1
    %p98 = por %p96, %p97
    %p99 = scmp.ne.s32.totalorder %s91, %s94
    %p100 = scmp.eq.s32.totalorder %s11, 0
    %p101 = por %p99, %p100
    %p102 = scmp.ne.s32.totalorder %s91, %s94
    %p103 = scmp.eq.s32.totalorder %s16, 1
    %p104 = por %p102, %p103
    %p105 = scmp.ne.s32.totalorder %s94, %s95
    %p106 = scmp.eq.s32.totalorder %s16, 0
    %p107 = por %p105, %p106
    %p108 = scmp.ne.s32.totalorder %s94, %s95
    %p109 = scmp.eq.s32.totalorder %s17, 1
    %p110 = por %p108, %p109
    %p112 = scmp.ne.s32.totalorder %s95, %s111
    %p113 = scmp.eq.s32.totalorder %s17, 0
    %p114 = por %p112, %p113
    %s115 = ssub.s32 %s18, %s30
    %s116 = ssub.s32 %s19, %s26
    %s117 = sor.u32 %s115, %s116
    %p118 = scmp.eq.s32.totalorder %s117, 0
    %s120 = sadd.s32 %s119, 1
    %s121 = scalar_select %p118, %s119, %s120
    %p124 = pneg %p118
    %p125 = scmp.eq.s32.totalorder %s11, 1
    %p126 = por %p124, %p125
    %p127 = scmp.ne.s32.totalorder %s119, %s122
    %p128 = scmp.eq.s32.totalorder %s11, 0
    %p129 = por %p127, %p128
    %p130 = scmp.ne.s32.totalorder %s119, %s122
    %p131 = scmp.eq.s32.totalorder %s16, 1
    %p132 = por %p130, %p131
    %p133 = scmp.ne.s32.totalorder %s122, %s123
    %p134 = scmp.eq.s32.totalorder %s16, 0
    %p135 = por %p133, %p134
    %p136 = scmp.ne.s32.totalorder %s122, %s123
    %p137 = scmp.eq.s32.totalorder %s17, 1
    %p138 = por %p136, %p137
    %p140 = scmp.ne.s32.totalorder %s123, %s139
    %p141 = scmp.eq.s32.totalorder %s17, 0
    %p142 = por %p140, %p141
    %s143 = ssub.s32 %s18, %s30
    %p144 = scmp.eq.s32.totalorder %s143, 0
    %s146 = sadd.s32 %s145, 1
    %s147 = scalar_select %p144, %s145, %s146
    %p150 = pneg %p144
    %p151 = scmp.eq.s32.totalorder %s11, 1
    %p152 = por %p150, %p151
    %p153 = scmp.ne.s32.totalorder %s145, %s148
    %p154 = scmp.eq.s32.totalorder %s11, 0
    %p155 = por %p153, %p154
    %p156 = scmp.ne.s32.totalorder %s145, %s148
    %p157 = scmp.eq.s32.totalorder %s16, 1
    %p158 = por %p156, %p157
    %p159 = scmp.ne.s32.totalorder %s148, %s149
    %p160 = scmp.eq.s32.totalorder %s16, 0
    %p161 = por %p159, %p160
    %p162 = scmp.ne.s32.totalorder %s148, %s149
    %p163 = scmp.eq.s32.totalorder %s17, 1
    %p164 = por %p162, %p163
    %p166 = scmp.ne.s32.totalorder %s149, %s165
    %p167 = scmp.eq.s32.totalorder %s17, 0
    %p168 = por %p166, %p167
    %s169 = ssub.s32 %s18, %s30
    %s170 = ssub.s32 %s19, %s26
    %s171 = sor.u32 %s169, %s170
    %p172 = scmp.eq.s32.totalorder %s171, 0
    %s174 = sadd.s32 %s173, 1
    %s175 = scalar_select %p172, %s173, %s174
    %p178 = pneg %p172
    %p179 = scmp.eq.s32.totalorder %s11, 1
    %p180 = por %p178, %p179
    %p181 = scmp.ne.s32.totalorder %s173, %s176
    %p182 = scmp.eq.s32.totalorder %s11, 0
    %p183 = por %p181, %p182
    %p184 = scmp.ne.s32.totalorder %s173, %s176
    %p185 = scmp.eq.s32.totalorder %s16, 1
    %p186 = por %p184, %p185
    %p187 = scmp.ne.s32.totalorder %s176, %s177
    %p188 = scmp.eq.s32.totalorder %s16, 0
    %p189 = por %p187, %p188
    %p190 = scmp.ne.s32.totalorder %s176, %s177
    %p191 = scmp.eq.s32.totalorder %s17, 1
    %p192 = por %p190, %p191
    %p194 = scmp.ne.s32.totalorder %s177, %s193
    %p195 = scmp.eq.s32.totalorder %s17, 0
    %p196 = por %p194, %p195
    %p197 = scmp.le.s32.totalorder 1, %s11
    %p198 = scmp.lt.s32.totalorder %s11, 3
    %p199 = pnand %p197, %p198
    %p200 = pneg %p199
    // Predicated region
    $region9: #{mossformer_module_forward.10} parent=5 // pred_check
      _
    $region10: #{mossformer_module_forward.10} parent=5 // pred_check_branch
      %202 = sbr.rel (%p199) target = $region12
    $region11: #{mossformer_module_forward.10} parent=5 // pred_region
      %s203 = ssub.s32 %s11, 1
    $region12: #{mossformer_module_forward.10} parent=5 // pred_fallthru
      _
    %p204 = scmp.lt.s32.totalorder %s11, 2
    // Predicated region
    $region13: #{mossformer_module_forward.10} parent=5 // pred_check
      %p205 = pneg %p204
    $region14: #{mossformer_module_forward.10} parent=5 // pred_check_branch
      %207 = sbr.rel (%p205) target = $region16
    $region15: #{mossformer_module_forward.10} parent=5 // pred_region
      // Predicated region
      $region17: #{mossformer_module_forward.10} parent=15 // pred_check
        %p208 = pneg %p45
      $region18: #{mossformer_module_forward.10} parent=15 // pred_check_branch
        %210 = sbr.rel (%p208) target = $region20
      $region19: #{mossformer_module_forward.10} parent=15 // pred_region
        %s211 = smul.u32 2, %s19
        %p212 = scmp.lt.s32.totalorder %s18, 1
        %s213 = scalar_select %p212, %s18, 1
        %p214 = scmp.lt.s32.totalorder %s211, 1
        %s215 = scalar_select %p214, %s211, 1
        %s216 = smul.addr %s215, 8
        %s217 = smul.addr %s213, 16
        %s218 = sadd.s32 %s216, %s217
        %s219 = smul.addr %s218, 4
        %s220 = scalar_lea.vmem %s0, %s219
        %s221 = smul.u32 2, %s19
      $region20: #{mossformer_module_forward.10} parent=15 // pred_fallthru
        _
      // Predicated region
      $region21: #{mossformer_module_forward.10} parent=15 // pred_check
        %p222 = pneg %p73
      $region22: #{mossformer_module_forward.10} parent=15 // pred_check_branch
        %224 = sbr.rel (%p222) target = $region24
      $region23: #{mossformer_module_forward.10} parent=15 // pred_region
        %s225 = smul.u32 2, %s19
        %p226 = scmp.lt.s32.totalorder %s18, 1
        %s227 = scalar_select %p226, %s18, 1
        %p228 = scmp.lt.s32.totalorder %s225, 1
        %s229 = scalar_select %p228, %s225, 1
        %s230 = smul.addr %s229, 8
        %s231 = smul.addr %s227, 16
        %s232 = sadd.s32 %s230, %s231
        %s233 = smul.addr %s232, 4
        %s234 = scalar_lea.vmem %s1, %s233
        %s235 = smul.u32 2, %s19
      $region24: #{mossformer_module_forward.10} parent=15 // pred_fallthru
        _
      // Predicated region
      $region25: #{mossformer_module_forward.10} parent=15 // pred_check
        %p236 = pneg %p101
      $region26: #{mossformer_module_forward.10} parent=15 // pred_check_branch
        %238 = sbr.rel (%p236) target = $region28
      $region27: #{mossformer_module_forward.10} parent=15 // pred_region
        %s239 = smul.u32 2, %s19
        %p240 = scmp.lt.s32.totalorder %s18, 1
        %s241 = scalar_select %p240, %s18, 1
        %p242 = scmp.lt.s32.totalorder %s239, 1
        %s243 = scalar_select %p242, %s239, 1
        %s244 = smul.addr %s243, 8
        %s245 = smul.addr %s241, 16
        %s246 = sadd.s32 %s244, %s245
        %s247 = smul.addr %s246, 4
        %s248 = scalar_lea.vmem %s2, %s247
        %s249 = smul.u32 2, %s19
      $region28: #{mossformer_module_forward.10} parent=15 // pred_fallthru
        _
      // Predicated region
      $region29: #{mossformer_module_forward.10} parent=15 // pred_check
        %p250 = pneg %p129
      $region30: #{mossformer_module_forward.10} parent=15 // pred_check_branch
        %252 = sbr.rel (%p250) target = $region32
      $region31: #{mossformer_module_forward.10} parent=15 // pred_region
        %s253 = smul.u32 2, %s19
        %p254 = scmp.lt.s32.totalorder %s18, 1
        %s255 = scalar_select %p254, %s18, 1
        %p256 = scmp.lt.s32.totalorder %s253, 1
        %s257 = scalar_select %p256, %s253, 1
        %s258 = smul.addr %s257, 8
        %s259 = smul.addr %s255, 16
        %s260 = sadd.s32 %s258, %s259
        %s261 = smul.addr %s260, 8
        %s262 = scalar_lea.vmem %s3, %s261
        %s263 = smul.u32 2, %s19
      $region32: #{mossformer_module_forward.10} parent=15 // pred_fallthru
        _
      // Predicated region
      $region33: #{mossformer_module_forward.10} parent=15 // pred_check
        %p264 = pneg %p155
      $region34: #{mossformer_module_forward.10} parent=15 // pred_check_branch
        %266 = sbr.rel (%p264) target = $region36
      $region35: #{mossformer_module_forward.10} parent=15 // pred_region
        %p267 = scmp.lt.s32.totalorder %s18, 1
        %s268 = scalar_select %p267, %s18, 1
        %s269 = smul.addr %s268, 8
        %s270 = smul.addr %s269, 8
        %s271 = scalar_lea.vmem %s4, %s270
      $region36: #{mossformer_module_forward.10} parent=15 // pred_fallthru
        _
    $region16: #{mossformer_module_forward.10} parent=5 // pred_fallthru
      _
    %p272 = scmp.le.s32.totalorder 1, %s11
    %p273 = scmp.lt.s32.totalorder %s11, 3
    %p274 = pnand %p272, %p273
    %p275 = pneg %p274
    // Predicated region
    $region37: #{mossformer_module_forward.10} parent=5 // pred_check
      _
    $region38: #{mossformer_module_forward.10} parent=5 // pred_check_branch
      %277 = sbr.rel (%p274) target = $region40
    $region39: #{mossformer_module_forward.10} parent=5 // pred_region
      %s278 = ssub.s32 %s11, 1
      %s279 = smul.u32 2, %s21
      %p280 = scmp.lt.s32.totalorder %s20, 1
      %s281 = scalar_select %p280, %s20, 1
      %p282 = scmp.lt.s32.totalorder %s279, 1
      %s283 = scalar_select %p282, %s279, 1
      %s284 = smul.addr %s283, 8
      %s285 = smul.addr %s281, 16
      %s286 = sadd.s32 %s284, %s285
      %s287 = smul.addr %s286, 4
      %s288 = scalar_lea.vmem %s0, %s287
      %p289 = pneg %p51
      %p290 = pneg %p48
      %s291 = smul.u32 2, %s21
      %p292 = scmp.lt.s32.totalorder %s20, 1
      %s293 = scalar_select %p292, %s20, 1
      %p294 = scmp.lt.s32.totalorder %s291, 1
      %s295 = scalar_select %p294, %s291, 1
      %s296 = smul.addr %s295, 8
      %s297 = smul.addr %s293, 16
      %s298 = sadd.s32 %s296, %s297
      %s299 = smul.addr %s298, 4
      %s300 = scalar_lea.vmem %s1, %s299
      %p301 = pneg %p79
      %p302 = pneg %p76
      %s303 = smul.u32 2, %s21
      %p304 = scmp.lt.s32.totalorder %s20, 1
      %s305 = scalar_select %p304, %s20, 1
      %p306 = scmp.lt.s32.totalorder %s303, 1
      %s307 = scalar_select %p306, %s303, 1
      %s308 = smul.addr %s307, 8
      %s309 = smul.addr %s305, 16
      %s310 = sadd.s32 %s308, %s309
      %s311 = smul.addr %s310, 4
      %s312 = scalar_lea.vmem %s2, %s311
      %p313 = pneg %p107
      %p314 = pneg %p104
      %s315 = smul.u32 2, %s21
      %p316 = scmp.lt.s32.totalorder %s20, 1
      %s317 = scalar_select %p316, %s20, 1
      %p318 = scmp.lt.s32.totalorder %s315, 1
      %s319 = scalar_select %p318, %s315, 1
      %s320 = smul.addr %s319, 8
      %s321 = smul.addr %s317, 16
      %s322 = sadd.s32 %s320, %s321
      %s323 = smul.addr %s322, 8
      %s324 = scalar_lea.vmem %s3, %s323
      %p325 = pneg %p135
      %p326 = pneg %p132
      %p327 = scmp.lt.s32.totalorder %s20, 1
      %s328 = scalar_select %p327, %s20, 1
      %s329 = smul.addr %s328, 8
      %s330 = smul.addr %s329, 8
      %s331 = scalar_lea.vmem %s4, %s330
      %p332 = pneg %p161
      %p333 = pneg %p158
      %p334 = pneg %p189
      %p335 = pneg %p186
      %s336 = smul.u32 2, %s21
      %p337 = scmp.lt.s32.totalorder %s20, 1
      %s338 = scalar_select %p337, %s20, 1
      %p339 = scmp.lt.s32.totalorder %s336, 1
      %s340 = scalar_select %p339, %s336, 1
      %s341 = smul.addr %s340, 8
      %s342 = smul.addr %s338, 16
      %s343 = sadd.s32 %s341, %s342
      %s344 = smul.addr %s343, 8
      %s345 = scalar_lea.vmem %s5, %s344
      %s346 = smul.u32 2, %s21
      %p347 = scmp.lt.s32.totalorder %s20, 1
      %s348 = scalar_select %p347, %s20, 1
      %p349 = scmp.lt.s32.totalorder %s346, 1
      %s350 = scalar_select %p349, %s346, 1
      %s351 = smul.addr %s350, 8
      %s352 = smul.addr %s348, 16
      %s353 = sadd.s32 %s351, %s352
      %s354 = smul.addr %s353, 4
      %s355 = scalar_lea.vmem %s0, %s354
      %s356 = smul.u32 2, %s21
      %s357 = smul.u32 2, %s21
      %p358 = scmp.lt.s32.totalorder %s20, 1
      %s359 = scalar_select %p358, %s20, 1
      %p360 = scmp.lt.s32.totalorder %s357, 1
      %s361 = scalar_select %p360, %s357, 1
      %s362 = smul.addr %s361, 8
      %s363 = smul.addr %s359, 16
      %s364 = sadd.s32 %s362, %s363
      %s365 = smul.addr %s364, 4
      %s366 = scalar_lea.vmem %s1, %s365
      %s367 = smul.u32 2, %s21
      %s368 = smul.u32 2, %s21
      %p369 = scmp.lt.s32.totalorder %s20, 1
      %s370 = scalar_select %p369, %s20, 1
      %p371 = scmp.lt.s32.totalorder %s368, 1
      %s372 = scalar_select %p371, %s368, 1
      %s373 = smul.addr %s372, 8
      %s374 = smul.addr %s370, 16
      %s375 = sadd.s32 %s373, %s374
      %s376 = smul.addr %s375, 4
      %s377 = scalar_lea.vmem %s2, %s376
      %s378 = smul.u32 2, %s21
      %s379 = smul.u32 2, %s21
      %p380 = scmp.lt.s32.totalorder %s20, 1
      %s381 = scalar_select %p380, %s20, 1
      %p382 = scmp.lt.s32.totalorder %s379, 1
      %s383 = scalar_select %p382, %s379, 1
      %s384 = smul.addr %s383, 8
      %s385 = smul.addr %s381, 16
      %s386 = sadd.s32 %s384, %s385
      %s387 = smul.addr %s386, 8
      %s388 = scalar_lea.vmem %s3, %s387
      %s389 = smul.u32 2, %s21
      %p390 = scmp.lt.s32.totalorder %s20, 1
      %s391 = scalar_select %p390, %s20, 1
      %s392 = smul.addr %s391, 8
      %s393 = smul.addr %s392, 8
      %s394 = scalar_lea.vmem %s4, %s393
      %s395 = smul.u32 2, %s21
      %p396 = scmp.lt.s32.totalorder %s20, 1
      %s397 = scalar_select %p396, %s20, 1
      %p398 = scmp.lt.s32.totalorder %s395, 1
      %s399 = scalar_select %p398, %s395, 1
      %s400 = smul.addr %s399, 8
      %s401 = smul.addr %s397, 16
      %s402 = sadd.s32 %s400, %s401
      %s403 = smul.addr %s402, 8
      %s404 = scalar_lea.vmem %s5, %s403
      %s405 = smul.u32 2, %s21
      %v407 = vld [vmem:[%s355] sm:$0xf]
      %v408 = vld [vmem:[%s355 + $0x4] sm:$0xf]
      %v409 = vld [vmem:[%s355 + $0x8] sm:$0xf]
      %v410 = vld [vmem:[%s355 + $0xc] sm:$0xf]
      %v411 = vld [vmem:[%s355 + $0x10] sm:$0xf]
      %v412 = vld [vmem:[%s355 + $0x14] sm:$0xf]
      %v413 = vld [vmem:[%s355 + $0x18] sm:$0xf]
      %v414 = vld [vmem:[%s355 + $0x1c] sm:$0xf]
      %v415 = vld [vmem:[%s355 + $0x20] sm:$0xf]
      %v416 = vld [vmem:[%s355 + $0x24] sm:$0xf]
      %v417 = vld [vmem:[%s355 + $0x28] sm:$0xf]
      %v418 = vld [vmem:[%s355 + $0x2c] sm:$0xf]
      %v419 = vld [vmem:[%s355 + $0x30] sm:$0xf]
      %v420 = vld [vmem:[%s355 + $0x34] sm:$0xf]
      %v421 = vld [vmem:[%s355 + $0x38] sm:$0xf]
      %v422 = vld [vmem:[%s355 + $0x3c] sm:$0xf]
      %v423 = vld [vmem:[%s366] sm:$0xf]
      %v424 = vld [vmem:[%s366 + $0x4] sm:$0xf]
      %v425 = vld [vmem:[%s366 + $0x8] sm:$0xf]
      %v426 = vld [vmem:[%s366 + $0xc] sm:$0xf]
      %v427 = vld [vmem:[%s366 + $0x10] sm:$0xf]
      %v428 = vld [vmem:[%s366 + $0x14] sm:$0xf]
      %v429 = vld [vmem:[%s366 + $0x18] sm:$0xf]
      %v430 = vld [vmem:[%s366 + $0x1c] sm:$0xf]
      %v431 = vld [vmem:[%s366 + $0x20] sm:$0xf]
      %v432 = vld [vmem:[%s366 + $0x24] sm:$0xf]
      %v433 = vld [vmem:[%s366 + $0x28] sm:$0xf]
      %v434 = vld [vmem:[%s366 + $0x2c] sm:$0xf]
      %v435 = vld [vmem:[%s366 + $0x30] sm:$0xf]
      %v436 = vld [vmem:[%s366 + $0x34] sm:$0xf]
      %v437 = vld [vmem:[%s366 + $0x38] sm:$0xf]
      %v438 = vld [vmem:[%s366 + $0x3c] sm:$0xf]
      %v439 = vld [vmem:[%s377] sm:$0xf]
      %v440 = vld [vmem:[%s377 + $0x4] sm:$0xf]
      %v441 = vld [vmem:[%s377 + $0x8] sm:$0xf]
      %v442 = vld [vmem:[%s377 + $0xc] sm:$0xf]
      %v443 = vld [vmem:[%s377 + $0x10] sm:$0xf]
      %v444 = vld [vmem:[%s377 + $0x14] sm:$0xf]
      %v445 = vld [vmem:[%s377 + $0x18] sm:$0xf]
      %v446 = vld [vmem:[%s377 + $0x1c] sm:$0xf]
      %v447 = vld [vmem:[%s377 + $0x20] sm:$0xf]
      %v448 = vld [vmem:[%s377 + $0x24] sm:$0xf]
      %v449 = vld [vmem:[%s377 + $0x28] sm:$0xf]
      %v450 = vld [vmem:[%s377 + $0x2c] sm:$0xf]
      %v451 = vld [vmem:[%s377 + $0x30] sm:$0xf]
      %v452 = vld [vmem:[%s377 + $0x34] sm:$0xf]
      %v453 = vld [vmem:[%s377 + $0x38] sm:$0xf]
      %v454 = vld [vmem:[%s377 + $0x3c] sm:$0xf]
      %v455 = vld [vmem:[%s388] sm:$0xff]
      %v456 = vld [vmem:[%s388 + $0x8] sm:$0xff]
      %v457 = vld [vmem:[%s388 + $0x10] sm:$0xff]
      %v458 = vld [vmem:[%s388 + $0x18] sm:$0xff]
      %v459 = vld [vmem:[%s388 + $0x20] sm:$0xff]
      %v460 = vld [vmem:[%s388 + $0x28] sm:$0xff]
      %v461 = vld [vmem:[%s388 + $0x30] sm:$0xff]
      %v462 = vld [vmem:[%s388 + $0x38] sm:$0xff]
      %v463 = vld [vmem:[%s388 + $0x40] sm:$0xff]
      %v464 = vld [vmem:[%s388 + $0x48] sm:$0xff]
      %v465 = vld [vmem:[%s388 + $0x50] sm:$0xff]
      %v466 = vld [vmem:[%s388 + $0x58] sm:$0xff]
      %v467 = vld [vmem:[%s388 + $0x60] sm:$0xff]
      %v468 = vld [vmem:[%s388 + $0x68] sm:$0xff]
      %v469 = vld [vmem:[%s388 + $0x70] sm:$0xff]
      %v470 = vld [vmem:[%s388 + $0x78] sm:$0xff]
      %v471 = vld [vmem:[%s394] sm:$0xff]
      %v472 = vld [vmem:[%s394 + $0x8] sm:$0xff]
      %v473 = vld [vmem:[%s394 + $0x10] sm:$0xff]
      %v474 = vld [vmem:[%s394 + $0x18] sm:$0xff]
      %v475 = vld [vmem:[%s394 + $0x20] sm:$0xff]
      %v476 = vld [vmem:[%s394 + $0x28] sm:$0xff]
      %v477 = vld [vmem:[%s394 + $0x30] sm:$0xff]
      %v478 = vld [vmem:[%s394 + $0x38] sm:$0xff]
      %v479 = vpack.c.bf16 %v472, %v471
      %v480 = vpack.c.bf16 %v474, %v473
      %v481 = vpack.c.bf16 %v476, %v475
      %v482 = vpack.c.bf16 %v478, %v477
      %v491 = vunpack.c.l.b16 %v407
      %v492 = vunpack.c.l.b16 %v408
      %v493 = vunpack.c.l.b16 %v409
      %v494 = vunpack.c.l.b16 %v410
      %v495 = vunpack.c.l.b16 %v411
      %v496 = vunpack.c.l.b16 %v412
      %v497 = vunpack.c.l.b16 %v413
      %v498 = vunpack.c.l.b16 %v414
      %v499 = vpack.c.b16 %v492, %v491
      %v500 = vpack.c.b16 %v494, %v493
      %v501 = vpack.c.b16 %v496, %v495
      %v502 = vpack.c.b16 %v498, %v497
      %v511 = vunpack.c.l.b16 %v423
      %v512 = vunpack.c.l.b16 %v424
      %v513 = vunpack.c.l.b16 %v425
      %v514 = vunpack.c.l.b16 %v426
      %v515 = vunpack.c.l.b16 %v427
      %v516 = vunpack.c.l.b16 %v428
      %v517 = vunpack.c.l.b16 %v429
      %v518 = vunpack.c.l.b16 %v430
      %v519 = vpack.c.b16 %v512, %v511
      %v520 = vpack.c.b16 %v514, %v513
      %v521 = vpack.c.b16 %v516, %v515
      %v522 = vpack.c.b16 %v518, %v517
      %vm523 = vcmask 523264
      %v525 = vsel %vm523, %v499, 0
      %v528 = vsel %vm523, %v500, 0
      %v531 = vsel %vm523, %v501, 0
      %v534 = vsel %vm523, %v502, 0
      %v537 = vsel %vm523, %v519, 0
      %v540 = vsel %vm523, %v520, 0
      %v543 = vsel %vm523, %v521, 0
      %v546 = vsel %vm523, %v522, 0
      %548 = vmatprep.subr.bf16.mxu0 0
      %549 = vmatpush1.bf16.xpose.msra.mxu0 0
      %550 = vmatprep.subr.bf16.mxu0 0
      %551 = vmatpush1.bf16.xpose.msra.mxu0 0
      %552 = vmatprep.subr.bf16.mxu0 0
      %553 = vmatpush1.bf16.xpose.msra.mxu0 0
      %554 = vmatprep.subr.bf16.mxu0 0
      %555 = vmatpush1.bf16.xpose.msra.mxu0 0
      %556 = vmatprep.subr.bf16.mxu0 0
      %557 = vmatpush1.bf16.xpose.msra.mxu0 %v546
      %558 = vmatprep.subr.bf16.mxu0 0
      %559 = vmatpush1.bf16.xpose.msra.mxu0 %v543
      %560 = vmatprep.subr.bf16.mxu0 0
      %561 = vmatpush1.bf16.xpose.msra.mxu0 %v540
      %562 = vmatprep.subr.bf16.mxu0 0
      %563 = vmatpush1.bf16.xpose.msra.mxu0 %v537
      %564 = vmatprep.subr.bf16.mxu0 0
      %565 = vmatpush2.bf16.xpose.msra.mxu0 0
      %566 = vmatprep.subr.bf16.mxu0 0
      %567 = vmatpush2.bf16.xpose.msra.mxu0 0
      %568 = vmatprep.subr.bf16.mxu0 0
      %569 = vmatpush2.bf16.xpose.msra.mxu0 0
      %570 = vmatprep.subr.bf16.mxu0 0
      %571 = vmatpush2.bf16.xpose.msra.mxu0 0
      %572 = vmatprep.subr.bf16.mxu0 0
      %573 = vmatpush2.bf16.xpose.msra.mxu0 0
      %574 = vmatprep.subr.bf16.mxu0 0
      %575 = vmatpush2.bf16.xpose.msra.mxu0 0
      %576 = vmatprep.subr.bf16.mxu0 0
      %577 = vmatpush2.bf16.xpose.msra.mxu0 0
      %578 = vmatprep.subr.bf16.mxu0 0
      %579 = vmatpush2.bf16.xpose.msra.mxu0 0
      %580 = vmatprep.mubr.bf16.mxu0 0
      %581 = vmatmul.mubr.bf16.gmra.mxu0 %v525
      %v582 = vpop.f32.mrf.mxu0
      %v583 = vadd.f32 0.0, %v582
      %v584 = vpop.f32.mrf.mxu0
      %v585 = vpop.f32.mrf.mxu0
      %v586 = vadd.f32 0.0, %v585
      %v587 = vpop.f32.mrf.mxu0
      %588 = vmatprep.mubr.bf16.mxu0 0
      %589 = vmatmul.mubr.bf16.gmra.mxu0 %v528
      %v590 = vpop.f32.mrf.mxu0
      %v591 = vadd.f32 0.0, %v590
      %v592 = vpop.f32.mrf.mxu0
      %v593 = vpop.f32.mrf.mxu0
      %v594 = vadd.f32 0.0, %v593
      %v595 = vpop.f32.mrf.mxu0
      %596 = vmatprep.mubr.bf16.mxu0 0
      %597 = vmatmul.mubr.bf16.gmra.mxu0 %v531
      %v598 = vpop.f32.mrf.mxu0
      %v599 = vadd.f32 0.0, %v598
      %v600 = vpop.f32.mrf.mxu0
      %v601 = vpop.f32.mrf.mxu0
      %v602 = vadd.f32 0.0, %v601
      %v603 = vpop.f32.mrf.mxu0
      %604 = vmatprep.mubr.bf16.mxu0 0
      %605 = vmatmul.mubr.bf16.gmra.mxu0 %v534
      %v606 = vpop.f32.mrf.mxu0
      %v607 = vadd.f32 0.0, %v606
      %v608 = vpop.f32.mrf.mxu0
      %v609 = vpop.f32.mrf.mxu0
      %v610 = vadd.f32 0.0, %v609
      %v611 = vpop.f32.mrf.mxu0
      %612 = vdwg.mxu0
      %v621 = vunpack.c.l.b16 %v415
      %v622 = vunpack.c.l.b16 %v416
      %v623 = vunpack.c.l.b16 %v417
      %v624 = vunpack.c.l.b16 %v418
      %v625 = vunpack.c.l.b16 %v419
      %v626 = vunpack.c.l.b16 %v420
      %v627 = vunpack.c.l.b16 %v421
      %v628 = vunpack.c.l.b16 %v422
      %v629 = vpack.c.b16 %v622, %v621
      %v630 = vpack.c.b16 %v624, %v623
      %v631 = vpack.c.b16 %v626, %v625
      %v632 = vpack.c.b16 %v628, %v627
      %v641 = vunpack.c.l.b16 %v431
      %v642 = vunpack.c.l.b16 %v432
      %v643 = vunpack.c.l.b16 %v433
      %v644 = vunpack.c.l.b16 %v434
      %v645 = vunpack.c.l.b16 %v435
      %v646 = vunpack.c.l.b16 %v436
      %v647 = vunpack.c.l.b16 %v437
      %v648 = vunpack.c.l.b16 %v438
      %v649 = vpack.c.b16 %v642, %v641
      %v650 = vpack.c.b16 %v644, %v643
      %v651 = vpack.c.b16 %v646, %v645
      %v652 = vpack.c.b16 %v648, %v647
      %v654 = vsel %vm523, %v629, 0
      %v657 = vsel %vm523, %v630, 0
      %v660 = vsel %vm523, %v631, 0
      %v663 = vsel %vm523, %v632, 0
      %v666 = vsel %vm523, %v649, 0
      %v669 = vsel %vm523, %v650, 0
      %v672 = vsel %vm523, %v651, 0
      %v675 = vsel %vm523, %v652, 0
      %677 = vmatprep.subr.bf16.mxu0 0
      %678 = vmatpush1.bf16.xpose.msra.mxu0 0
      %679 = vmatprep.subr.bf16.mxu0 0
      %680 = vmatpush1.bf16.xpose.msra.mxu0 0
      %681 = vmatprep.subr.bf16.mxu0 0
      %682 = vmatpush1.bf16.xpose.msra.mxu0 0
      %683 = vmatprep.subr.bf16.mxu0 0
      %684 = vmatpush1.bf16.xpose.msra.mxu0 0
      %685 = vmatprep.subr.bf16.mxu0 0
      %686 = vmatpush1.bf16.xpose.msra.mxu0 %v675
      %687 = vmatprep.subr.bf16.mxu0 0
      %688 = vmatpush1.bf16.xpose.msra.mxu0 %v672
      %689 = vmatprep.subr.bf16.mxu0 0
      %690 = vmatpush1.bf16.xpose.msra.mxu0 %v669
      %691 = vmatprep.subr.bf16.mxu0 0
      %692 = vmatpush1.bf16.xpose.msra.mxu0 %v666
      %693 = vmatprep.subr.bf16.mxu0 0
      %694 = vmatpush2.bf16.xpose.msra.mxu0 0
      %695 = vmatprep.subr.bf16.mxu0 0
      %696 = vmatpush2.bf16.xpose.msra.mxu0 0
      %697 = vmatprep.subr.bf16.mxu0 0
      %698 = vmatpush2.bf16.xpose.msra.mxu0 0
      %699 = vmatprep.subr.bf16.mxu0 0
      %700 = vmatpush2.bf16.xpose.msra.mxu0 0
      %701 = vmatprep.subr.bf16.mxu0 0
      %702 = vmatpush2.bf16.xpose.msra.mxu0 0
      %703 = vmatprep.subr.bf16.mxu0 0
      %704 = vmatpush2.bf16.xpose.msra.mxu0 0
      %705 = vmatprep.subr.bf16.mxu0 0
      %706 = vmatpush2.bf16.xpose.msra.mxu0 0
      %707 = vmatprep.subr.bf16.mxu0 0
      %708 = vmatpush2.bf16.xpose.msra.mxu0 0
      %709 = vmatprep.mubr.bf16.mxu0 0
      %710 = vmatmul.mubr.bf16.gmra.mxu0 %v654
      %v711 = vpop.f32.mrf.mxu0
      %v712 = vadd.f32 0.0, %v711
      %v713 = vpop.f32.mrf.mxu0
      %v714 = vpop.f32.mrf.mxu0
      %v715 = vadd.f32 0.0, %v714
      %v716 = vpop.f32.mrf.mxu0
      %717 = vmatprep.mubr.bf16.mxu0 0
      %718 = vmatmul.mubr.bf16.gmra.mxu0 %v657
      %v719 = vpop.f32.mrf.mxu0
      %v720 = vadd.f32 0.0, %v719
      %v721 = vpop.f32.mrf.mxu0
      %v722 = vpop.f32.mrf.mxu0
      %v723 = vadd.f32 0.0, %v722
      %v724 = vpop.f32.mrf.mxu0
      %725 = vmatprep.mubr.bf16.mxu0 0
      %726 = vmatmul.mubr.bf16.gmra.mxu0 %v660
      %v727 = vpop.f32.mrf.mxu0
      %v728 = vadd.f32 0.0, %v727
      %v729 = vpop.f32.mrf.mxu0
      %v730 = vpop.f32.mrf.mxu0
      %v731 = vadd.f32 0.0, %v730
      %v732 = vpop.f32.mrf.mxu0
      %733 = vmatprep.mubr.bf16.mxu0 0
      %734 = vmatmul.mubr.bf16.gmra.mxu0 %v663
      %v735 = vpop.f32.mrf.mxu0
      %v736 = vadd.f32 0.0, %v735
      %v737 = vpop.f32.mrf.mxu0
      %v738 = vpop.f32.mrf.mxu0
      %v739 = vadd.f32 0.0, %v738
      %v740 = vpop.f32.mrf.mxu0
      %741 = vdwg.mxu0
      %v742 = vmul.f32 %v583, 0.015625
      %v743 = vmul.f32 %v586, 0.015625
      %v744 = vmul.f32 %v591, 0.015625
      %v745 = vmul.f32 %v594, 0.015625
      %v746 = vmul.f32 %v599, 0.015625
      %v747 = vmul.f32 %v602, 0.015625
      %v748 = vmul.f32 %v607, 0.015625
      %v749 = vmul.f32 %v610, 0.015625
      %v750 = vmul.f32 %v712, 0.015625
      %v751 = vmul.f32 %v715, 0.015625
      %v752 = vmul.f32 %v720, 0.015625
      %v753 = vmul.f32 %v723, 0.015625
      %v754 = vmul.f32 %v728, 0.015625
      %v755 = vmul.f32 %v731, 0.015625
      %v756 = vmul.f32 %v736, 0.015625
      %v757 = vmul.f32 %v739, 0.015625
      %v758 = vmax.f32 %v742, 0.0
      %v759 = vmax.f32 %v743, 0.0
      %v760 = vmax.f32 %v744, 0.0
      %v761 = vmax.f32 %v745, 0.0
      %v762 = vmax.f32 %v746, 0.0
      %v763 = vmax.f32 %v747, 0.0
      %v764 = vmax.f32 %v748, 0.0
      %v765 = vmax.f32 %v749, 0.0
      %v766 = vmax.f32 %v750, 0.0
      %v767 = vmax.f32 %v751, 0.0
      %v768 = vmax.f32 %v752, 0.0
      %v769 = vmax.f32 %v753, 0.0
      %v770 = vmax.f32 %v754, 0.0
      %v771 = vmax.f32 %v755, 0.0
      %v772 = vmax.f32 %v756, 0.0
      %v773 = vmax.f32 %v757, 0.0
      %v774 = vmul.f32 %v758, %v758
      %v775 = vmul.f32 %v759, %v759
      %v776 = vmul.f32 %v760, %v760
      %v777 = vmul.f32 %v761, %v761
      %v778 = vmul.f32 %v762, %v762
      %v779 = vmul.f32 %v763, %v763
      %v780 = vmul.f32 %v764, %v764
      %v781 = vmul.f32 %v765, %v765
      %v782 = vmul.f32 %v766, %v766
      %v783 = vmul.f32 %v767, %v767
      %v784 = vmul.f32 %v768, %v768
      %v785 = vmul.f32 %v769, %v769
      %v786 = vmul.f32 %v770, %v770
      %v787 = vmul.f32 %v771, %v771
      %v788 = vmul.f32 %v772, %v772
      %v789 = vmul.f32 %v773, %v773
      %v790 = vpack.c.bf16 %v775, %v774
      %v791 = vpack.c.bf16 %v777, %v776
      %v792 = vpack.c.bf16 %v779, %v778
      %v793 = vpack.c.bf16 %v781, %v780
      %v794 = vpack.c.bf16 %v783, %v782
      %v795 = vpack.c.bf16 %v785, %v784
      %v796 = vpack.c.bf16 %v787, %v786
      %v797 = vpack.c.bf16 %v789, %v788
      %v798 = vpack.c.bf16 %v456, %v455
      %v799 = vpack.c.bf16 %v458, %v457
      %v800 = vpack.c.bf16 %v460, %v459
      %v801 = vpack.c.bf16 %v462, %v461
      %v802 = vpack.c.bf16 %v464, %v463
      %v803 = vpack.c.bf16 %v466, %v465
      %v804 = vpack.c.bf16 %v468, %v467
      %v805 = vpack.c.bf16 %v470, %v469
      %v822 = vunpack.c.l.b16 %v439
      %v823 = vunpack.c.l.b16 %v440
      %v824 = vunpack.c.l.b16 %v441
      %v825 = vunpack.c.l.b16 %v442
      %v826 = vunpack.c.l.b16 %v443
      %v827 = vunpack.c.l.b16 %v444
      %v828 = vunpack.c.l.b16 %v445
      %v829 = vunpack.c.l.b16 %v446
      %v830 = vunpack.c.l.b16 %v447
      %v831 = vunpack.c.l.b16 %v448
      %v832 = vunpack.c.l.b16 %v449
      %v833 = vunpack.c.l.b16 %v450
      %v834 = vunpack.c.l.b16 %v451
      %v835 = vunpack.c.l.b16 %v452
      %v836 = vunpack.c.l.b16 %v453
      %v837 = vunpack.c.l.b16 %v454
      %v838 = vpack.c.b16 %v823, %v822
      %v839 = vpack.c.b16 %v825, %v824
      %v840 = vpack.c.b16 %v827, %v826
      %v841 = vpack.c.b16 %v829, %v828
      %v842 = vpack.c.b16 %v831, %v830
      %v843 = vpack.c.b16 %v833, %v832
      %v844 = vpack.c.b16 %v835, %v834
      %v845 = vpack.c.b16 %v837, %v836
      %v847 = vsel %vm523, %v838, 0
      %v850 = vsel %vm523, %v839, 0
      %v853 = vsel %vm523, %v840, 0
      %v856 = vsel %vm523, %v841, 0
      %v859 = vsel %vm523, %v842, 0
      %v862 = vsel %vm523, %v843, 0
      %v865 = vsel %vm523, %v844, 0
      %v868 = vsel %vm523, %v845, 0
      %870 = vmatprep.subr.bf16.mxu0 0
      %871 = vmatpush1.bf16.msra.mxu0 0
      %872 = vmatprep.subr.bf16.mxu0 0
      %873 = vmatpush1.bf16.msra.mxu0 0
      %874 = vmatprep.subr.bf16.mxu0 0
      %875 = vmatpush1.bf16.msra.mxu0 0
      %876 = vmatprep.subr.bf16.mxu0 0
      %877 = vmatpush1.bf16.msra.mxu0 0
      %878 = vmatprep.subr.bf16.mxu0 0
      %879 = vmatpush1.bf16.msra.mxu0 %v482
      %880 = vmatprep.subr.bf16.mxu0 0
      %881 = vmatpush1.bf16.msra.mxu0 %v481
      %882 = vmatprep.subr.bf16.mxu0 0
      %883 = vmatpush1.bf16.msra.mxu0 %v480
      %884 = vmatprep.subr.bf16.mxu0 0
      %885 = vmatpush1.bf16.msra.mxu0 %v479
      %886 = vmatprep.subr.bf16.mxu0 0
      %887 = vmatpush2.bf16.msra.mxu0 0
      %888 = vmatprep.subr.bf16.mxu0 0
      %889 = vmatpush2.bf16.msra.mxu0 0
      %890 = vmatprep.subr.bf16.mxu0 0
      %891 = vmatpush2.bf16.msra.mxu0 0
      %892 = vmatprep.subr.bf16.mxu0 0
      %893 = vmatpush2.bf16.msra.mxu0 0
      %894 = vmatprep.subr.bf16.mxu0 0
      %895 = vmatpush2.bf16.msra.mxu0 0
      %896 = vmatprep.subr.bf16.mxu0 0
      %897 = vmatpush2.bf16.msra.mxu0 0
      %898 = vmatprep.subr.bf16.mxu0 0
      %899 = vmatpush2.bf16.msra.mxu0 0
      %900 = vmatprep.subr.bf16.mxu0 0
      %901 = vmatpush2.bf16.msra.mxu0 0
      %902 = vmatprep.mubr.bf16.mxu0 0
      %903 = vmatmul.mubr.bf16.gmra.mxu0 %v847
      %v904 = vpop.f32.mrf.mxu0
      %v905 = vadd.f32 0.0, %v904
      %v906 = vpop.f32.mrf.mxu0
      %v907 = vpop.f32.mrf.mxu0
      %v908 = vadd.f32 0.0, %v907
      %v909 = vpop.f32.mrf.mxu0
      %910 = vmatprep.mubr.bf16.mxu0 0
      %911 = vmatmul.mubr.bf16.gmra.mxu0 %v850
      %v912 = vpop.f32.mrf.mxu0
      %v913 = vadd.f32 0.0, %v912
      %v914 = vpop.f32.mrf.mxu0
      %v915 = vpop.f32.mrf.mxu0
      %v916 = vadd.f32 0.0, %v915
      %v917 = vpop.f32.mrf.mxu0
      %918 = vmatprep.mubr.bf16.mxu0 0
      %919 = vmatmul.mubr.bf16.gmra.mxu0 %v853
      %v920 = vpop.f32.mrf.mxu0
      %v921 = vadd.f32 0.0, %v920
      %v922 = vpop.f32.mrf.mxu0
      %v923 = vpop.f32.mrf.mxu0
      %v924 = vadd.f32 0.0, %v923
      %v925 = vpop.f32.mrf.mxu0
      %926 = vmatprep.mubr.bf16.mxu0 0
      %927 = vmatmul.mubr.bf16.gmra.mxu0 %v856
      %v928 = vpop.f32.mrf.mxu0
      %v929 = vadd.f32 0.0, %v928
      %v930 = vpop.f32.mrf.mxu0
      %v931 = vpop.f32.mrf.mxu0
      %v932 = vadd.f32 0.0, %v931
      %v933 = vpop.f32.mrf.mxu0
      %934 = vmatprep.mubr.bf16.mxu0 0
      %935 = vmatmul.mubr.bf16.gmra.mxu0 %v859
      %v936 = vpop.f32.mrf.mxu0
      %v937 = vadd.f32 0.0, %v936
      %v938 = vpop.f32.mrf.mxu0
      %v939 = vpop.f32.mrf.mxu0
      %v940 = vadd.f32 0.0, %v939
      %v941 = vpop.f32.mrf.mxu0
      %942 = vmatprep.mubr.bf16.mxu0 0
      %943 = vmatmul.mubr.bf16.gmra.mxu0 %v862
      %v944 = vpop.f32.mrf.mxu0
      %v945 = vadd.f32 0.0, %v944
      %v946 = vpop.f32.mrf.mxu0
      %v947 = vpop.f32.mrf.mxu0
      %v948 = vadd.f32 0.0, %v947
      %v949 = vpop.f32.mrf.mxu0
      %950 = vmatprep.mubr.bf16.mxu0 0
      %951 = vmatmul.mubr.bf16.gmra.mxu0 %v865
      %v952 = vpop.f32.mrf.mxu0
      %v953 = vadd.f32 0.0, %v952
      %v954 = vpop.f32.mrf.mxu0
      %v955 = vpop.f32.mrf.mxu0
      %v956 = vadd.f32 0.0, %v955
      %v957 = vpop.f32.mrf.mxu0
      %958 = vmatprep.mubr.bf16.mxu0 0
      %959 = vmatmul.mubr.bf16.gmra.mxu0 %v868
      %v960 = vpop.f32.mrf.mxu0
      %v961 = vadd.f32 0.0, %v960
      %v962 = vpop.f32.mrf.mxu0
      %v963 = vpop.f32.mrf.mxu0
      %v964 = vadd.f32 0.0, %v963
      %v965 = vpop.f32.mrf.mxu0
      %966 = vdwg.mxu0
      %v968 = vsel %vm523, %v790, 0
      %v971 = vsel %vm523, %v791, 0
      %v974 = vsel %vm523, %v792, 0
      %v977 = vsel %vm523, %v793, 0
      %979 = vmatprep.subr.bf16.mxu0 0
      %980 = vmatpush1.bf16.msra.mxu0 0
      %981 = vmatprep.subr.bf16.mxu0 0
      %982 = vmatpush1.bf16.msra.mxu0 0
      %983 = vmatprep.subr.bf16.mxu0 0
      %984 = vmatpush1.bf16.msra.mxu0 0
      %985 = vmatprep.subr.bf16.mxu0 0
      %986 = vmatpush1.bf16.msra.mxu0 0
      %987 = vmatprep.subr.bf16.mxu0 0
      %988 = vmatpush1.bf16.msra.mxu0 %v801
      %989 = vmatprep.subr.bf16.mxu0 0
      %990 = vmatpush1.bf16.msra.mxu0 %v800
      %991 = vmatprep.subr.bf16.mxu0 0
      %992 = vmatpush1.bf16.msra.mxu0 %v799
      %993 = vmatprep.subr.bf16.mxu0 0
      %994 = vmatpush1.bf16.msra.mxu0 %v798
      %995 = vmatprep.subr.bf16.mxu0 0
      %996 = vmatpush2.bf16.msra.mxu0 0
      %997 = vmatprep.subr.bf16.mxu0 0
      %998 = vmatpush2.bf16.msra.mxu0 0
      %999 = vmatprep.subr.bf16.mxu0 0
      %1000 = vmatpush2.bf16.msra.mxu0 0
      %1001 = vmatprep.subr.bf16.mxu0 0
      %1002 = vmatpush2.bf16.msra.mxu0 0
      %1003 = vmatprep.subr.bf16.mxu0 0
      %1004 = vmatpush2.bf16.msra.mxu0 0
      %1005 = vmatprep.subr.bf16.mxu0 0
      %1006 = vmatpush2.bf16.msra.mxu0 0
      %1007 = vmatprep.subr.bf16.mxu0 0
      %1008 = vmatpush2.bf16.msra.mxu0 0
      %1009 = vmatprep.subr.bf16.mxu0 0
      %1010 = vmatpush2.bf16.msra.mxu0 0
      %1011 = vmatprep.mubr.bf16.mxu0 0
      %1012 = vmatmul.mubr.bf16.gmra.mxu0 %v968
      %v1013 = vpop.f32.mrf.mxu0
      %v1014 = vadd.f32 %v905, %v1013
      %v1015 = vpop.f32.mrf.mxu0
      %v1016 = vpop.f32.mrf.mxu0
      %v1017 = vadd.f32 %v908, %v1016
      %v1018 = vpop.f32.mrf.mxu0
      %1019 = vmatprep.mubr.bf16.mxu0 0
      %1020 = vmatmul.mubr.bf16.gmra.mxu0 %v971
      %v1021 = vpop.f32.mrf.mxu0
      %v1022 = vadd.f32 %v913, %v1021
      %v1023 = vpop.f32.mrf.mxu0
      %v1024 = vpop.f32.mrf.mxu0
      %v1025 = vadd.f32 %v916, %v1024
      %v1026 = vpop.f32.mrf.mxu0
      %1027 = vmatprep.mubr.bf16.mxu0 0
      %1028 = vmatmul.mubr.bf16.gmra.mxu0 %v974
      %v1029 = vpop.f32.mrf.mxu0
      %v1030 = vadd.f32 %v921, %v1029
      %v1031 = vpop.f32.mrf.mxu0
      %v1032 = vpop.f32.mrf.mxu0
      %v1033 = vadd.f32 %v924, %v1032
      %v1034 = vpop.f32.mrf.mxu0
      %1035 = vmatprep.mubr.bf16.mxu0 0
      %1036 = vmatmul.mubr.bf16.gmra.mxu0 %v977
      %v1037 = vpop.f32.mrf.mxu0
      %v1038 = vadd.f32 %v929, %v1037
      %v1039 = vpop.f32.mrf.mxu0
      %v1040 = vpop.f32.mrf.mxu0
      %v1041 = vadd.f32 %v932, %v1040
      %v1042 = vpop.f32.mrf.mxu0
      %1043 = vdwg.mxu0
      %v1045 = vsel %vm523, %v794, 0
      %v1048 = vsel %vm523, %v795, 0
      %v1051 = vsel %vm523, %v796, 0
      %v1054 = vsel %vm523, %v797, 0
      %1056 = vmatprep.subr.bf16.mxu0 0
      %1057 = vmatpush1.bf16.msra.mxu0 0
      %1058 = vmatprep.subr.bf16.mxu0 0
      %1059 = vmatpush1.bf16.msra.mxu0 0
      %1060 = vmatprep.subr.bf16.mxu0 0
      %1061 = vmatpush1.bf16.msra.mxu0 0
      %1062 = vmatprep.subr.bf16.mxu0 0
      %1063 = vmatpush1.bf16.msra.mxu0 0
      %1064 = vmatprep.subr.bf16.mxu0 0
      %1065 = vmatpush1.bf16.msra.mxu0 %v805
      %1066 = vmatprep.subr.bf16.mxu0 0
      %1067 = vmatpush1.bf16.msra.mxu0 %v804
      %1068 = vmatprep.subr.bf16.mxu0 0
      %1069 = vmatpush1.bf16.msra.mxu0 %v803
      %1070 = vmatprep.subr.bf16.mxu0 0
      %1071 = vmatpush1.bf16.msra.mxu0 %v802
      %1072 = vmatprep.subr.bf16.mxu0 0
      %1073 = vmatpush2.bf16.msra.mxu0 0
      %1074 = vmatprep.subr.bf16.mxu0 0
      %1075 = vmatpush2.bf16.msra.mxu0 0
      %1076 = vmatprep.subr.bf16.mxu0 0
      %1077 = vmatpush2.bf16.msra.mxu0 0
      %1078 = vmatprep.subr.bf16.mxu0 0
      %1079 = vmatpush2.bf16.msra.mxu0 0
      %1080 = vmatprep.subr.bf16.mxu0 0
      %1081 = vmatpush2.bf16.msra.mxu0 0
      %1082 = vmatprep.subr.bf16.mxu0 0
      %1083 = vmatpush2.bf16.msra.mxu0 0
      %1084 = vmatprep.subr.bf16.mxu0 0
      %1085 = vmatpush2.bf16.msra.mxu0 0
      %1086 = vmatprep.subr.bf16.mxu0 0
      %1087 = vmatpush2.bf16.msra.mxu0 0
      %1088 = vmatprep.mubr.bf16.mxu0 0
      %1089 = vmatmul.mubr.bf16.gmra.mxu0 %v1045
      %v1090 = vpop.f32.mrf.mxu0
      %v1091 = vadd.f32 %v937, %v1090
      %v1092 = vpop.f32.mrf.mxu0
      %v1093 = vpop.f32.mrf.mxu0
      %v1094 = vadd.f32 %v940, %v1093
      %v1095 = vpop.f32.mrf.mxu0
      %1096 = vmatprep.mubr.bf16.mxu0 0
      %1097 = vmatmul.mubr.bf16.gmra.mxu0 %v1048
      %v1098 = vpop.f32.mrf.mxu0
      %v1099 = vadd.f32 %v945, %v1098
      %v1100 = vpop.f32.mrf.mxu0
      %v1101 = vpop.f32.mrf.mxu0
      %v1102 = vadd.f32 %v948, %v1101
      %v1103 = vpop.f32.mrf.mxu0
      %1104 = vmatprep.mubr.bf16.mxu0 0
      %1105 = vmatmul.mubr.bf16.gmra.mxu0 %v1051
      %v1106 = vpop.f32.mrf.mxu0
      %v1107 = vadd.f32 %v953, %v1106
      %v1108 = vpop.f32.mrf.mxu0
      %v1109 = vpop.f32.mrf.mxu0
      %v1110 = vadd.f32 %v956, %v1109
      %v1111 = vpop.f32.mrf.mxu0
      %1112 = vmatprep.mubr.bf16.mxu0 0
      %1113 = vmatmul.mubr.bf16.gmra.mxu0 %v1054
      %v1114 = vpop.f32.mrf.mxu0
      %v1115 = vadd.f32 %v961, %v1114
      %v1116 = vpop.f32.mrf.mxu0
      %v1117 = vpop.f32.mrf.mxu0
      %v1118 = vadd.f32 %v964, %v1117
      %v1119 = vpop.f32.mrf.mxu0
      %1120 = vdwg.mxu0
      %1137 = vrot.lane.b32.xlu0 %v455, 64
      %v1138 = vpop.permute.xlu0 %1137
      %1139 = vrot.lane.b32.xlu0 %v456, 64
      %v1140 = vpop.permute.xlu0 %1139
      %1141 = vrot.lane.b32.xlu0 %v457, 64
      %v1142 = vpop.permute.xlu0 %1141
      %1143 = vrot.lane.b32.xlu0 %v458, 64
      %v1144 = vpop.permute.xlu0 %1143
      %1145 = vrot.lane.b32.xlu0 %v459, 64
      %v1146 = vpop.permute.xlu0 %1145
      %1147 = vrot.lane.b32.xlu0 %v460, 64
      %v1148 = vpop.permute.xlu0 %1147
      %1149 = vrot.lane.b32.xlu0 %v461, 64
      %v1150 = vpop.permute.xlu0 %1149
      %1151 = vrot.lane.b32.xlu0 %v462, 64
      %v1152 = vpop.permute.xlu0 %1151
      %1153 = vrot.lane.b32.xlu0 %v463, 64
      %v1154 = vpop.permute.xlu0 %1153
      %1155 = vrot.lane.b32.xlu0 %v464, 64
      %v1156 = vpop.permute.xlu0 %1155
      %1157 = vrot.lane.b32.xlu0 %v465, 64
      %v1158 = vpop.permute.xlu0 %1157
      %1159 = vrot.lane.b32.xlu0 %v466, 64
      %v1160 = vpop.permute.xlu0 %1159
      %1161 = vrot.lane.b32.xlu0 %v467, 64
      %v1162 = vpop.permute.xlu0 %1161
      %1163 = vrot.lane.b32.xlu0 %v468, 64
      %v1164 = vpop.permute.xlu0 %1163
      %1165 = vrot.lane.b32.xlu0 %v469, 64
      %v1166 = vpop.permute.xlu0 %1165
      %1167 = vrot.lane.b32.xlu0 %v470, 64
      %v1168 = vpop.permute.xlu0 %1167
      %v1185 = vmul.f32 %v1014, %v1138
      %v1186 = vmul.f32 %v1017, %v1140
      %v1187 = vmul.f32 %v1022, %v1142
      %v1188 = vmul.f32 %v1025, %v1144
      %v1189 = vmul.f32 %v1030, %v1146
      %v1190 = vmul.f32 %v1033, %v1148
      %v1191 = vmul.f32 %v1038, %v1150
      %v1192 = vmul.f32 %v1041, %v1152
      %v1193 = vmul.f32 %v1091, %v1154
      %v1194 = vmul.f32 %v1094, %v1156
      %v1195 = vmul.f32 %v1099, %v1158
      %v1196 = vmul.f32 %v1102, %v1160
      %v1197 = vmul.f32 %v1107, %v1162
      %v1198 = vmul.f32 %v1110, %v1164
      %v1199 = vmul.f32 %v1115, %v1166
      %v1200 = vmul.f32 %v1118, %v1168
      %v1201 = vsub.f32 0.0, %v1185
      %v1202 = vsub.f32 0.0, %v1186
      %v1203 = vsub.f32 0.0, %v1187
      %v1204 = vsub.f32 0.0, %v1188
      %v1205 = vsub.f32 0.0, %v1189
      %v1206 = vsub.f32 0.0, %v1190
      %v1207 = vsub.f32 0.0, %v1191
      %v1208 = vsub.f32 0.0, %v1192
      %v1209 = vsub.f32 0.0, %v1193
      %v1210 = vsub.f32 0.0, %v1194
      %v1211 = vsub.f32 0.0, %v1195
      %v1212 = vsub.f32 0.0, %v1196
      %v1213 = vsub.f32 0.0, %v1197
      %v1214 = vsub.f32 0.0, %v1198
      %v1215 = vsub.f32 0.0, %v1199
      %v1216 = vsub.f32 0.0, %v1200
      %v1217 = vmul.f32 %v1201, 1.442695
      %v1218 = vpow.pop %v1217
      %v1219 = vmul.f32 %v1202, 1.442695
      %v1220 = vpow.pop %v1219
      %v1221 = vmul.f32 %v1203, 1.442695
      %v1222 = vpow.pop %v1221
      %v1223 = vmul.f32 %v1204, 1.442695
      %v1224 = vpow.pop %v1223
      %v1225 = vmul.f32 %v1205, 1.442695
      %v1226 = vpow.pop %v1225
      %v1227 = vmul.f32 %v1206, 1.442695
      %v1228 = vpow.pop %v1227
      %v1229 = vmul.f32 %v1207, 1.442695
      %v1230 = vpow.pop %v1229
      %v1231 = vmul.f32 %v1208, 1.442695
      %v1232 = vpow.pop %v1231
      %v1233 = vmul.f32 %v1209, 1.442695
      %v1234 = vpow.pop %v1233
      %v1235 = vmul.f32 %v1210, 1.442695
      %v1236 = vpow.pop %v1235
      %v1237 = vmul.f32 %v1211, 1.442695
      %v1238 = vpow.pop %v1237
      %v1239 = vmul.f32 %v1212, 1.442695
      %v1240 = vpow.pop %v1239
      %v1241 = vmul.f32 %v1213, 1.442695
      %v1242 = vpow.pop %v1241
      %v1243 = vmul.f32 %v1214, 1.442695
      %v1244 = vpow.pop %v1243
      %v1245 = vmul.f32 %v1215, 1.442695
      %v1246 = vpow.pop %v1245
      %v1247 = vmul.f32 %v1216, 1.442695
      %v1248 = vpow.pop %v1247
      %v1249 = vadd.f32 %v1218, 1.0
      %v1250 = vadd.f32 %v1220, 1.0
      %v1251 = vadd.f32 %v1222, 1.0
      %v1252 = vadd.f32 %v1224, 1.0
      %v1253 = vadd.f32 %v1226, 1.0
      %v1254 = vadd.f32 %v1228, 1.0
      %v1255 = vadd.f32 %v1230, 1.0
      %v1256 = vadd.f32 %v1232, 1.0
      %v1257 = vadd.f32 %v1234, 1.0
      %v1258 = vadd.f32 %v1236, 1.0
      %v1259 = vadd.f32 %v1238, 1.0
      %v1260 = vadd.f32 %v1240, 1.0
      %v1261 = vadd.f32 %v1242, 1.0
      %v1262 = vadd.f32 %v1244, 1.0
      %v1263 = vadd.f32 %v1246, 1.0
      %v1264 = vadd.f32 %v1248, 1.0
      %v1265 = vrcp.pop %v1249
      %v1266 = vrcp.pop %v1250
      %v1267 = vrcp.pop %v1251
      %v1268 = vrcp.pop %v1252
      %v1269 = vrcp.pop %v1253
      %v1270 = vrcp.pop %v1254
      %v1271 = vrcp.pop %v1255
      %v1272 = vrcp.pop %v1256
      %v1273 = vrcp.pop %v1257
      %v1274 = vrcp.pop %v1258
      %v1275 = vrcp.pop %v1259
      %v1276 = vrcp.pop %v1260
      %v1277 = vrcp.pop %v1261
      %v1278 = vrcp.pop %v1262
      %v1279 = vrcp.pop %v1263
      %v1280 = vrcp.pop %v1264
      %1297 = vrot.lane.b32.xlu0 %v1265, 64
      %v1298 = vpop.permute.xlu0 %1297
      %1299 = vrot.lane.b32.xlu0 %v1266, 64
      %v1300 = vpop.permute.xlu0 %1299
      %1301 = vrot.lane.b32.xlu0 %v1267, 64
      %v1302 = vpop.permute.xlu0 %1301
      %1303 = vrot.lane.b32.xlu0 %v1268, 64
      %v1304 = vpop.permute.xlu0 %1303
      %1305 = vrot.lane.b32.xlu0 %v1269, 64
      %v1306 = vpop.permute.xlu0 %1305
      %1307 = vrot.lane.b32.xlu0 %v1270, 64
      %v1308 = vpop.permute.xlu0 %1307
      %1309 = vrot.lane.b32.xlu0 %v1271, 64
      %v1310 = vpop.permute.xlu0 %1309
      %1311 = vrot.lane.b32.xlu0 %v1272, 64
      %v1312 = vpop.permute.xlu0 %1311
      %1313 = vrot.lane.b32.xlu0 %v1273, 64
      %v1314 = vpop.permute.xlu0 %1313
      %1315 = vrot.lane.b32.xlu0 %v1274, 64
      %v1316 = vpop.permute.xlu0 %1315
      %1317 = vrot.lane.b32.xlu0 %v1275, 64
      %v1318 = vpop.permute.xlu0 %1317
      %1319 = vrot.lane.b32.xlu0 %v1276, 64
      %v1320 = vpop.permute.xlu0 %1319
      %1321 = vrot.lane.b32.xlu0 %v1277, 64
      %v1322 = vpop.permute.xlu0 %1321
      %1323 = vrot.lane.b32.xlu0 %v1278, 64
      %v1324 = vpop.permute.xlu0 %1323
      %1325 = vrot.lane.b32.xlu0 %v1279, 64
      %v1326 = vpop.permute.xlu0 %1325
      %1327 = vrot.lane.b32.xlu0 %v1280, 64
      %v1328 = vpop.permute.xlu0 %1327
      %v1345 = vmul.f32 %v1185, %v1298
      %v1346 = vmul.f32 %v1186, %v1300
      %v1347 = vmul.f32 %v1187, %v1302
      %v1348 = vmul.f32 %v1188, %v1304
      %v1349 = vmul.f32 %v1189, %v1306
      %v1350 = vmul.f32 %v1190, %v1308
      %v1351 = vmul.f32 %v1191, %v1310
      %v1352 = vmul.f32 %v1192, %v1312
      %v1353 = vmul.f32 %v1193, %v1314
      %v1354 = vmul.f32 %v1194, %v1316
      %v1355 = vmul.f32 %v1195, %v1318
      %v1356 = vmul.f32 %v1196, %v1320
      %v1357 = vmul.f32 %v1197, %v1322
      %v1358 = vmul.f32 %v1198, %v1324
      %v1359 = vmul.f32 %v1199, %v1326
      %v1360 = vmul.f32 %v1200, %v1328
      %1377 = vrot.lane.b32.xlu0 %v1345, 64
      %v1378 = vpop.permute.xlu0 %1377
      %1379 = vrot.lane.b32.xlu0 %v1346, 64
      %v1380 = vpop.permute.xlu0 %1379
      %1381 = vrot.lane.b32.xlu0 %v1347, 64
      %v1382 = vpop.permute.xlu0 %1381
      %1383 = vrot.lane.b32.xlu0 %v1348, 64
      %v1384 = vpop.permute.xlu0 %1383
      %1385 = vrot.lane.b32.xlu0 %v1349, 64
      %v1386 = vpop.permute.xlu0 %1385
      %1387 = vrot.lane.b32.xlu0 %v1350, 64
      %v1388 = vpop.permute.xlu0 %1387
      %1389 = vrot.lane.b32.xlu0 %v1351, 64
      %v1390 = vpop.permute.xlu0 %1389
      %1391 = vrot.lane.b32.xlu0 %v1352, 64
      %v1392 = vpop.permute.xlu0 %1391
      %1393 = vrot.lane.b32.xlu0 %v1353, 64
      %v1394 = vpop.permute.xlu0 %1393
      %1395 = vrot.lane.b32.xlu0 %v1354, 64
      %v1396 = vpop.permute.xlu0 %1395
      %1397 = vrot.lane.b32.xlu0 %v1355, 64
      %v1398 = vpop.permute.xlu0 %1397
      %1399 = vrot.lane.b32.xlu0 %v1356, 64
      %v1400 = vpop.permute.xlu0 %1399
      %1401 = vrot.lane.b32.xlu0 %v1357, 64
      %v1402 = vpop.permute.xlu0 %1401
      %1403 = vrot.lane.b32.xlu0 %v1358, 64
      %v1404 = vpop.permute.xlu0 %1403
      %1405 = vrot.lane.b32.xlu0 %v1359, 64
      %v1406 = vpop.permute.xlu0 %1405
      %1407 = vrot.lane.b32.xlu0 %v1360, 64
      %v1408 = vpop.permute.xlu0 %1407
      %1425 = vst.msk [vmem:[%s404] sm:$0xff] %vm523, %v1378
      %1426 = vst.msk [vmem:[%s404 + $0x8] sm:$0xff] %vm523, %v1380
      %1427 = vst.msk [vmem:[%s404 + $0x10] sm:$0xff] %vm523, %v1382
      %1428 = vst.msk [vmem:[%s404 + $0x18] sm:$0xff] %vm523, %v1384
      %1429 = vst.msk [vmem:[%s404 + $0x20] sm:$0xff] %vm523, %v1386
      %1430 = vst.msk [vmem:[%s404 + $0x28] sm:$0xff] %vm523, %v1388
      %1431 = vst.msk [vmem:[%s404 + $0x30] sm:$0xff] %vm523, %v1390
      %1432 = vst.msk [vmem:[%s404 + $0x38] sm:$0xff] %vm523, %v1392
      %1433 = vst.msk [vmem:[%s404 + $0x40] sm:$0xff] %vm523, %v1394
      %1434 = vst.msk [vmem:[%s404 + $0x48] sm:$0xff] %vm523, %v1396
      %1435 = vst.msk [vmem:[%s404 + $0x50] sm:$0xff] %vm523, %v1398
      %1436 = vst.msk [vmem:[%s404 + $0x58] sm:$0xff] %vm523, %v1400
      %1437 = vst.msk [vmem:[%s404 + $0x60] sm:$0xff] %vm523, %v1402
      %1438 = vst.msk [vmem:[%s404 + $0x68] sm:$0xff] %vm523, %v1404
      %1439 = vst.msk [vmem:[%s404 + $0x70] sm:$0xff] %vm523, %v1406
      %1440 = vst.msk [vmem:[%s404 + $0x78] sm:$0xff] %vm523, %v1408
      %s1441 = smul.u32 2, %s21
      %p1442 = scmp.lt.s32.totalorder %s20, 1
      %s1443 = scalar_select %p1442, %s20, 1
      %p1444 = scmp.lt.s32.totalorder %s1441, 1
      %s1445 = scalar_select %p1444, %s1441, 1
      %s1446 = smul.addr %s1445, 8
      %s1447 = smul.addr %s1443, 16
      %s1448 = sadd.s32 %s1446, %s1447
      %s1449 = smul.addr %s1448, 8
      %s1450 = scalar_lea.vmem %s5, %s1449
      // Predicated region
      $region41: #{mossformer_module_forward.10} parent=39 // pred_check
        %p1451 = pneg %p186
      $region42: #{mossformer_module_forward.10} parent=39 // pred_check_branch
        %1453 = sbr.rel (%p1451) target = $region44
      $region43: #{mossformer_module_forward.10} parent=39 // pred_region
        %s1454 = smul.u32 2, %s21
      $region44: #{mossformer_module_forward.10} parent=39 // pred_fallthru
        _
    $region40: #{mossformer_module_forward.10} parent=5 // pred_fallthru
      _
    %p1455 = scmp.le.s32.totalorder 2, %s11
    // Predicated region
    $region45: #{mossformer_module_forward.10} parent=5 // pred_check
      %p1456 = pneg %p1455
    $region46: #{mossformer_module_forward.10} parent=5 // pred_check_branch
      %1458 = sbr.rel (%p1456) target = $region48
    $region47: #{mossformer_module_forward.10} parent=5 // pred_region
      %s1459 = ssub.s32 %s11, 2
      // Predicated region
      $region49: #{mossformer_module_forward.10} parent=47 // pred_check
        %p1460 = pneg %p192
      $region50: #{mossformer_module_forward.10} parent=47 // pred_check_branch
        %1462 = sbr.rel (%p1460) target = $region52
      $region51: #{mossformer_module_forward.10} parent=47 // pred_region
        %s1463 = smul.u32 2, %s23
        %p1464 = scmp.lt.s32.totalorder %s22, 1
        %s1465 = scalar_select %p1464, %s22, 1
        %p1466 = scmp.lt.s32.totalorder %s1463, 1
        %s1467 = scalar_select %p1466, %s1463, 1
        %s1468 = smul.addr %s1467, 8
        %s1469 = smul.addr %s1465, 16
        %s1470 = sadd.s32 %s1468, %s1469
        %s1471 = smul.addr %s1470, 8
        %s1472 = scalar_lea.vmem %s5, %s1471
      $region52: #{mossformer_module_forward.10} parent=47 // pred_fallthru
        _
    $region48: #{mossformer_module_forward.10} parent=5 // pred_fallthru
      _
  $region6: #{mossformer_module_forward.10} parent=0 // loop_footer
    %s15 = sadd.s32 1, %s11
  $region7: #{mossformer_module_forward.10} parent=0 // loop_footer_branch
    %10 = sbr.rel target = $region3
  $region8: #{mossformer_module_forward.10} parent=0 // loop_exit
    _

// kernel: mossformer_module_forward.11
$region0: #{mossformer_module_forward.11}
  #allocation0 [shape = 'u32[]', space=smem, size = 0x4, offset = 0x4, fixed_abs, tag = 'smem constant byte address 0x4 - core index']
  #allocation1 [shape = 'u32[144,128]{1,0:T(1,128)}', space=vmem, size = 0x12000, scoped, tag = 'internal scratch']
  #allocation2 [shape = 'f32[80,32]{1,0:T(8,128)}', space=vmem, size = 0xa000, scoped, tag = 'scratch operand']
  %s0 = inlined_call_operand.vmem [shape: f32[2,96,64], index: 0, kind: input, shape index: {}]
  %s1 = inlined_call_operand.vmem [shape: bf16[64,32], index: 1, kind: input, shape index: {}]
  %s2 = inlined_call_operand.vmem [shape: f32[1,32], index: 2, kind: input, shape index: {}]
  %s3 = inlined_call_operand.vmem [shape: f32[17,32], index: 3, kind: input, shape index: {}]
  %s4 = inlined_call_operand.vmem [shape: f32[2,96,32], index: 4, kind: output, shape index: {}]
  %s5 = sld [smem:[#allocation0]]
  $region105: #{mossformer_module_forward.11} parent=0
    _
  %s7 = ssub.s32 1, %s5
  %s8 = scalar_select 0, %s7, %s5
  $region1: #{mossformer_module_forward.11} parent=0
    #allocation3 [shape = 'u8[65536]{0}', space=vmem, size = 0x10000, scoped, tag = 'output window, operand 0']
    loop: start=0, step=1, limit=8
    $region2: #{mossformer_module_forward.11} parent=1 // loop_pre_header
      _
    $region3: #{mossformer_module_forward.11} parent=1 // loop_header
      %s10 = sphi 0, %s14
      %p11 = scmp.ge.s32.totalorder %s10, 8
      %s17 = sphi 0, %s29
      %s18 = sphi 0, %s25
      %s19 = sphi 0, %s17
      %s20 = sphi 0, %s18
      %s21 = sphi 0, %s19
      %s22 = sphi 0, %s20
      %s38 = sphi 0, %s40
      %s41 = sphi 0, %s38
      %s42 = sphi 0, %s41
      %s58 = sphi 0, %s42
      %s62 = sphi 0, %s62
      %s64 = sphi 0, %s62
      %s65 = sphi 0, %s64
      %s79 = sphi 0, %s65
      %s83 = sphi 0, %s83
      %s85 = sphi 0, %s83
      %s86 = sphi 0, %s85
      %s100 = sphi 0, %s86
      %s104 = sphi 0, %s104
      %s106 = sphi 0, %s104
      %s107 = sphi 0, %s106
      %s121 = sphi 0, %s107
      %s135 = sphi 0, %s137
      %s138 = sphi 0, %s135
      %s139 = sphi 0, %s138
      %s155 = sphi 0, %s139
    $region4: #{mossformer_module_forward.11} parent=1 // loop_header_branch
      %13 = sbr.rel (%p11) target = $region8
    $region5: #{mossformer_module_forward.11} parent=1 // loop_body
      %s15 = ssub.s32 %s10, 1
      %s16 = ssub.s32 %s10, 2
      %s23 = sadd.s32 1, %s18
      %p24 = scmp.ge.s32.totalorder %s23, 3
      %s25 = scalar_select %p24, 0, %s23
      %s26 = sadd.s32 1, %s17
      %s27 = scalar_select %p24, %s26, %s17
      %p28 = scmp.ge.s32.totalorder %s27, 2
      %s29 = scalar_select %p28, 0, %s27
      %p30 = scmp.lt.s32.totalorder %s18, 1
      %s31 = scalar_select %p30, %s18, 1
      %p32 = scmp.lt.s32.totalorder %s25, 1
      %s33 = scalar_select %p32, %s25, 1
      %s34 = ssub.s32 %s17, %s29
      %s35 = ssub.s32 %s31, %s33
      %s36 = sor.u32 %s34, %s35
      %p37 = scmp.eq.s32.totalorder %s36, 0
      %s39 = sadd.s32 %s38, 1
      %s40 = scalar_select %p37, %s38, %s39
      %p43 = pneg %p37
      %p44 = scmp.eq.s32.totalorder %s10, 5
      %p45 = por %p43, %p44
      %p46 = scmp.ne.s32.totalorder %s38, %s41
      %p47 = scmp.eq.s32.totalorder %s10, 0
      %p48 = por %p46, %p47
      %p49 = scmp.ne.s32.totalorder %s38, %s41
      %p50 = scmp.eq.s32.totalorder %s15, 5
      %p51 = por %p49, %p50
      %p52 = scmp.ne.s32.totalorder %s41, %s42
      %p53 = scmp.eq.s32.totalorder %s15, 0
      %p54 = por %p52, %p53
      %p55 = scmp.ne.s32.totalorder %s41, %s42
      %p56 = scmp.eq.s32.totalorder %s16, 5
      %p57 = por %p55, %p56
      %p59 = scmp.ne.s32.totalorder %s42, %s58
      %p60 = scmp.eq.s32.totalorder %s16, 0
      %p61 = por %p59, %p60
      %s63 = sadd.s32 %s62, 1
      %p66 = scmp.eq.s32.totalorder %s10, 5
      %p67 = scmp.ne.s32.totalorder %s62, %s64
      %p68 = scmp.eq.s32.totalorder %s10, 0
      %p69 = por %p67, %p68
      %p70 = scmp.ne.s32.totalorder %s62, %s64
      %p71 = scmp.eq.s32.totalorder %s15, 5
      %p72 = por %p70, %p71
      %p73 = scmp.ne.s32.totalorder %s64, %s65
      %p74 = scmp.eq.s32.totalorder %s15, 0
      %p75 = por %p73, %p74
      %p76 = scmp.ne.s32.totalorder %s64, %s65
      %p77 = scmp.eq.s32.totalorder %s16, 5
      %p78 = por %p76, %p77
      %p80 = scmp.ne.s32.totalorder %s65, %s79
      %p81 = scmp.eq.s32.totalorder %s16, 0
      %p82 = por %p80, %p81
      %s84 = sadd.s32 %s83, 1
      %p87 = scmp.eq.s32.totalorder %s10, 5
      %p88 = scmp.ne.s32.totalorder %s83, %s85
      %p89 = scmp.eq.s32.totalorder %s10, 0
      %p90 = por %p88, %p89
      %p91 = scmp.ne.s32.totalorder %s83, %s85
      %p92 = scmp.eq.s32.totalorder %s15, 5
      %p93 = por %p91, %p92
      %p94 = scmp.ne.s32.totalorder %s85, %s86
      %p95 = scmp.eq.s32.totalorder %s15, 0
      %p96 = por %p94, %p95
      %p97 = scmp.ne.s32.totalorder %s85, %s86
      %p98 = scmp.eq.s32.totalorder %s16, 5
      %p99 = por %p97, %p98
      %p101 = scmp.ne.s32.totalorder %s86, %s100
      %p102 = scmp.eq.s32.totalorder %s16, 0
      %p103 = por %p101, %p102
      %s105 = sadd.s32 %s104, 1
      %p108 = scmp.eq.s32.totalorder %s10, 5
      %p109 = scmp.ne.s32.totalorder %s104, %s106
      %p110 = scmp.eq.s32.totalorder %s10, 0
      %p111 = por %p109, %p110
      %p112 = scmp.ne.s32.totalorder %s104, %s106
      %p113 = scmp.eq.s32.totalorder %s15, 5
      %p114 = por %p112, %p113
      %p115 = scmp.ne.s32.totalorder %s106, %s107
      %p116 = scmp.eq.s32.totalorder %s15, 0
      %p117 = por %p115, %p116
      %p118 = scmp.ne.s32.totalorder %s106, %s107
      %p119 = scmp.eq.s32.totalorder %s16, 5
      %p120 = por %p118, %p119
      %p122 = scmp.ne.s32.totalorder %s107, %s121
      %p123 = scmp.eq.s32.totalorder %s16, 0
      %p124 = por %p122, %p123
      %s125 = ssub.s32 %s18, 1
      %p126 = scmp.gt.s32.totalorder %s125, 0
      %s127 = scalar_select %p126, %s125, 0
      %s128 = ssub.s32 %s25, 1
      %p129 = scmp.gt.s32.totalorder %s128, 0
      %s130 = scalar_select %p129, %s128, 0
      %s131 = ssub.s32 %s17, %s29
      %s132 = ssub.s32 %s127, %s130
      %s133 = sor.u32 %s131, %s132
      %p134 = scmp.eq.s32.totalorder %s133, 0
      %s136 = sadd.s32 %s135, 1
      %s137 = scalar_select %p134, %s135, %s136
      %p140 = pneg %p134
      %p141 = scmp.eq.s32.totalorder %s10, 5
      %p142 = por %p140, %p141
      %p143 = scmp.ne.s32.totalorder %s135, %s138
      %p144 = scmp.eq.s32.totalorder %s10, 0
      %p145 = por %p143, %p144
      %p146 = scmp.ne.s32.totalorder %s135, %s138
      %p147 = scmp.eq.s32.totalorder %s15, 5
      %p148 = por %p146, %p147
      %p149 = scmp.ne.s32.totalorder %s138, %s139
      %p150 = scmp.eq.s32.totalorder %s15, 0
      %p151 = por %p149, %p150
      %p152 = scmp.ne.s32.totalorder %s138, %s139
      %p153 = scmp.eq.s32.totalorder %s16, 5
      %p154 = por %p152, %p153
      %p156 = scmp.ne.s32.totalorder %s139, %s155
      %p157 = scmp.eq.s32.totalorder %s16, 0
      %p158 = por %p156, %p157
      %p159 = scmp.le.s32.totalorder 1, %s10
      %p160 = scmp.lt.s32.totalorder %s10, 7
      %p161 = pnand %p159, %p160
      %p162 = pneg %p161
      // Predicated region
      $region9: #{mossformer_module_forward.11} parent=5 // pred_check
        _
      $region10: #{mossformer_module_forward.11} parent=5 // pred_check_branch
        %164 = sbr.rel (%p161) target = $region12
      $region11: #{mossformer_module_forward.11} parent=5 // pred_region
        %s165 = ssub.s32 %s10, 1
        // Predicated region
        $region13: #{mossformer_module_forward.11} parent=11 // pred_check
          %p166 = pneg %p75
        $region14: #{mossformer_module_forward.11} parent=11 // pred_check_branch
          %168 = sbr.rel (%p166) target = $region16
        $region15: #{mossformer_module_forward.11} parent=11 // pred_region
          _
        $region16: #{mossformer_module_forward.11} parent=11 // pred_fallthru
          _
        // Predicated region
        $region17: #{mossformer_module_forward.11} parent=11 // pred_check
          %p169 = pneg %p96
        $region18: #{mossformer_module_forward.11} parent=11 // pred_check_branch
          %171 = sbr.rel (%p169) target = $region20
        $region19: #{mossformer_module_forward.11} parent=11 // pred_region
          _
        $region20: #{mossformer_module_forward.11} parent=11 // pred_fallthru
          _
        // Predicated region
        $region21: #{mossformer_module_forward.11} parent=11 // pred_check
          %p172 = pneg %p117
        $region22: #{mossformer_module_forward.11} parent=11 // pred_check_branch
          %174 = sbr.rel (%p172) target = $region24
        $region23: #{mossformer_module_forward.11} parent=11 // pred_region
          _
        $region24: #{mossformer_module_forward.11} parent=11 // pred_fallthru
          _
      $region12: #{mossformer_module_forward.11} parent=5 // pred_fallthru
        _
      %p175 = scmp.lt.s32.totalorder %s10, 6
      // Predicated region
      $region25: #{mossformer_module_forward.11} parent=5 // pred_check
        %p176 = pneg %p175
      $region26: #{mossformer_module_forward.11} parent=5 // pred_check_branch
        %178 = sbr.rel (%p176) target = $region28
      $region27: #{mossformer_module_forward.11} parent=5 // pred_region
        // Predicated region
        $region29: #{mossformer_module_forward.11} parent=27 // pred_check
          %p179 = pneg %p48
        $region30: #{mossformer_module_forward.11} parent=27 // pred_check_branch
          %181 = sbr.rel (%p179) target = $region32
        $region31: #{mossformer_module_forward.11} parent=27 // pred_region
          %p182 = scmp.lt.s32.totalorder %s18, 1
          %s183 = scalar_select %p182, %s18, 1
          %s184 = smul.u32 8, %s183
          %s185 = ssub.s32 12, %s184
          %p186 = scmp.lt.s32.totalorder %s185, 8
          %s187 = scalar_select %p186, %s185, 8
          %s188 = smul.u32 128, %s187
          %p189 = scmp.lt.s32.totalorder %s17, 1
          %s190 = scalar_select %p189, %s17, 1
          %p191 = scmp.lt.s32.totalorder %s184, 11
          %s192 = scalar_select %p191, %s184, 11
          %s193 = smul.addr %s190, 12
          %s194 = sadd.s32 %s192, %s193
          %s195 = smul.addr %s194, 8
          %s196 = scalar_lea.vmem %s0, %s195
          %p197 = scmp.lt.s32.totalorder %s18, 1
          %s198 = scalar_select %p197, %s18, 1
          %s199 = smul.u32 8, %s198
          %s200 = ssub.s32 12, %s199
          %p201 = scmp.lt.s32.totalorder %s200, 8
          %s202 = scalar_select %p201, %s200, 8
          %s203 = smul.u32 128, %s202
        $region32: #{mossformer_module_forward.11} parent=27 // pred_fallthru
          _
      $region28: #{mossformer_module_forward.11} parent=5 // pred_fallthru
        _
      %p204 = scmp.le.s32.totalorder 1, %s10
      %p205 = scmp.lt.s32.totalorder %s10, 7
      %p206 = pnand %p204, %p205
      %p207 = pneg %p206
      // Predicated region
      $region33: #{mossformer_module_forward.11} parent=5 // pred_check
        _
      $region34: #{mossformer_module_forward.11} parent=5 // pred_check_branch
        %209 = sbr.rel (%p206) target = $region36
      $region35: #{mossformer_module_forward.11} parent=5 // pred_region
        %s210 = ssub.s32 %s10, 1
        %p211 = scmp.lt.s32.totalorder %s20, 1
        %s212 = scalar_select %p211, %s20, 1
        %s213 = smul.u32 8, %s212
        %s214 = ssub.s32 12, %s213
        %p215 = scmp.lt.s32.totalorder %s214, 8
        %s216 = scalar_select %p215, %s214, 8
        %s217 = smul.u32 128, %s216
        %p218 = scmp.lt.s32.totalorder %s19, 1
        %s219 = scalar_select %p218, %s19, 1
        %p220 = scmp.lt.s32.totalorder %s213, 11
        %s221 = scalar_select %p220, %s213, 11
        %s222 = smul.addr %s219, 12
        %s223 = sadd.s32 %s221, %s222
        %s224 = smul.addr %s223, 8
        %s225 = scalar_lea.vmem %s0, %s224
        %p226 = pneg %p54
        %p227 = pneg %p51
        %p228 = pneg %p75
        %p229 = pneg %p72
        %p230 = pneg %p96
        %p231 = pneg %p93
        %p232 = pneg %p117
        %p233 = pneg %p114
        %p234 = pneg %p151
        %p235 = pneg %p148
        %s236 = sand.u32 %s138, 1
        %s237 = sand.u32 %s138, 1
        %s238 = smul.addr %s237, 64
        %s239 = scalar_lea.vmem [#allocation3], %s238
        %p240 = scmp.lt.s32.totalorder %s20, 1
        %s241 = scalar_select %p240, %s20, 1
        %s242 = smul.u32 8, %s241
        %s243 = ssub.s32 12, %s242
        %p244 = scmp.lt.s32.totalorder %s243, 8
        %s245 = scalar_select %p244, %s243, 8
        %s246 = smul.u32 128, %s245
        %p247 = scmp.lt.s32.totalorder %s19, 1
        %s248 = scalar_select %p247, %s19, 1
        %p249 = scmp.lt.s32.totalorder %s242, 11
        %s250 = scalar_select %p249, %s242, 11
        %s251 = smul.addr %s248, 12
        %s252 = sadd.s32 %s250, %s251
        %s253 = smul.addr %s252, 8
        %s254 = scalar_lea.vmem %s0, %s253
        %p255 = scmp.lt.s32.totalorder %s20, 1
        %s256 = scalar_select %p255, %s20, 1
        %s257 = smul.u32 8, %s256
        %s258 = ssub.s32 12, %s257
        %p259 = scmp.lt.s32.totalorder %s258, 8
        %s260 = scalar_select %p259, %s258, 8
        %s261 = smul.u32 128, %s260
        %s262 = ssub.s32 %s20, 1
        %p263 = scmp.gt.s32.totalorder %s262, 0
        %s264 = scalar_select %p263, %s262, 0
        %s265 = smul.u32 8, %s264
        %s266 = ssub.s32 12, %s265
        %p267 = scmp.lt.s32.totalorder %s266, 8
        %s268 = scalar_select %p267, %s266, 8
        %s269 = smul.u32 128, %s268
        %v271 = vld [vmem:[%s254] sm:$0xff]
        %v272 = vld [vmem:[%s254 + $0x8] sm:$0xff]
        %v273 = vld [vmem:[%s254 + $0x10] sm:$0xff]
        %v274 = vld [vmem:[%s254 + $0x18] sm:$0xff]
        %v275 = vld [vmem:[%s254 + $0x20] sm:$0xff]
        %v276 = vld [vmem:[%s254 + $0x28] sm:$0xff]
        %v277 = vld [vmem:[%s254 + $0x30] sm:$0xff]
        %v278 = vld [vmem:[%s254 + $0x38] sm:$0xff]
        %v279 = vmul.f32 %v271, %v271
        %v280 = vmul.f32 %v272, %v272
        %v281 = vmul.f32 %v273, %v273
        %v282 = vmul.f32 %v274, %v274
        %v283 = vmul.f32 %v275, %v275
        %v284 = vmul.f32 %v276, %v276
        %v285 = vmul.f32 %v277, %v277
        %v286 = vmul.f32 %v278, %v278
        %vm287 = vcmask 523264
        %v288 = vsel %vm287, %v279, 0.0
        %289 = vadd.xlane.f32.xlu0 %v288
        %v290 = vpop.xlane.xlu0 %289
        %v291 = vsel %vm287, %v280, 0.0
        %292 = vadd.xlane.f32.xlu0 %v291
        %v293 = vpop.xlane.xlu0 %292
        %v294 = vsel %vm287, %v281, 0.0
        %295 = vadd.xlane.f32.xlu0 %v294
        %v296 = vpop.xlane.xlu0 %295
        %v297 = vsel %vm287, %v282, 0.0
        %298 = vadd.xlane.f32.xlu0 %v297
        %v299 = vpop.xlane.xlu0 %298
        %v300 = vsel %vm287, %v283, 0.0
        %301 = vadd.xlane.f32.xlu0 %v300
        %v302 = vpop.xlane.xlu0 %301
        %v303 = vsel %vm287, %v284, 0.0
        %304 = vadd.xlane.f32.xlu0 %v303
        %v305 = vpop.xlane.xlu0 %304
        %v306 = vsel %vm287, %v285, 0.0
        %307 = vadd.xlane.f32.xlu0 %v306
        %v308 = vpop.xlane.xlu0 %307
        %v309 = vsel %vm287, %v286, 0.0
        %310 = vadd.xlane.f32.xlu0 %v309
        %v311 = vpop.xlane.xlu0 %310
        %v312 = vrsqrt.pop %v290
        %v313 = vmul.f32 %v290, %v312
        %vm314 = vcmp.eq.f32.partialorder %v290, inf
        %v315 = vsel %vm314, %v290, %v313
        %vm316 = vcmp.eq.f32.partialorder %v290, 0.0
        %v317 = vand.u32 %v290, 2147483648
        %v318 = vsel %vm316, %v317, %v315
        %v319 = vrsqrt.pop %v293
        %v320 = vmul.f32 %v293, %v319
        %vm321 = vcmp.eq.f32.partialorder %v293, inf
        %v322 = vsel %vm321, %v293, %v320
        %vm323 = vcmp.eq.f32.partialorder %v293, 0.0
        %v324 = vand.u32 %v293, 2147483648
        %v325 = vsel %vm323, %v324, %v322
        %v326 = vrsqrt.pop %v296
        %v327 = vmul.f32 %v296, %v326
        %vm328 = vcmp.eq.f32.partialorder %v296, inf
        %v329 = vsel %vm328, %v296, %v327
        %vm330 = vcmp.eq.f32.partialorder %v296, 0.0
        %v331 = vand.u32 %v296, 2147483648
        %v332 = vsel %vm330, %v331, %v329
        %v333 = vrsqrt.pop %v299
        %v334 = vmul.f32 %v299, %v333
        %vm335 = vcmp.eq.f32.partialorder %v299, inf
        %v336 = vsel %vm335, %v299, %v334
        %vm337 = vcmp.eq.f32.partialorder %v299, 0.0
        %v338 = vand.u32 %v299, 2147483648
        %v339 = vsel %vm337, %v338, %v336
        %v340 = vrsqrt.pop %v302
        %v341 = vmul.f32 %v302, %v340
        %vm342 = vcmp.eq.f32.partialorder %v302, inf
        %v343 = vsel %vm342, %v302, %v341
        %vm344 = vcmp.eq.f32.partialorder %v302, 0.0
        %v345 = vand.u32 %v302, 2147483648
        %v346 = vsel %vm344, %v345, %v343
        %v347 = vrsqrt.pop %v305
        %v348 = vmul.f32 %v305, %v347
        %vm349 = vcmp.eq.f32.partialorder %v305, inf
        %v350 = vsel %vm349, %v305, %v348
        %vm351 = vcmp.eq.f32.partialorder %v305, 0.0
        %v352 = vand.u32 %v305, 2147483648
        %v353 = vsel %vm351, %v352, %v350
        %v354 = vrsqrt.pop %v308
        %v355 = vmul.f32 %v308, %v354
        %vm356 = vcmp.eq.f32.partialorder %v308, inf
        %v357 = vsel %vm356, %v308, %v355
        %vm358 = vcmp.eq.f32.partialorder %v308, 0.0
        %v359 = vand.u32 %v308, 2147483648
        %v360 = vsel %vm358, %v359, %v357
        %v361 = vrsqrt.pop %v311
        %v362 = vmul.f32 %v311, %v361
        %vm363 = vcmp.eq.f32.partialorder %v311, inf
        %v364 = vsel %vm363, %v311, %v362
        %vm365 = vcmp.eq.f32.partialorder %v311, 0.0
        %v366 = vand.u32 %v311, 2147483648
        %v367 = vsel %vm365, %v366, %v364
        %v368 = vmul.f32 %v318, 0.125
        %v369 = vmul.f32 %v325, 0.125
        %v370 = vmul.f32 %v332, 0.125
        %v371 = vmul.f32 %v339, 0.125
        %v372 = vmul.f32 %v346, 0.125
        %v373 = vmul.f32 %v353, 0.125
        %v374 = vmul.f32 %v360, 0.125
        %v375 = vmul.f32 %v367, 0.125
        %v376 = vmax.f32 %v368, 1e-05
        %v377 = vmax.f32 %v369, 1e-05
        %v378 = vmax.f32 %v370, 1e-05
        %v379 = vmax.f32 %v371, 1e-05
        %v380 = vmax.f32 %v372, 1e-05
        %v381 = vmax.f32 %v373, 1e-05
        %v382 = vmax.f32 %v374, 1e-05
        %v383 = vmax.f32 %v375, 1e-05
        %v384 = vrcp.pop %v376
        %v385 = vmul.f32 %v271, %v384
        %v386 = vrcp.pop %v377
        %v387 = vmul.f32 %v272, %v386
        %v388 = vrcp.pop %v378
        %v389 = vmul.f32 %v273, %v388
        %v390 = vrcp.pop %v379
        %v391 = vmul.f32 %v274, %v390
        %v392 = vrcp.pop %v380
        %v393 = vmul.f32 %v275, %v392
        %v394 = vrcp.pop %v381
        %v395 = vmul.f32 %v276, %v394
        %v396 = vrcp.pop %v382
        %v397 = vmul.f32 %v277, %v396
        %v398 = vrcp.pop %v383
        %v399 = vmul.f32 %v278, %v398
        %v400 = vpack.c.bf16 %v387, %v385
        %v401 = vpack.c.bf16 %v391, %v389
        %v402 = vpack.c.bf16 %v395, %v393
        %v403 = vpack.c.bf16 %v399, %v397
        %v404 = vld [vmem:[%s1] sm:$0xf]
        %v405 = vld [vmem:[%s1 + $0x4] sm:$0xf]
        %v406 = vld [vmem:[%s1 + $0x8] sm:$0xf]
        %v407 = vld [vmem:[%s1 + $0xc] sm:$0xf]
        %v408 = vld [vmem:[%s1 + $0x10] sm:$0xf]
        %v409 = vld [vmem:[%s1 + $0x14] sm:$0xf]
        %v410 = vld [vmem:[%s1 + $0x18] sm:$0xf]
        %v411 = vld [vmem:[%s1 + $0x1c] sm:$0xf]
        %v412 = vld [vmem:[%s2] sm:$0x1]
        %v414 = vlaneseq
        %v415 = vshrl.u32 %v414, 7
        %v416 = vsub.s32 0, %v415
        %v417 = vrot.slane %v412, %v416
        %v427 = vunpack.c.l.b16 %v404
        %v428 = vunpack.c.l.b16 %v405
        %v429 = vunpack.c.l.b16 %v406
        %v430 = vunpack.c.l.b16 %v407
        %v431 = vunpack.c.l.b16 %v408
        %v432 = vunpack.c.l.b16 %v409
        %v433 = vunpack.c.l.b16 %v410
        %v434 = vunpack.c.l.b16 %v411
        %v435 = vpack.c.b16 %v428, %v427
        %v436 = vpack.c.b16 %v430, %v429
        %v437 = vpack.c.b16 %v432, %v431
        %v438 = vpack.c.b16 %v434, %v433
        %v444 = vsel %vm287, %v400, 0
        %v447 = vsel %vm287, %v401, 0
        %v450 = vsel %vm287, %v402, 0
        %v453 = vsel %vm287, %v403, 0
        %455 = vmatprep.subr.bf16.mxu0 0
        %456 = vmatpush1.bf16.msra.mxu0 0
        %457 = vmatprep.subr.bf16.mxu0 0
        %458 = vmatpush1.bf16.msra.mxu0 0
        %459 = vmatprep.subr.bf16.mxu0 0
        %460 = vmatpush1.bf16.msra.mxu0 0
        %461 = vmatprep.subr.bf16.mxu0 0
        %462 = vmatpush1.bf16.msra.mxu0 0
        %463 = vmatprep.subr.bf16.mxu0 0
        %464 = vmatpush1.bf16.msra.mxu0 %v438
        %465 = vmatprep.subr.bf16.mxu0 0
        %466 = vmatpush1.bf16.msra.mxu0 %v437
        %467 = vmatprep.subr.bf16.mxu0 0
        %468 = vmatpush1.bf16.msra.mxu0 %v436
        %469 = vmatprep.subr.bf16.mxu0 0
        %470 = vmatpush1.bf16.msra.mxu0 %v435
        %471 = vmatprep.subr.bf16.mxu0 0
        %472 = vmatpush2.bf16.msra.mxu0 0
        %473 = vmatprep.subr.bf16.mxu0 0
        %474 = vmatpush2.bf16.msra.mxu0 0
        %475 = vmatprep.subr.bf16.mxu0 0
        %476 = vmatpush2.bf16.msra.mxu0 0
        %477 = vmatprep.subr.bf16.mxu0 0
        %478 = vmatpush2.bf16.msra.mxu0 0
        %479 = vmatprep.subr.bf16.mxu0 0
        %480 = vmatpush2.bf16.msra.mxu0 0
        %481 = vmatprep.subr.bf16.mxu0 0
        %482 = vmatpush2.bf16.msra.mxu0 0
        %483 = vmatprep.subr.bf16.mxu0 0
        %484 = vmatpush2.bf16.msra.mxu0 0
        %485 = vmatprep.subr.bf16.mxu0 0
        %486 = vmatpush2.bf16.msra.mxu0 0
        %487 = vmatprep.mubr.bf16.mxu0 0
        %488 = vmatmul.mubr.bf16.gmra.mxu0 %v444
        %v489 = vpop.f32.mrf.mxu0
        %v490 = vadd.f32 %v417, %v489
        %v491 = vpop.f32.mrf.mxu0
        %v492 = vpop.f32.mrf.mxu0
        %v493 = vadd.f32 %v417, %v492
        %v494 = vpop.f32.mrf.mxu0
        %495 = vmatprep.mubr.bf16.mxu0 0
        %496 = vmatmul.mubr.bf16.gmra.mxu0 %v447
        %v497 = vpop.f32.mrf.mxu0
        %v498 = vadd.f32 %v417, %v497
        %v499 = vpop.f32.mrf.mxu0
        %v500 = vpop.f32.mrf.mxu0
        %v501 = vadd.f32 %v417, %v500
        %v502 = vpop.f32.mrf.mxu0
        %503 = vmatprep.mubr.bf16.mxu0 0
        %504 = vmatmul.mubr.bf16.gmra.mxu0 %v450
        %v505 = vpop.f32.mrf.mxu0
        %v506 = vadd.f32 %v417, %v505
        %v507 = vpop.f32.mrf.mxu0
        %v508 = vpop.f32.mrf.mxu0
        %v509 = vadd.f32 %v417, %v508
        %v510 = vpop.f32.mrf.mxu0
        %511 = vmatprep.mubr.bf16.mxu0 0
        %512 = vmatmul.mubr.bf16.gmra.mxu0 %v453
        %v513 = vpop.f32.mrf.mxu0
        %v514 = vadd.f32 %v417, %v513
        %v515 = vpop.f32.mrf.mxu0
        %v516 = vpop.f32.mrf.mxu0
        %v517 = vadd.f32 %v417, %v516
        %v518 = vpop.f32.mrf.mxu0
        %519 = vdwg.mxu0
        %v520 = vsub.f32 0.0, %v490
        %v521 = vsub.f32 0.0, %v493
        %v522 = vsub.f32 0.0, %v498
        %v523 = vsub.f32 0.0, %v501
        %v524 = vsub.f32 0.0, %v506
        %v525 = vsub.f32 0.0, %v509
        %v526 = vsub.f32 0.0, %v514
        %v527 = vsub.f32 0.0, %v517
        %v528 = vmul.f32 %v520, 1.442695
        %v529 = vpow.pop %v528
        %v530 = vmul.f32 %v521, 1.442695
        %v531 = vpow.pop %v530
        %v532 = vmul.f32 %v522, 1.442695
        %v533 = vpow.pop %v532
        %v534 = vmul.f32 %v523, 1.442695
        %v535 = vpow.pop %v534
        %v536 = vmul.f32 %v524, 1.442695
        %v537 = vpow.pop %v536
        %v538 = vmul.f32 %v525, 1.442695
        %v539 = vpow.pop %v538
        %v540 = vmul.f32 %v526, 1.442695
        %v541 = vpow.pop %v540
        %v542 = vmul.f32 %v527, 1.442695
        %v543 = vpow.pop %v542
        %v544 = vadd.f32 %v529, 1.0
        %v545 = vadd.f32 %v531, 1.0
        %v546 = vadd.f32 %v533, 1.0
        %v547 = vadd.f32 %v535, 1.0
        %v548 = vadd.f32 %v537, 1.0
        %v549 = vadd.f32 %v539, 1.0
        %v550 = vadd.f32 %v541, 1.0
        %v551 = vadd.f32 %v543, 1.0
        %v552 = vrcp.pop %v544
        %v553 = vrcp.pop %v545
        %v554 = vrcp.pop %v546
        %v555 = vrcp.pop %v547
        %v556 = vrcp.pop %v548
        %v557 = vrcp.pop %v549
        %v558 = vrcp.pop %v550
        %v559 = vrcp.pop %v551
        %v560 = vmul.f32 %v490, %v552
        %v561 = vmul.f32 %v493, %v553
        %v562 = vmul.f32 %v498, %v554
        %v563 = vmul.f32 %v501, %v555
        %v564 = vmul.f32 %v506, %v556
        %v565 = vmul.f32 %v509, %v557
        %v566 = vmul.f32 %v514, %v558
        %v567 = vmul.f32 %v517, %v559
        %s568 = smul.u32 %s20, 64
        %v569 = vlaneseq
        %v570 = vshrl.u32 %v569, 7
        %v571 = vadd.s32 %v570, 8
        %v572 = vadd.s32 %v570, 16
        %v573 = vadd.s32 %v570, 24
        %v574 = vadd.s32 %v570, 32
        %v575 = vadd.s32 %v570, 40
        %v576 = vadd.s32 %v570, 48
        %v577 = vadd.s32 %v570, 56
        %v578 = vstv %s568
        %v579 = vadd.s32 %v578, %v570
        %v580 = vadd.s32 %v578, %v571
        %v581 = vadd.s32 %v578, %v572
        %v582 = vadd.s32 %v578, %v573
        %v583 = vadd.s32 %v578, %v574
        %v584 = vadd.s32 %v578, %v575
        %v585 = vadd.s32 %v578, %v576
        %v586 = vadd.s32 %v578, %v577
        %vm587 = vcmp.lt.s32.totalorder %v579, 96
        %vm588 = vcmp.lt.s32.totalorder %v580, 96
        %vm589 = vcmp.lt.s32.totalorder %v581, 96
        %vm590 = vcmp.lt.s32.totalorder %v582, 96
        %vm591 = vcmp.lt.s32.totalorder %v583, 96
        %vm592 = vcmp.lt.s32.totalorder %v584, 96
        %vm593 = vcmp.lt.s32.totalorder %v585, 96
        %vm594 = vcmp.lt.s32.totalorder %v586, 96
        %p595 = scmp.lt.s32.totalorder %s20, 2
        %s596 = scalar_select %p595, 1, 0
        %v597 = vstv %s596
        %vm598 = vcmp.eq.s32.totalorder %v597, 1
        %vm599 = vmand %vm587, %vm598
        %vm600 = vmand %vm588, %vm598
        %vm601 = vmand %vm589, %vm598
        %vm602 = vmand %vm590, %vm598
        %vm603 = vmand %vm591, %vm598
        %vm604 = vmand %vm592, %vm598
        %vm605 = vmand %vm593, %vm598
        %vm606 = vmand %vm594, %vm598
        %v607 = vsel %vm599, 1, 0
        %v608 = vsel %vm600, 1, 0
        %v609 = vsel %vm601, 1, 0
        %v610 = vsel %vm602, 1, 0
        %v611 = vsel %vm603, 1, 0
        %v612 = vsel %vm604, 1, 0
        %v613 = vsel %vm605, 1, 0
        %v614 = vsel %vm606, 1, 0
        %vm615 = vcmp.eq.s32.totalorder %v607, 1
        %vm616 = vcmp.eq.s32.totalorder %v608, 1
        %vm617 = vcmp.eq.s32.totalorder %v609, 1
        %vm618 = vcmp.eq.s32.totalorder %v610, 1
        %vm619 = vcmp.eq.s32.totalorder %v611, 1
        %vm620 = vcmp.eq.s32.totalorder %v612, 1
        %vm621 = vcmp.eq.s32.totalorder %v613, 1
        %vm622 = vcmp.eq.s32.totalorder %v614, 1
        %v623 = vsel %vm615, %v560, 0.0
        %v624 = vsel %vm616, %v561, 0.0
        %v625 = vsel %vm617, %v562, 0.0
        %v626 = vsel %vm618, %v563, 0.0
        %v627 = vsel %vm619, %v564, 0.0
        %v628 = vsel %vm620, %v565, 0.0
        %v629 = vsel %vm621, %v566, 0.0
        %v630 = vsel %vm622, %v567, 0.0
        %p631 = scmp.eq.s32.totalorder %s20, 0
        // Predicated region
        $region37: #{mossformer_module_forward.11} parent=35 // pred_check
          %p632 = pneg %p631
        $region38: #{mossformer_module_forward.11} parent=35 // pred_check_branch
          %634 = sbr.rel (%p632) target = $region40
        $region39: #{mossformer_module_forward.11} parent=35 // pred_region
          %vm635 = vcmask 261120
          %636 = vst.msk [vmem:[#allocation2] sm:$0xff] %vm635, 0.0
          %637 = vst.msk [vmem:[#allocation2 + $0x8] sm:$0xff] %vm635, 0.0
          %638 = vst.msk [vmem:[#allocation2 + $0x10] sm:$0xff] %vm635, 0.0
          %639 = vst.msk [vmem:[#allocation2 + $0x18] sm:$0xff] %vm635, 0.0
          %640 = vst.msk [vmem:[#allocation2 + $0x20] sm:$0xff] %vm635, 0.0
          %641 = vst.msk [vmem:[#allocation2 + $0x28] sm:$0xff] %vm635, 0.0
          %642 = vst.msk [vmem:[#allocation2 + $0x30] sm:$0xff] %vm635, 0.0
          %643 = vst.msk [vmem:[#allocation2 + $0x38] sm:$0xff] %vm635, 0.0
          %644 = vst.msk [vmem:[#allocation2 + $0x40] sm:$0xff] %vm635, 0.0
          %645 = vst.msk [vmem:[#allocation2 + $0x48] sm:$0xff] %vm635, 0.0
        $region40: #{mossformer_module_forward.11} parent=35 // pred_fallthru
          _
        %vm646 = vcmask 261120
        %647 = vst.msk [vmem:[#allocation2 + $0x48] sm:$0xff] %vm646, %v623
        %p648 = scmp.gt.s32.totalorder %s20, 0
        // Predicated region
        $region41: #{mossformer_module_forward.11} parent=35 // pred_check
          %p649 = pneg %p648
        $region42: #{mossformer_module_forward.11} parent=35 // pred_check_branch
          %651 = sbr.rel (%p649) target = $region44
        $region43: #{mossformer_module_forward.11} parent=35 // pred_region
          %v652 = vld [vmem:[#allocation2] sm:$0xff]
          %v653 = vld [vmem:[#allocation2 + $0x8] sm:$0xff]
          %v654 = vld [vmem:[#allocation2 + $0x10] sm:$0xff]
          %v655 = vld [vmem:[#allocation2 + $0x18] sm:$0xff]
          %v656 = vld [vmem:[#allocation2 + $0x20] sm:$0xff]
          %v657 = vld [vmem:[#allocation2 + $0x28] sm:$0xff]
          %v658 = vld [vmem:[#allocation2 + $0x30] sm:$0xff]
          %v659 = vld [vmem:[#allocation2 + $0x38] sm:$0xff]
          %v660 = vld [vmem:[%s3] sm:$0x1]
          %v661 = vlaneseq
          %v662 = vshrl.u32 %v661, 7
          %v663 = vsub.s32 0, %v662
          %v664 = vrot.slane %v660, %v663
          %v665 = vmul.f32 %v652, %v664
          %v666 = vmul.f32 %v653, %v664
          %v667 = vmul.f32 %v654, %v664
          %v668 = vmul.f32 %v655, %v664
          %v669 = vmul.f32 %v656, %v664
          %v670 = vmul.f32 %v657, %v664
          %v671 = vmul.f32 %v658, %v664
          %v672 = vmul.f32 %v659, %v664
          %v673 = vadd.f32 %v665, 0.0
          %v674 = vadd.f32 %v666, 0.0
          %v675 = vadd.f32 %v667, 0.0
          %v676 = vadd.f32 %v668, 0.0
          %v677 = vadd.f32 %v669, 0.0
          %v678 = vadd.f32 %v670, 0.0
          %v679 = vadd.f32 %v671, 0.0
          %v680 = vadd.f32 %v672, 0.0
          %v681 = vld [vmem:[#allocation2 + $0x1] sm:$0xff]
          %v682 = vld [vmem:[#allocation2 + $0x9] sm:$0xff]
          %v683 = vld [vmem:[#allocation2 + $0x11] sm:$0xff]
          %v684 = vld [vmem:[#allocation2 + $0x19] sm:$0xff]
          %v685 = vld [vmem:[#allocation2 + $0x21] sm:$0xff]
          %v686 = vld [vmem:[#allocation2 + $0x29] sm:$0xff]
          %v687 = vld [vmem:[#allocation2 + $0x31] sm:$0xff]
          %v688 = vld [vmem:[#allocation2 + $0x39] sm:$0xff]
          %v689 = vld [vmem:[%s3 + $0x1] sm:$0x1]
          %v690 = vlaneseq
          %v691 = vshrl.u32 %v690, 7
          %v692 = vsub.s32 0, %v691
          %v693 = vrot.slane %v689, %v692
          %v694 = vmul.f32 %v681, %v693
          %v695 = vmul.f32 %v682, %v693
          %v696 = vmul.f32 %v683, %v693
          %v697 = vmul.f32 %v684, %v693
          %v698 = vmul.f32 %v685, %v693
          %v699 = vmul.f32 %v686, %v693
          %v700 = vmul.f32 %v687, %v693
          %v701 = vmul.f32 %v688, %v693
          %v702 = vadd.f32 %v673, %v694
          %v703 = vadd.f32 %v674, %v695
          %v704 = vadd.f32 %v675, %v696
          %v705 = vadd.f32 %v676, %v697
          %v706 = vadd.f32 %v677, %v698
          %v707 = vadd.f32 %v678, %v699
          %v708 = vadd.f32 %v679, %v700
          %v709 = vadd.f32 %v680, %v701
          %v710 = vld [vmem:[#allocation2 + $0x2] sm:$0xff]
          %v711 = vld [vmem:[#allocation2 + $0xa] sm:$0xff]
          %v712 = vld [vmem:[#allocation2 + $0x12] sm:$0xff]
          %v713 = vld [vmem:[#allocation2 + $0x1a] sm:$0xff]
          %v714 = vld [vmem:[#allocation2 + $0x22] sm:$0xff]
          %v715 = vld [vmem:[#allocation2 + $0x2a] sm:$0xff]
          %v716 = vld [vmem:[#allocation2 + $0x32] sm:$0xff]
          %v717 = vld [vmem:[#allocation2 + $0x3a] sm:$0xff]
          %v718 = vld [vmem:[%s3 + $0x2] sm:$0x1]
          %v719 = vlaneseq
          %v720 = vshrl.u32 %v719, 7
          %v721 = vsub.s32 0, %v720
          %v722 = vrot.slane %v718, %v721
          %v723 = vmul.f32 %v710, %v722
          %v724 = vmul.f32 %v711, %v722
          %v725 = vmul.f32 %v712, %v722
          %v726 = vmul.f32 %v713, %v722
          %v727 = vmul.f32 %v714, %v722
          %v728 = vmul.f32 %v715, %v722
          %v729 = vmul.f32 %v716, %v722
          %v730 = vmul.f32 %v717, %v722
          %v731 = vadd.f32 %v702, %v723
          %v732 = vadd.f32 %v703, %v724
          %v733 = vadd.f32 %v704, %v725
          %v734 = vadd.f32 %v705, %v726
          %v735 = vadd.f32 %v706, %v727
          %v736 = vadd.f32 %v707, %v728
          %v737 = vadd.f32 %v708, %v729
          %v738 = vadd.f32 %v709, %v730
          %v739 = vld [vmem:[#allocation2 + $0x3] sm:$0xff]
          %v740 = vld [vmem:[#allocation2 + $0xb] sm:$0xff]
          %v741 = vld [vmem:[#allocation2 + $0x13] sm:$0xff]
          %v742 = vld [vmem:[#allocation2 + $0x1b] sm:$0xff]
          %v743 = vld [vmem:[#allocation2 + $0x23] sm:$0xff]
          %v744 = vld [vmem:[#allocation2 + $0x2b] sm:$0xff]
          %v745 = vld [vmem:[#allocation2 + $0x33] sm:$0xff]
          %v746 = vld [vmem:[#allocation2 + $0x3b] sm:$0xff]
          %v747 = vld [vmem:[%s3 + $0x3] sm:$0x1]
          %v748 = vlaneseq
          %v749 = vshrl.u32 %v748, 7
          %v750 = vsub.s32 0, %v749
          %v751 = vrot.slane %v747, %v750
          %v752 = vmul.f32 %v739, %v751
          %v753 = vmul.f32 %v740, %v751
          %v754 = vmul.f32 %v741, %v751
          %v755 = vmul.f32 %v742, %v751
          %v756 = vmul.f32 %v743, %v751
          %v757 = vmul.f32 %v744, %v751
          %v758 = vmul.f32 %v745, %v751
          %v759 = vmul.f32 %v746, %v751
          %v760 = vadd.f32 %v731, %v752
          %v761 = vadd.f32 %v732, %v753
          %v762 = vadd.f32 %v733, %v754
          %v763 = vadd.f32 %v734, %v755
          %v764 = vadd.f32 %v735, %v756
          %v765 = vadd.f32 %v736, %v757
          %v766 = vadd.f32 %v737, %v758
          %v767 = vadd.f32 %v738, %v759
          %v768 = vld [vmem:[#allocation2 + $0x4] sm:$0xff]
          %v769 = vld [vmem:[#allocation2 + $0xc] sm:$0xff]
          %v770 = vld [vmem:[#allocation2 + $0x14] sm:$0xff]
          %v771 = vld [vmem:[#allocation2 + $0x1c] sm:$0xff]
          %v772 = vld [vmem:[#allocation2 + $0x24] sm:$0xff]
          %v773 = vld [vmem:[#allocation2 + $0x2c] sm:$0xff]
          %v774 = vld [vmem:[#allocation2 + $0x34] sm:$0xff]
          %v775 = vld [vmem:[#allocation2 + $0x3c] sm:$0xff]
          %v776 = vld [vmem:[%s3 + $0x4] sm:$0x1]
          %v777 = vlaneseq
          %v778 = vshrl.u32 %v777, 7
          %v779 = vsub.s32 0, %v778
          %v780 = vrot.slane %v776, %v779
          %v781 = vmul.f32 %v768, %v780
          %v782 = vmul.f32 %v769, %v780
          %v783 = vmul.f32 %v770, %v780
          %v784 = vmul.f32 %v771, %v780
          %v785 = vmul.f32 %v772, %v780
          %v786 = vmul.f32 %v773, %v780
          %v787 = vmul.f32 %v774, %v780
          %v788 = vmul.f32 %v775, %v780
          %v789 = vadd.f32 %v760, %v781
          %v790 = vadd.f32 %v761, %v782
          %v791 = vadd.f32 %v762, %v783
          %v792 = vadd.f32 %v763, %v784
          %v793 = vadd.f32 %v764, %v785
          %v794 = vadd.f32 %v765, %v786
          %v795 = vadd.f32 %v766, %v787
          %v796 = vadd.f32 %v767, %v788
          %v797 = vld [vmem:[#allocation2 + $0x5] sm:$0xff]
          %v798 = vld [vmem:[#allocation2 + $0xd] sm:$0xff]
          %v799 = vld [vmem:[#allocation2 + $0x15] sm:$0xff]
          %v800 = vld [vmem:[#allocation2 + $0x1d] sm:$0xff]
          %v801 = vld [vmem:[#allocation2 + $0x25] sm:$0xff]
          %v802 = vld [vmem:[#allocation2 + $0x2d] sm:$0xff]
          %v803 = vld [vmem:[#allocation2 + $0x35] sm:$0xff]
          %v804 = vld [vmem:[#allocation2 + $0x3d] sm:$0xff]
          %v805 = vld [vmem:[%s3 + $0x5] sm:$0x1]
          %v806 = vlaneseq
          %v807 = vshrl.u32 %v806, 7
          %v808 = vsub.s32 0, %v807
          %v809 = vrot.slane %v805, %v808
          %v810 = vmul.f32 %v797, %v809
          %v811 = vmul.f32 %v798, %v809
          %v812 = vmul.f32 %v799, %v809
          %v813 = vmul.f32 %v800, %v809
          %v814 = vmul.f32 %v801, %v809
          %v815 = vmul.f32 %v802, %v809
          %v816 = vmul.f32 %v803, %v809
          %v817 = vmul.f32 %v804, %v809
          %v818 = vadd.f32 %v789, %v810
          %v819 = vadd.f32 %v790, %v811
          %v820 = vadd.f32 %v791, %v812
          %v821 = vadd.f32 %v792, %v813
          %v822 = vadd.f32 %v793, %v814
          %v823 = vadd.f32 %v794, %v815
          %v824 = vadd.f32 %v795, %v816
          %v825 = vadd.f32 %v796, %v817
          %v826 = vld [vmem:[#allocation2 + $0x6] sm:$0xff]
          %v827 = vld [vmem:[#allocation2 + $0xe] sm:$0xff]
          %v828 = vld [vmem:[#allocation2 + $0x16] sm:$0xff]
          %v829 = vld [vmem:[#allocation2 + $0x1e] sm:$0xff]
          %v830 = vld [vmem:[#allocation2 + $0x26] sm:$0xff]
          %v831 = vld [vmem:[#allocation2 + $0x2e] sm:$0xff]
          %v832 = vld [vmem:[#allocation2 + $0x36] sm:$0xff]
          %v833 = vld [vmem:[#allocation2 + $0x3e] sm:$0xff]
          %v834 = vld [vmem:[%s3 + $0x6] sm:$0x1]
          %v835 = vlaneseq
          %v836 = vshrl.u32 %v835, 7
          %v837 = vsub.s32 0, %v836
          %v838 = vrot.slane %v834, %v837
          %v839 = vmul.f32 %v826, %v838
          %v840 = vmul.f32 %v827, %v838
          %v841 = vmul.f32 %v828, %v838
          %v842 = vmul.f32 %v829, %v838
          %v843 = vmul.f32 %v830, %v838
          %v844 = vmul.f32 %v831, %v838
          %v845 = vmul.f32 %v832, %v838
          %v846 = vmul.f32 %v833, %v838
          %v847 = vadd.f32 %v818, %v839
          %v848 = vadd.f32 %v819, %v840
          %v849 = vadd.f32 %v820, %v841
          %v850 = vadd.f32 %v821, %v842
          %v851 = vadd.f32 %v822, %v843
          %v852 = vadd.f32 %v823, %v844
          %v853 = vadd.f32 %v824, %v845
          %v854 = vadd.f32 %v825, %v846
          %v855 = vld [vmem:[#allocation2 + $0x7] sm:$0xff]
          %v856 = vld [vmem:[#allocation2 + $0xf] sm:$0xff]
          %v857 = vld [vmem:[#allocation2 + $0x17] sm:$0xff]
          %v858 = vld [vmem:[#allocation2 + $0x1f] sm:$0xff]
          %v859 = vld [vmem:[#allocation2 + $0x27] sm:$0xff]
          %v860 = vld [vmem:[#allocation2 + $0x2f] sm:$0xff]
          %v861 = vld [vmem:[#allocation2 + $0x37] sm:$0xff]
          %v862 = vld [vmem:[#allocation2 + $0x3f] sm:$0xff]
          %v863 = vld [vmem:[%s3 + $0x7] sm:$0x1]
          %v864 = vlaneseq
          %v865 = vshrl.u32 %v864, 7
          %v866 = vsub.s32 0, %v865
          %v867 = vrot.slane %v863, %v866
          %v868 = vmul.f32 %v855, %v867
          %v869 = vmul.f32 %v856, %v867
          %v870 = vmul.f32 %v857, %v867
          %v871 = vmul.f32 %v858, %v867
          %v872 = vmul.f32 %v859, %v867
          %v873 = vmul.f32 %v860, %v867
          %v874 = vmul.f32 %v861, %v867
          %v875 = vmul.f32 %v862, %v867
          %v876 = vadd.f32 %v847, %v868
          %v877 = vadd.f32 %v848, %v869
          %v878 = vadd.f32 %v849, %v870
          %v879 = vadd.f32 %v850, %v871
          %v880 = vadd.f32 %v851, %v872
          %v881 = vadd.f32 %v852, %v873
          %v882 = vadd.f32 %v853, %v874
          %v883 = vadd.f32 %v854, %v875
          %v884 = vld [vmem:[#allocation2 + $0x40] sm:$0xff]
          %v885 = vld [vmem:[%s3 + $0x8] sm:$0x1]
          %v886 = vlaneseq
          %v887 = vshrl.u32 %v886, 7
          %v888 = vsub.s32 0, %v887
          %v889 = vrot.slane %v885, %v888
          %v890 = vmul.f32 %v653, %v889
          %v891 = vmul.f32 %v654, %v889
          %v892 = vmul.f32 %v655, %v889
          %v893 = vmul.f32 %v656, %v889
          %v894 = vmul.f32 %v657, %v889
          %v895 = vmul.f32 %v658, %v889
          %v896 = vmul.f32 %v659, %v889
          %v897 = vmul.f32 %v884, %v889
          %v898 = vadd.f32 %v876, %v890
          %v899 = vadd.f32 %v877, %v891
          %v900 = vadd.f32 %v878, %v892
          %v901 = vadd.f32 %v879, %v893
          %v902 = vadd.f32 %v880, %v894
          %v903 = vadd.f32 %v881, %v895
          %v904 = vadd.f32 %v882, %v896
          %v905 = vadd.f32 %v883, %v897
          %v906 = vld [vmem:[#allocation2 + $0x41] sm:$0xff]
          %v907 = vld [vmem:[%s3 + $0x9] sm:$0x1]
          %v908 = vlaneseq
          %v909 = vshrl.u32 %v908, 7
          %v910 = vsub.s32 0, %v909
          %v911 = vrot.slane %v907, %v910
          %v912 = vmul.f32 %v682, %v911
          %v913 = vmul.f32 %v683, %v911
          %v914 = vmul.f32 %v684, %v911
          %v915 = vmul.f32 %v685, %v911
          %v916 = vmul.f32 %v686, %v911
          %v917 = vmul.f32 %v687, %v911
          %v918 = vmul.f32 %v688, %v911
          %v919 = vmul.f32 %v906, %v911
          %v920 = vadd.f32 %v898, %v912
          %v921 = vadd.f32 %v899, %v913
          %v922 = vadd.f32 %v900, %v914
          %v923 = vadd.f32 %v901, %v915
          %v924 = vadd.f32 %v902, %v916
          %v925 = vadd.f32 %v903, %v917
          %v926 = vadd.f32 %v904, %v918
          %v927 = vadd.f32 %v905, %v919
          %v928 = vld [vmem:[#allocation2 + $0x42] sm:$0xff]
          %v929 = vld [vmem:[%s3 + $0xa] sm:$0x1]
          %v930 = vlaneseq
          %v931 = vshrl.u32 %v930, 7
          %v932 = vsub.s32 0, %v931
          %v933 = vrot.slane %v929, %v932
          %v934 = vmul.f32 %v711, %v933
          %v935 = vmul.f32 %v712, %v933
          %v936 = vmul.f32 %v713, %v933
          %v937 = vmul.f32 %v714, %v933
          %v938 = vmul.f32 %v715, %v933
          %v939 = vmul.f32 %v716, %v933
          %v940 = vmul.f32 %v717, %v933
          %v941 = vmul.f32 %v928, %v933
          %v942 = vadd.f32 %v920, %v934
          %v943 = vadd.f32 %v921, %v935
          %v944 = vadd.f32 %v922, %v936
          %v945 = vadd.f32 %v923, %v937
          %v946 = vadd.f32 %v924, %v938
          %v947 = vadd.f32 %v925, %v939
          %v948 = vadd.f32 %v926, %v940
          %v949 = vadd.f32 %v927, %v941
          %v950 = vld [vmem:[#allocation2 + $0x43] sm:$0xff]
          %v951 = vld [vmem:[%s3 + $0xb] sm:$0x1]
          %v952 = vlaneseq
          %v953 = vshrl.u32 %v952, 7
          %v954 = vsub.s32 0, %v953
          %v955 = vrot.slane %v951, %v954
          %v956 = vmul.f32 %v740, %v955
          %v957 = vmul.f32 %v741, %v955
          %v958 = vmul.f32 %v742, %v955
          %v959 = vmul.f32 %v743, %v955
          %v960 = vmul.f32 %v744, %v955
          %v961 = vmul.f32 %v745, %v955
          %v962 = vmul.f32 %v746, %v955
          %v963 = vmul.f32 %v950, %v955
          %v964 = vadd.f32 %v942, %v956
          %v965 = vadd.f32 %v943, %v957
          %v966 = vadd.f32 %v944, %v958
          %v967 = vadd.f32 %v945, %v959
          %v968 = vadd.f32 %v946, %v960
          %v969 = vadd.f32 %v947, %v961
          %v970 = vadd.f32 %v948, %v962
          %v971 = vadd.f32 %v949, %v963
          %v972 = vld [vmem:[#allocation2 + $0x44] sm:$0xff]
          %v973 = vld [vmem:[%s3 + $0xc] sm:$0x1]
          %v974 = vlaneseq
          %v975 = vshrl.u32 %v974, 7
          %v976 = vsub.s32 0, %v975
          %v977 = vrot.slane %v973, %v976
          %v978 = vmul.f32 %v769, %v977
          %v979 = vmul.f32 %v770, %v977
          %v980 = vmul.f32 %v771, %v977
          %v981 = vmul.f32 %v772, %v977
          %v982 = vmul.f32 %v773, %v977
          %v983 = vmul.f32 %v774, %v977
          %v984 = vmul.f32 %v775, %v977
          %v985 = vmul.f32 %v972, %v977
          %v986 = vadd.f32 %v964, %v978
          %v987 = vadd.f32 %v965, %v979
          %v988 = vadd.f32 %v966, %v980
          %v989 = vadd.f32 %v967, %v981
          %v990 = vadd.f32 %v968, %v982
          %v991 = vadd.f32 %v969, %v983
          %v992 = vadd.f32 %v970, %v984
          %v993 = vadd.f32 %v971, %v985
          %v994 = vld [vmem:[#allocation2 + $0x45] sm:$0xff]
          %v995 = vld [vmem:[%s3 + $0xd] sm:$0x1]
          %v996 = vlaneseq
          %v997 = vshrl.u32 %v996, 7
          %v998 = vsub.s32 0, %v997
          %v999 = vrot.slane %v995, %v998
          %v1000 = vmul.f32 %v798, %v999
          %v1001 = vmul.f32 %v799, %v999
          %v1002 = vmul.f32 %v800, %v999
          %v1003 = vmul.f32 %v801, %v999
          %v1004 = vmul.f32 %v802, %v999
          %v1005 = vmul.f32 %v803, %v999
          %v1006 = vmul.f32 %v804, %v999
          %v1007 = vmul.f32 %v994, %v999
          %v1008 = vadd.f32 %v986, %v1000
          %v1009 = vadd.f32 %v987, %v1001
          %v1010 = vadd.f32 %v988, %v1002
          %v1011 = vadd.f32 %v989, %v1003
          %v1012 = vadd.f32 %v990, %v1004
          %v1013 = vadd.f32 %v991, %v1005
          %v1014 = vadd.f32 %v992, %v1006
          %v1015 = vadd.f32 %v993, %v1007
          %v1016 = vld [vmem:[#allocation2 + $0x46] sm:$0xff]
          %v1017 = vld [vmem:[%s3 + $0xe] sm:$0x1]
          %v1018 = vlaneseq
          %v1019 = vshrl.u32 %v1018, 7
          %v1020 = vsub.s32 0, %v1019
          %v1021 = vrot.slane %v1017, %v1020
          %v1022 = vmul.f32 %v827, %v1021
          %v1023 = vmul.f32 %v828, %v1021
          %v1024 = vmul.f32 %v829, %v1021
          %v1025 = vmul.f32 %v830, %v1021
          %v1026 = vmul.f32 %v831, %v1021
          %v1027 = vmul.f32 %v832, %v1021
          %v1028 = vmul.f32 %v833, %v1021
          %v1029 = vmul.f32 %v1016, %v1021
          %v1030 = vadd.f32 %v1008, %v1022
          %v1031 = vadd.f32 %v1009, %v1023
          %v1032 = vadd.f32 %v1010, %v1024
          %v1033 = vadd.f32 %v1011, %v1025
          %v1034 = vadd.f32 %v1012, %v1026
          %v1035 = vadd.f32 %v1013, %v1027
          %v1036 = vadd.f32 %v1014, %v1028
          %v1037 = vadd.f32 %v1015, %v1029
          %v1038 = vld [vmem:[#allocation2 + $0x47] sm:$0xff]
          %v1039 = vld [vmem:[%s3 + $0xf] sm:$0x1]
          %v1040 = vlaneseq
          %v1041 = vshrl.u32 %v1040, 7
          %v1042 = vsub.s32 0, %v1041
          %v1043 = vrot.slane %v1039, %v1042
          %v1044 = vmul.f32 %v856, %v1043
          %v1045 = vmul.f32 %v857, %v1043
          %v1046 = vmul.f32 %v858, %v1043
          %v1047 = vmul.f32 %v859, %v1043
          %v1048 = vmul.f32 %v860, %v1043
          %v1049 = vmul.f32 %v861, %v1043
          %v1050 = vmul.f32 %v862, %v1043
          %v1051 = vmul.f32 %v1038, %v1043
          %v1052 = vadd.f32 %v1030, %v1044
          %v1053 = vadd.f32 %v1031, %v1045
          %v1054 = vadd.f32 %v1032, %v1046
          %v1055 = vadd.f32 %v1033, %v1047
          %v1056 = vadd.f32 %v1034, %v1048
          %v1057 = vadd.f32 %v1035, %v1049
          %v1058 = vadd.f32 %v1036, %v1050
          %v1059 = vadd.f32 %v1037, %v1051
          %v1060 = vld [vmem:[#allocation2 + $0x48] sm:$0xff]
          %v1061 = vld [vmem:[%s3 + $0x10] sm:$0x1]
          %v1062 = vlaneseq
          %v1063 = vshrl.u32 %v1062, 7
          %v1064 = vsub.s32 0, %v1063
          %v1065 = vrot.slane %v1061, %v1064
          %v1066 = vmul.f32 %v654, %v1065
          %v1067 = vmul.f32 %v655, %v1065
          %v1068 = vmul.f32 %v656, %v1065
          %v1069 = vmul.f32 %v657, %v1065
          %v1070 = vmul.f32 %v658, %v1065
          %v1071 = vmul.f32 %v659, %v1065
          %v1072 = vmul.f32 %v884, %v1065
          %v1073 = vmul.f32 %v1060, %v1065
          %v1074 = vadd.f32 %v1052, %v1066
          %v1075 = vadd.f32 %v1053, %v1067
          %v1076 = vadd.f32 %v1054, %v1068
          %v1077 = vadd.f32 %v1055, %v1069
          %v1078 = vadd.f32 %v1056, %v1070
          %v1079 = vadd.f32 %v1057, %v1071
          %v1080 = vadd.f32 %v1058, %v1072
          %v1081 = vadd.f32 %v1059, %v1073
          %v1082 = vadd.f32 %v653, %v1074
          %v1083 = vadd.f32 %v654, %v1075
          %v1084 = vadd.f32 %v655, %v1076
          %v1085 = vadd.f32 %v656, %v1077
          %v1086 = vadd.f32 %v657, %v1078
          %v1087 = vadd.f32 %v658, %v1079
          %v1088 = vadd.f32 %v659, %v1080
          %v1089 = vadd.f32 %v884, %v1081
          %1090 = vst.msk [vmem:[%s239] sm:$0xff] %vm646, %v1082
          %1091 = vst.msk [vmem:[%s239 + $0x8] sm:$0xff] %vm646, %v1083
          %1092 = vst.msk [vmem:[%s239 + $0x10] sm:$0xff] %vm646, %v1084
          %1093 = vst.msk [vmem:[%s239 + $0x18] sm:$0xff] %vm646, %v1085
          %1094 = vst.msk [vmem:[%s239 + $0x20] sm:$0xff] %vm646, %v1086
          %1095 = vst.msk [vmem:[%s239 + $0x28] sm:$0xff] %vm646, %v1087
          %1096 = vst.msk [vmem:[%s239 + $0x30] sm:$0xff] %vm646, %v1088
          %1097 = vst.msk [vmem:[%s239 + $0x38] sm:$0xff] %vm646, %v1089
        $region44: #{mossformer_module_forward.11} parent=35 // pred_fallthru
          _
        %v1098 = vld [vmem:[#allocation2 + $0x40] sm:$0xff]
        %1099 = vst.msk [vmem:[#allocation2] sm:$0xff] %vm646, %v1098
        %1100 = vst.msk [vmem:[#allocation2 + $0x8] sm:$0xff] %vm646, %v623
        %1101 = vst.msk [vmem:[#allocation2 + $0x10] sm:$0xff] %vm646, %v624
        %1102 = vst.msk [vmem:[#allocation2 + $0x18] sm:$0xff] %vm646, %v625
        %1103 = vst.msk [vmem:[#allocation2 + $0x20] sm:$0xff] %vm646, %v626
        %1104 = vst.msk [vmem:[#allocation2 + $0x28] sm:$0xff] %vm646, %v627
        %1105 = vst.msk [vmem:[#allocation2 + $0x30] sm:$0xff] %vm646, %v628
        %1106 = vst.msk [vmem:[#allocation2 + $0x38] sm:$0xff] %vm646, %v629
        %1107 = vst.msk [vmem:[#allocation2 + $0x40] sm:$0xff] %vm646, %v630
        %s1108 = sand.u32 %s138, 1
        %s1109 = sand.u32 %s138, 1
        %s1110 = smul.addr %s1109, 64
        %s1111 = scalar_lea.vmem [#allocation3], %s1110
        // Predicated region
        $region45: #{mossformer_module_forward.11} parent=35 // pred_check
          %p1112 = pneg %p148
        $region46: #{mossformer_module_forward.11} parent=35 // pred_check_branch
          %1114 = sbr.rel (%p1112) target = $region48
        $region47: #{mossformer_module_forward.11} parent=35 // pred_region
          %s1115 = ssub.s32 %s20, 1
          %p1116 = scmp.gt.s32.totalorder %s1115, 0
          %s1117 = scalar_select %p1116, %s1115, 0
          %s1118 = smul.u32 8, %s1117
          %s1119 = ssub.s32 12, %s1118
          %p1120 = scmp.lt.s32.totalorder %s1119, 8
          %s1121 = scalar_select %p1120, %s1119, 8
          %s1122 = smul.u32 128, %s1121
          %p1123 = scmp.ne.s32.totalorder 0, %s1122
          %s1124 = smul.addr %s19, 12
          %s1125 = sadd.s32 %s1118, %s1124
          %s1126 = smul.addr %s1125, 8
          %s1127 = scalar_lea.vmem %s4, %s1126
          // Predicated region
          $region49: #{mossformer_module_forward.11} parent=47 // pred_check
            %p1128 = pneg %p1123
          $region50: #{mossformer_module_forward.11} parent=47 // pred_check_branch
            %1130 = sbr.rel (%p1128) target = $region52
          $region51: #{mossformer_module_forward.11} parent=47 // pred_region
            // Predicated region
            $region53: #{mossformer_module_forward.11} parent=51 // pred_check
              _
            $region54: #{mossformer_module_forward.11} parent=51 // pred_check_branch
              %1132 = sbr.rel (0) target = $region56
            $region55: #{mossformer_module_forward.11} parent=51 // pred_region
              // Predicated region
              $region75: #{mossformer_module_forward.11} parent=55 // pred_check
                _
              $region76: #{mossformer_module_forward.11} parent=55 // pred_check_branch
                %1196 = sbr.rel (0) target = $region78
              $region77: #{mossformer_module_forward.11} parent=55 // pred_region
                %s1197 = sshrl.u32 %s1121, 3
                // While loop
                $region79: #{mossformer_module_forward.11} parent=77 // loop_pre_header
                  _
                $region80: #{mossformer_module_forward.11} parent=77 // loop_header
                  %s1199 = sphi 0, %s1201
                  %p1200 = scmp.ge.s32.totalorder %s1199, %s1197
                  %s1204 = sphi 0, %s1225
                  %s1205 = sphi %s1111, %s1228
                  %s1206 = sphi %s1127, %s1229
                $region81: #{mossformer_module_forward.11} parent=77 // loop_header_branch
                  %1203 = sbr.rel (%p1200) target = $region85
                $region82: #{mossformer_module_forward.11} parent=77 // loop_body
                  %v1207 = vld [vmem:[%s1205] sm:$0xff]
                  %1208 = vst [vmem:[%s1206] sm:$0xff] %v1207
                  %v1209 = vld [vmem:[%s1205 + $0x8] sm:$0xff]
                  %1210 = vst [vmem:[%s1206 + $0x8] sm:$0xff] %v1209
                  %v1211 = vld [vmem:[%s1205 + $0x10] sm:$0xff]
                  %1212 = vst [vmem:[%s1206 + $0x10] sm:$0xff] %v1211
                  %v1213 = vld [vmem:[%s1205 + $0x18] sm:$0xff]
                  %1214 = vst [vmem:[%s1206 + $0x18] sm:$0xff] %v1213
                  %v1215 = vld [vmem:[%s1205 + $0x20] sm:$0xff]
                  %1216 = vst [vmem:[%s1206 + $0x20] sm:$0xff] %v1215
                  %v1217 = vld [vmem:[%s1205 + $0x28] sm:$0xff]
                  %1218 = vst [vmem:[%s1206 + $0x28] sm:$0xff] %v1217
                  %v1219 = vld [vmem:[%s1205 + $0x30] sm:$0xff]
                  %1220 = vst [vmem:[%s1206 + $0x30] sm:$0xff] %v1219
                  %v1221 = vld [vmem:[%s1205 + $0x38] sm:$0xff]
                  %1222 = vst [vmem:[%s1206 + $0x38] sm:$0xff] %v1221
                  %s1223 = sadd.s32 1, %s1204
                  %p1224 = scmp.ge.s32.totalorder %s1223, %s1197
                  %s1225 = scalar_select %p1224, 0, %s1223
                  %s1226 = smul.u32 %s1225, 64
                  %s1227 = smul.u32 %s1225, 64
                  %s1228 = scalar_lea.vmem %s1111, %s1226 [#allocation3]
                  %s1229 = scalar_lea.vmem %s1127, %s1227
                $region83: #{mossformer_module_forward.11} parent=77 // loop_footer
                  %s1201 = sadd.s32 %s1199, 1
                $region84: #{mossformer_module_forward.11} parent=77 // loop_footer_branch
                  %1198 = sbr.rel target = $region80
                $region85: #{mossformer_module_forward.11} parent=77 // loop_exit
                  _
                %s1230 = sshrl.u32 %s1121, 3
                %s1231 = sand.u32 %s1121, 7
                %s1232 = smul.u32 %s1230, 8
                %s1233 = smul.u32 8, %s1232
                %s1234 = scalar_lea.vmem %s1111, %s1233 [#allocation3]
                %s1235 = smul.u32 8, %s1232
                %s1236 = scalar_lea.vmem %s1127, %s1235
                // While loop
                $region86: #{mossformer_module_forward.11} parent=77 // loop_pre_header
                  _
                $region87: #{mossformer_module_forward.11} parent=77 // loop_header
                  %s1238 = sphi 0, %s1240
                  %p1239 = scmp.ge.s32.totalorder %s1238, %s1231
                  %s1243 = sphi 0, %s1250
                  %s1244 = sphi %s1234, %s1253
                  %s1245 = sphi %s1236, %s1254
                $region88: #{mossformer_module_forward.11} parent=77 // loop_header_branch
                  %1242 = sbr.rel (%p1239) target = $region92
                $region89: #{mossformer_module_forward.11} parent=77 // loop_body
                  %v1246 = vld [vmem:[%s1244] sm:$0xff]
                  %1247 = vst [vmem:[%s1245] sm:$0xff] %v1246
                  %s1248 = sadd.s32 1, %s1243
                  %p1249 = scmp.ge.s32.totalorder %s1248, %s1231
                  %s1250 = scalar_select %p1249, 0, %s1248
                  %s1251 = smul.u32 %s1250, 8
                  %s1252 = smul.u32 %s1250, 8
                  %s1253 = scalar_lea.vmem %s1234, %s1251 [#allocation3]
                  %s1254 = scalar_lea.vmem %s1236, %s1252
                $region90: #{mossformer_module_forward.11} parent=77 // loop_footer
                  %s1240 = sadd.s32 %s1238, 1
                $region91: #{mossformer_module_forward.11} parent=77 // loop_footer_branch
                  %1237 = sbr.rel target = $region87
                $region92: #{mossformer_module_forward.11} parent=77 // loop_exit
                  _
              $region78: #{mossformer_module_forward.11} parent=55 // pred_fallthru
                _
              // Predicated region
              $region93: #{mossformer_module_forward.11} parent=55 // pred_check
                _
              $region94: #{mossformer_module_forward.11} parent=55 // pred_check_branch
                %1256 = sbr.rel target = $region96
              $region95: #{mossformer_module_forward.11} parent=55 // pred_region
                _
              $region96: #{mossformer_module_forward.11} parent=55 // pred_fallthru
                _
            $region56: #{mossformer_module_forward.11} parent=51 // pred_fallthru
              _
            // Predicated region
            $region57: #{mossformer_module_forward.11} parent=51 // pred_check
              _
            $region58: #{mossformer_module_forward.11} parent=51 // pred_check_branch
              %1134 = sbr.rel target = $region60
            $region59: #{mossformer_module_forward.11} parent=51 // pred_region
              %s1136 = ssub.s32 256, 1
              %s1137 = sshrl.u32 %s1121, 3
              // While loop
              $region61: #{mossformer_module_forward.11} parent=59 // loop_pre_header
                _
              $region62: #{mossformer_module_forward.11} parent=59 // loop_header
                %s1139 = sphi 0, %s1141
                %p1140 = scmp.ge.s32.totalorder %s1139, %s1137
                %s1144 = sphi 0, %s1165
                %s1145 = sphi %s1111, %s1168
                %s1146 = sphi %s1127, %s1169
              $region63: #{mossformer_module_forward.11} parent=59 // loop_header_branch
                %1143 = sbr.rel (%p1140) target = $region67
              $region64: #{mossformer_module_forward.11} parent=59 // loop_body
                %v1147 = vld [vmem:[%s1145] sm:%s1136]
                %1148 = vst [vmem:[%s1146] sm:%s1136] %v1147
                %v1149 = vld [vmem:[%s1145 + $0x8] sm:%s1136]
                %1150 = vst [vmem:[%s1146 + $0x8] sm:%s1136] %v1149
                %v1151 = vld [vmem:[%s1145 + $0x10] sm:%s1136]
                %1152 = vst [vmem:[%s1146 + $0x10] sm:%s1136] %v1151
                %v1153 = vld [vmem:[%s1145 + $0x18] sm:%s1136]
                %1154 = vst [vmem:[%s1146 + $0x18] sm:%s1136] %v1153
                %v1155 = vld [vmem:[%s1145 + $0x20] sm:%s1136]
                %1156 = vst [vmem:[%s1146 + $0x20] sm:%s1136] %v1155
                %v1157 = vld [vmem:[%s1145 + $0x28] sm:%s1136]
                %1158 = vst [vmem:[%s1146 + $0x28] sm:%s1136] %v1157
                %v1159 = vld [vmem:[%s1145 + $0x30] sm:%s1136]
                %1160 = vst [vmem:[%s1146 + $0x30] sm:%s1136] %v1159
                %v1161 = vld [vmem:[%s1145 + $0x38] sm:%s1136]
                %1162 = vst [vmem:[%s1146 + $0x38] sm:%s1136] %v1161
                %s1163 = sadd.s32 1, %s1144
                %p1164 = scmp.ge.s32.totalorder %s1163, %s1137
                %s1165 = scalar_select %p1164, 0, %s1163
                %s1166 = smul.u32 %s1165, 64
                %s1167 = smul.u32 %s1165, 64
                %s1168 = scalar_lea.vmem %s1111, %s1166 [#allocation3]
                %s1169 = scalar_lea.vmem %s1127, %s1167
              $region65: #{mossformer_module_forward.11} parent=59 // loop_footer
                %s1141 = sadd.s32 %s1139, 1
              $region66: #{mossformer_module_forward.11} parent=59 // loop_footer_branch
                %1138 = sbr.rel target = $region62
              $region67: #{mossformer_module_forward.11} parent=59 // loop_exit
                _
              %s1170 = sshrl.u32 %s1121, 3
              %s1171 = sand.u32 %s1121, 7
              %s1172 = smul.u32 %s1170, 8
              %s1173 = smul.u32 8, %s1172
              %s1174 = scalar_lea.vmem %s1111, %s1173 [#allocation3]
              %s1175 = smul.u32 8, %s1172
              %s1176 = scalar_lea.vmem %s1127, %s1175
              // While loop
              $region68: #{mossformer_module_forward.11} parent=59 // loop_pre_header
                _
              $region69: #{mossformer_module_forward.11} parent=59 // loop_header
                %s1178 = sphi 0, %s1180
                %p1179 = scmp.ge.s32.totalorder %s1178, %s1171
                %s1183 = sphi 0, %s1190
                %s1184 = sphi %s1174, %s1193
                %s1185 = sphi %s1176, %s1194
              $region70: #{mossformer_module_forward.11} parent=59 // loop_header_branch
                %1182 = sbr.rel (%p1179) target = $region74
              $region71: #{mossformer_module_forward.11} parent=59 // loop_body
                %v1186 = vld [vmem:[%s1184] sm:%s1136]
                %1187 = vst [vmem:[%s1185] sm:%s1136] %v1186
                %s1188 = sadd.s32 1, %s1183
                %p1189 = scmp.ge.s32.totalorder %s1188, %s1171
                %s1190 = scalar_select %p1189, 0, %s1188
                %s1191 = smul.u32 %s1190, 8
                %s1192 = smul.u32 %s1190, 8
                %s1193 = scalar_lea.vmem %s1174, %s1191 [#allocation3]
                %s1194 = scalar_lea.vmem %s1176, %s1192
              $region72: #{mossformer_module_forward.11} parent=59 // loop_footer
                %s1180 = sadd.s32 %s1178, 1
              $region73: #{mossformer_module_forward.11} parent=59 // loop_footer_branch
                %1177 = sbr.rel target = $region69
              $region74: #{mossformer_module_forward.11} parent=59 // loop_exit
                _
            $region60: #{mossformer_module_forward.11} parent=51 // pred_fallthru
              _
          $region52: #{mossformer_module_forward.11} parent=47 // pred_fallthru
            _
          %1257 = vnop
        $region48: #{mossformer_module_forward.11} parent=35 // pred_fallthru
          _
      $region36: #{mossformer_module_forward.11} parent=5 // pred_fallthru
        _
      %p1258 = scmp.le.s32.totalorder 2, %s10
      // Predicated region
      $region97: #{mossformer_module_forward.11} parent=5 // pred_check
        %p1259 = pneg %p1258
      $region98: #{mossformer_module_forward.11} parent=5 // pred_check_branch
        %1261 = sbr.rel (%p1259) target = $region100
      $region99: #{mossformer_module_forward.11} parent=5 // pred_region
        %s1262 = ssub.s32 %s10, 2
        // Predicated region
        $region101: #{mossformer_module_forward.11} parent=99 // pred_check
          %p1263 = pneg %p154
        $region102: #{mossformer_module_forward.11} parent=99 // pred_check_branch
          %1265 = sbr.rel (%p1263) target = $region104
        $region103: #{mossformer_module_forward.11} parent=99 // pred_region
          %s1266 = sand.u32 %s139, 1
          %s1267 = sand.u32 %s139, 1
          %s1268 = smul.addr %s1267, 64
          %s1269 = scalar_lea.vmem [#allocation3], %s1268
        $region104: #{mossformer_module_forward.11} parent=99 // pred_fallthru
          _
      $region100: #{mossformer_module_forward.11} parent=5 // pred_fallthru
        _
    $region6: #{mossformer_module_forward.11} parent=1 // loop_footer
      %s14 = sadd.s32 1, %s10
    $region7: #{mossformer_module_forward.11} parent=1 // loop_footer_branch
      %9 = sbr.rel target = $region3
    $region8: #{mossformer_module_forward.11} parent=1 // loop_exit
      _

</llo_original>
